<compile_context>
chip_gen: v7x
topology: tpu7x:2x2x1
jax: 0.10.0
libtpu: 0.0.40
codegen_flags: <defaults>
</compile_context>

<pallas_src>
import math
from functools import partial

import jax
import jax.numpy as jnp
from jax.experimental import pallas as pl
from jax.experimental.pallas import tpu as pltpu

# ----------------------------- config (small synthetic shapes) -----------------------------
BATCH = 2
SEQ = 8
SENT_HIDDEN = 32     # args.sentence_hidden
GRAPH_HIDDEN = 32    # args.graph_hidden
OUT_FEAT = 32        # args.output_feature
HEADS = 4            # args.head_num


# ----------------------------- fused forward kernel -----------------------------
def fused_kernel(x_ref, adj_d_ref, adj_c_ref, mask_ref,
                 g1w_ref, g1b_ref, g2dw_ref, g2cw_ref, g2b_ref,
                 wih_ref, whh_ref, lb_ref,
                 qkvw_ref, qkvb_ref, fcw_ref, fcb_ref,
                 prob_ref,
                 lstm_sc,
                 *, num_heads, graph_hidden, out_feat, seq_len, batch):
    f32 = jnp.float32
    B, S = batch, seq_len
    G, H = graph_hidden, out_feat

    x = x_ref[...]                                    # (B, S, SENT)
    adj_d = adj_d_ref[...]                            # (B, S, S)
    adj_c = adj_c_ref[...]                            # (B, S, S)
    mask = mask_ref[...]                              # (B, S) binary (1 = keep)

    sent = x.shape[-1]
    xf = x.reshape(B * S, sent)                       # flatten batch into sublanes: (B*S, SENT)

    # ---------------- two GCN branches (layer-1 weights fused along output dim) ----------------
    # GraphConvolution(x, A) = A @ (x @ W) + b
    s1 = jnp.dot(xf, g1w_ref[...], preferred_element_type=f32)          # (B*S, 2G)  [data | ctrl]
    parts = []
    for b in range(B):                                # B = 2, static
        sb = s1[b * S:(b + 1) * S, :]                 # (S, 2G)
        parts.append(jnp.concatenate(
            [jnp.dot(adj_d[b], sb[:, :G], preferred_element_type=f32),
             jnp.dot(adj_c[b], sb[:, G:], preferred_element_type=f32)], axis=1))
    h1 = jnp.maximum(jnp.concatenate(parts, axis=0) + g1b_ref[...], 0.0)   # (B*S, 2G)
    # TODO(synk): nn.Dropout(p=0.5) between the two GCN layers is identity (eval mode).

    s2 = jnp.concatenate(
        [jnp.dot(h1[:, :G], g2dw_ref[...], preferred_element_type=f32),
         jnp.dot(h1[:, G:], g2cw_ref[...], preferred_element_type=f32)], axis=1)   # (B*S, 2G)
    parts = []
    for b in range(B):
        sb = s2[b * S:(b + 1) * S, :]
        parts.append(jnp.concatenate(
            [jnp.dot(adj_d[b], sb[:, :G], preferred_element_type=f32),
             jnp.dot(adj_c[b], sb[:, G:], preferred_element_type=f32)], axis=1))
    h2 = jnp.maximum(jnp.concatenate(parts, axis=0) + g2b_ref[...], 0.0)   # (B*S, 2G)

    fusion = jnp.concatenate([xf, h2], axis=1)                              # (B*S, SENT + 2G)

    # ---------------- LSTM (input projection hoisted out of the recurrence) ----------------
    # gates for all timesteps at once: (B*S, D) @ (D, 4H)
    gx = jnp.dot(fusion, wih_ref[...], preferred_element_type=f32) + lb_ref[...]   # (B*S, 4H)
    gx3 = gx.reshape(B, S, 4 * H)

    h = jnp.zeros((B, H), f32)
    c = jnp.zeros((B, H), f32)
    for t in range(S):                                # S = 8, fully unrolled (static)
        g = gx3[:, t, :] + jnp.dot(h, whh_ref[...], preferred_element_type=f32)    # (B, 4H)
        i_g = jax.nn.sigmoid(g[:, 0 * H:1 * H])       # PyTorch gate order (i, f, g, o)
        f_g = jax.nn.sigmoid(g[:, 1 * H:2 * H])
        g_g = jnp.tanh(g[:, 2 * H:3 * H])
        o_g = jax.nn.sigmoid(g[:, 3 * H:4 * H])
        c = f_g * c + i_g * g_g
        h = o_g * jnp.tanh(c)
        lstm_sc[:, pl.ds(t, 1), :] = h.reshape(B, 1, H)

    lstm_flat = lstm_sc[...].reshape(B * S, H)        # (B*S, H)

    # ---------------- BertSelfAttention (fused QKV projection) ----------------
    qkv = jnp.dot(lstm_flat, qkvw_ref[...], preferred_element_type=f32) + qkvb_ref[...]  # (B*S, 3H)
    dh = H // num_heads
    scale = 1.0 / math.sqrt(dh)

    pooled_parts = []
    for b in range(B):
        ext = (1.0 - mask[b:b + 1, :]) * (-10000.0)   # (1, S) additive mask (broadcast over queries)
        q_b = qkv[b * S:(b + 1) * S, 0 * H:1 * H]
        k_b = qkv[b * S:(b + 1) * S, 1 * H:2 * H]
        v_b = qkv[b * S:(b + 1) * S, 2 * H:3 * H]
        ctx_heads = []
        for hh in range(num_heads):                   # 4 heads, static
            lo, hi = hh * dh, (hh + 1) * dh
            sc = jax.lax.dot_general(
                q_b[:, lo:hi], k_b[:, lo:hi],
                (((1,), (1,)), ((), ())),
                preferred_element_type=f32) * scale + ext                   # (S, S)
            pr = jax.nn.softmax(sc, axis=-1)
            # TODO(synk): attention_probs dropout (p=0.1) is identity (eval mode).
            ctx_heads.append(jnp.dot(pr, v_b[:, lo:hi], preferred_element_type=f32))
        ctx = jnp.concatenate(ctx_heads, axis=1)      # (S, H) lane-dense per batch element
        pooled_parts.append(jnp.sum(ctx, axis=0, keepdims=True))            # sum-pool over seq
    pooled = jnp.concatenate(pooled_parts, axis=0)    # (B, H)

    # ---------------- head: Linear(H -> 1) + sigmoid ----------------
    logits = jnp.dot(pooled, fcw_ref[...], preferred_element_type=f32) + fcb_ref[...]   # (B, 1)
    prob_ref[...] = jax.nn.sigmoid(logits).astype(prob_ref.dtype)


# ----------------------------- wrapper (single pallas_call) -----------------------------
def sent_sel_two_gcn_cat_forward(params, input_, attention_mask, labels,
                                 data_matrix=None, control_matrix=None):
    # input_: (S, B, sent_hidden); torch does input_.permute(1, 0, 2)
    x = jnp.transpose(input_, (1, 0, 2))                                 # (B, S, sent_hidden)
    B, S, _ = x.shape
    G = params["dgcn1_w"].shape[1]
    H = params["lstm_whh"].shape[0]

    # fuse branch / QKV weights along the output dim (wider matmuls, fewer MXU pushes)
    g1w = jnp.concatenate([params["dgcn1_w"], params["cgcn1_w"]], axis=1)   # (SENT, 2G)
    g1b = jnp.concatenate([params["dgcn1_b"], params["cgcn1_b"]], axis=1)   # (1, 2G)
    g2b = jnp.concatenate([params["dgcn2_b"], params["cgcn2_b"]], axis=1)   # (1, 2G)
    qkv_w = jnp.concatenate([params["wq"], params["wk"], params["wv"]], axis=1)   # (H, 3H)
    qkv_b = jnp.concatenate([params["bq"], params["bk"], params["bv"]], axis=1)   # (1, 3H)

    vmem = pl.BlockSpec(memory_space=pltpu.MemorySpace.VMEM)
    prob = pl.pallas_call(
        partial(fused_kernel, num_heads=HEADS, graph_hidden=G, out_feat=H,
                seq_len=S, batch=B),
        out_shape=jax.ShapeDtypeStruct((B, 1), jnp.float32),
        in_specs=[vmem] * 16,
        out_specs=vmem,
        scratch_shapes=[pltpu.VMEM((B, S, H), jnp.float32)],   # LSTM output buffer
    )(x, data_matrix, control_matrix, attention_mask.astype(jnp.float32),
      g1w, g1b, params["dgcn2_w"], params["cgcn2_w"], g2b,
      params["lstm_wih"], params["lstm_whh"], params["lstm_b"],
      qkv_w, qkv_b, params["fc_w"], params["fc_b"])

    if labels is not None:
        labels_f = labels.astype(jnp.float32)
        loss = (jnp.log(prob[:, 0] + 1e-10) * labels_f
                + jnp.log((1.0 - prob)[:, 0] + 1e-10) * (1.0 - labels_f))
        loss = -jnp.mean(loss)
        return loss, prob
    return prob


# ----------------------------- deterministic parameter init -----------------------------
def init_params(key):
    keys = iter(jax.random.split(key, 24))

    def w(shape, scale=0.1):
        return jax.random.normal(next(keys), shape, jnp.float32) * scale

    d_lstm = SENT_HIDDEN + 2 * GRAPH_HIDDEN
    # NOTE: torch nn.Linear / GCN weights would need a transpose when imported (x @ W here).
    return dict(
        dgcn1_w=w((SENT_HIDDEN, GRAPH_HIDDEN)), dgcn1_b=w((1, GRAPH_HIDDEN)),
        dgcn2_w=w((GRAPH_HIDDEN, GRAPH_HIDDEN)), dgcn2_b=w((1, GRAPH_HIDDEN)),
        cgcn1_w=w((SENT_HIDDEN, GRAPH_HIDDEN)), cgcn1_b=w((1, GRAPH_HIDDEN)),
        cgcn2_w=w((GRAPH_HIDDEN, GRAPH_HIDDEN)), cgcn2_b=w((1, GRAPH_HIDDEN)),
        lstm_wih=w((d_lstm, 4 * OUT_FEAT)),      # torch weight_ih_l0.T, gate order (i,f,g,o)
        lstm_whh=w((OUT_FEAT, 4 * OUT_FEAT)),    # torch weight_hh_l0.T
        lstm_b=w((1, 4 * OUT_FEAT)),             # b_ih + b_hh combined
        wq=w((OUT_FEAT, OUT_FEAT)), bq=w((1, OUT_FEAT)),
        wk=w((OUT_FEAT, OUT_FEAT)), bk=w((1, OUT_FEAT)),
        wv=w((OUT_FEAT, OUT_FEAT)), bv=w((1, OUT_FEAT)),
        fc_w=w((OUT_FEAT, 1)), fc_b=w((1, 1)),
    )


if __name__ == "__main__":
    key = jax.random.PRNGKey(0)
    pkey, ikey, dkey, ckey = jax.random.split(key, 4)

    params = init_params(pkey)

    # forward expects (S, B, sent_hidden) and permutes it internally
    input_ = jax.random.normal(ikey, (SEQ, BATCH, SENT_HIDDEN), jnp.float32)
    attention_mask = jnp.ones((BATCH, SEQ), jnp.float32)     # binary mask, 1 = keep
    labels = jnp.array([1.0, 0.0], jnp.float32)

    def rand_adj(k):
        a = jax.random.uniform(k, (BATCH, SEQ, SEQ), jnp.float32)
        a = 0.5 * (a + jnp.transpose(a, (0, 2, 1))) + jnp.eye(SEQ)[None]
        return a / jnp.sum(a, axis=-1, keepdims=True)

    data_matrix = rand_adj(dkey)
    control_matrix = rand_adj(ckey)

    fwd = jax.jit(sent_sel_two_gcn_cat_forward)
    loss, prob = fwd(params, input_, attention_mask, labels, data_matrix, control_matrix)
    jax.block_until_ready((loss, prob))
    assert prob.shape == (BATCH, 1) and loss.shape == ()
    print("KERNEL_OK")
</pallas_src>

<mosaic_0001>
module attributes {stable_mosaic.version = 11 : i64} {
  func.func @fused_kernel(%arg0: memref<2x8x32xf32, #tpu.memory_space<vmem>>, %arg1: memref<2x8x8xf32, #tpu.memory_space<vmem>>, %arg2: memref<2x8x8xf32, #tpu.memory_space<vmem>>, %arg3: memref<2x8xf32, #tpu.memory_space<vmem>>, %arg4: memref<32x64xf32, #tpu.memory_space<vmem>>, %arg5: memref<1x64xf32, #tpu.memory_space<vmem>>, %arg6: memref<32x32xf32, #tpu.memory_space<vmem>>, %arg7: memref<32x32xf32, #tpu.memory_space<vmem>>, %arg8: memref<1x64xf32, #tpu.memory_space<vmem>>, %arg9: memref<96x128xf32, #tpu.memory_space<vmem>>, %arg10: memref<32x128xf32, #tpu.memory_space<vmem>>, %arg11: memref<1x128xf32, #tpu.memory_space<vmem>>, %arg12: memref<32x96xf32, #tpu.memory_space<vmem>>, %arg13: memref<1x96xf32, #tpu.memory_space<vmem>>, %arg14: memref<32x1xf32, #tpu.memory_space<vmem>>, %arg15: memref<1x1xf32, #tpu.memory_space<vmem>>, %arg16: memref<2x1xf32, #tpu.memory_space<vmem>>, %arg17: memref<2x8x32xf32, #tpu.memory_space<vmem>>) attributes {dimension_semantics = [], scalar_prefetch = 0 : i64, scratch_operands = 1 : i64, tpu.core_type = #tpu.core_type<tc>} {
    %c0 = arith.constant 0 : index
    %c0_0 = arith.constant 0 : index
    %c0_1 = arith.constant 0 : index
    %0 = vector.load %arg0[%c0, %c0_0, %c0_1] : memref<2x8x32xf32, #tpu.memory_space<vmem>>, vector<2x8x32xf32>
    %c0_2 = arith.constant 0 : index
    %c0_3 = arith.constant 0 : index
    %c0_4 = arith.constant 0 : index
    %1 = vector.load %arg1[%c0_2, %c0_3, %c0_4] : memref<2x8x8xf32, #tpu.memory_space<vmem>>, vector<2x8x8xf32>
    %c0_5 = arith.constant 0 : index
    %c0_6 = arith.constant 0 : index
    %c0_7 = arith.constant 0 : index
    %2 = vector.load %arg2[%c0_5, %c0_6, %c0_7] : memref<2x8x8xf32, #tpu.memory_space<vmem>>, vector<2x8x8xf32>
    %c0_8 = arith.constant 0 : index
    %c0_9 = arith.constant 0 : index
    %3 = vector.load %arg3[%c0_8, %c0_9] : memref<2x8xf32, #tpu.memory_space<vmem>>, vector<2x8xf32>
    %4 = vector.shape_cast %0 : vector<2x8x32xf32> to vector<16x32xf32>
    %c0_10 = arith.constant 0 : index
    %c0_11 = arith.constant 0 : index
    %5 = vector.load %arg4[%c0_10, %c0_11] : memref<32x64xf32, #tpu.memory_space<vmem>>, vector<32x64xf32>
    %cst = arith.constant dense<0.000000e+00> : vector<16x64xf32>
    %6 = tpu.matmul %4, %5, %cst {dimension_numbers = #tpu.dot_dimension_numbers<[1], [0], [0], [1], [0, 0, 1, 1], [], []>} : vector<16x32xf32>, vector<32x64xf32>, vector<16x64xf32> -> vector<16x64xf32>
    %7 = vector.extract_strided_slice %6 {offsets = [0, 0], sizes = [8, 64], strides = [1, 1]} : vector<16x64xf32> to vector<8x64xf32>
    %8 = vector.extract_strided_slice %1 {offsets = [0, 0, 0], sizes = [1, 8, 8], strides = [1, 1, 1]} : vector<2x8x8xf32> to vector<1x8x8xf32>
    %9 = vector.shape_cast %8 : vector<1x8x8xf32> to vector<8x8xf32>
    %10 = vector.extract_strided_slice %7 {offsets = [0, 0], sizes = [8, 32], strides = [1, 1]} : vector<8x64xf32> to vector<8x32xf32>
    %cst_12 = arith.constant dense<0.000000e+00> : vector<8x32xf32>
    %11 = tpu.matmul %9, %10, %cst_12 {dimension_numbers = #tpu.dot_dimension_numbers<[1], [0], [0], [1], [0, 0, 1, 1], [], []>} : vector<8x8xf32>, vector<8x32xf32>, vector<8x32xf32> -> vector<8x32xf32>
    %12 = vector.extract_strided_slice %2 {offsets = [0, 0, 0], sizes = [1, 8, 8], strides = [1, 1, 1]} : vector<2x8x8xf32> to vector<1x8x8xf32>
    %13 = vector.shape_cast %12 : vector<1x8x8xf32> to vector<8x8xf32>
    %14 = vector.extract_strided_slice %7 {offsets = [0, 32], sizes = [8, 32], strides = [1, 1]} : vector<8x64xf32> to vector<8x32xf32>
    %cst_13 = arith.constant dense<0.000000e+00> : vector<8x32xf32>
    %15 = tpu.matmul %13, %14, %cst_13 {dimension_numbers = #tpu.dot_dimension_numbers<[1], [0], [0], [1], [0, 0, 1, 1], [], []>} : vector<8x8xf32>, vector<8x32xf32>, vector<8x32xf32> -> vector<8x32xf32>
    %16 = tpu.concatenate %11, %15 in 1 : vector<8x32xf32>, vector<8x32xf32> -> vector<8x64xf32>
    %17 = vector.extract_strided_slice %6 {offsets = [8, 0], sizes = [8, 64], strides = [1, 1]} : vector<16x64xf32> to vector<8x64xf32>
    %18 = vector.extract_strided_slice %1 {offsets = [1, 0, 0], sizes = [1, 8, 8], strides = [1, 1, 1]} : vector<2x8x8xf32> to vector<1x8x8xf32>
    %19 = vector.shape_cast %18 : vector<1x8x8xf32> to vector<8x8xf32>
    %20 = vector.extract_strided_slice %17 {offsets = [0, 0], sizes = [8, 32], strides = [1, 1]} : vector<8x64xf32> to vector<8x32xf32>
    %cst_14 = arith.constant dense<0.000000e+00> : vector<8x32xf32>
    %21 = tpu.matmul %19, %20, %cst_14 {dimension_numbers = #tpu.dot_dimension_numbers<[1], [0], [0], [1], [0, 0, 1, 1], [], []>} : vector<8x8xf32>, vector<8x32xf32>, vector<8x32xf32> -> vector<8x32xf32>
    %22 = vector.extract_strided_slice %2 {offsets = [1, 0, 0], sizes = [1, 8, 8], strides = [1, 1, 1]} : vector<2x8x8xf32> to vector<1x8x8xf32>
    %23 = vector.shape_cast %22 : vector<1x8x8xf32> to vector<8x8xf32>
    %24 = vector.extract_strided_slice %17 {offsets = [0, 32], sizes = [8, 32], strides = [1, 1]} : vector<8x64xf32> to vector<8x32xf32>
    %cst_15 = arith.constant dense<0.000000e+00> : vector<8x32xf32>
    %25 = tpu.matmul %23, %24, %cst_15 {dimension_numbers = #tpu.dot_dimension_numbers<[1], [0], [0], [1], [0, 0, 1, 1], [], []>} : vector<8x8xf32>, vector<8x32xf32>, vector<8x32xf32> -> vector<8x32xf32>
    %26 = tpu.concatenate %21, %25 in 1 : vector<8x32xf32>, vector<8x32xf32> -> vector<8x64xf32>
    %27 = tpu.concatenate %16, %26 in 0 : vector<8x64xf32>, vector<8x64xf32> -> vector<16x64xf32>
    %c0_16 = arith.constant 0 : index
    %c0_17 = arith.constant 0 : index
    %28 = vector.load %arg5[%c0_16, %c0_17] : memref<1x64xf32, #tpu.memory_space<vmem>>, vector<1x64xf32>
    %29 = vector.broadcast %28 : vector<1x64xf32> to vector<16x64xf32>
    %30 = arith.addf %27, %29 : vector<16x64xf32>
    %cst_18 = arith.constant 0.000000e+00 : f32
    %31 = vector.broadcast %cst_18 : f32 to vector<16x64xf32>
    %32 = arith.maximumf %30, %31 : vector<16x64xf32>
    %33 = vector.extract_strided_slice %32 {offsets = [0, 0], sizes = [16, 32], strides = [1, 1]} : vector<16x64xf32> to vector<16x32xf32>
    %c0_19 = arith.constant 0 : index
    %c0_20 = arith.constant 0 : index
    %34 = vector.load %arg6[%c0_19, %c0_20] : memref<32x32xf32, #tpu.memory_space<vmem>>, vector<32x32xf32>
    %cst_21 = arith.constant dense<0.000000e+00> : vector<16x32xf32>
    %35 = tpu.matmul %33, %34, %cst_21 {dimension_numbers = #tpu.dot_dimension_numbers<[1], [0], [0], [1], [0, 0, 1, 1], [], []>} : vector<16x32xf32>, vector<32x32xf32>, vector<16x32xf32> -> vector<16x32xf32>
    %36 = vector.extract_strided_slice %32 {offsets = [0, 32], sizes = [16, 32], strides = [1, 1]} : vector<16x64xf32> to vector<16x32xf32>
    %c0_22 = arith.constant 0 : index
    %c0_23 = arith.constant 0 : index
    %37 = vector.load %arg7[%c0_22, %c0_23] : memref<32x32xf32, #tpu.memory_space<vmem>>, vector<32x32xf32>
    %cst_24 = arith.constant dense<0.000000e+00> : vector<16x32xf32>
    %38 = tpu.matmul %36, %37, %cst_24 {dimension_numbers = #tpu.dot_dimension_numbers<[1], [0], [0], [1], [0, 0, 1, 1], [], []>} : vector<16x32xf32>, vector<32x32xf32>, vector<16x32xf32> -> vector<16x32xf32>
    %39 = tpu.concatenate %35, %38 in 1 : vector<16x32xf32>, vector<16x32xf32> -> vector<16x64xf32>
    %40 = vector.extract_strided_slice %39 {offsets = [0, 0], sizes = [8, 64], strides = [1, 1]} : vector<16x64xf32> to vector<8x64xf32>
    %41 = vector.extract_strided_slice %1 {offsets = [0, 0, 0], sizes = [1, 8, 8], strides = [1, 1, 1]} : vector<2x8x8xf32> to vector<1x8x8xf32>
    %42 = vector.shape_cast %41 : vector<1x8x8xf32> to vector<8x8xf32>
    %43 = vector.extract_strided_slice %40 {offsets = [0, 0], sizes = [8, 32], strides = [1, 1]} : vector<8x64xf32> to vector<8x32xf32>
    %cst_25 = arith.constant dense<0.000000e+00> : vector<8x32xf32>
    %44 = tpu.matmul %42, %43, %cst_25 {dimension_numbers = #tpu.dot_dimension_numbers<[1], [0], [0], [1], [0, 0, 1, 1], [], []>} : vector<8x8xf32>, vector<8x32xf32>, vector<8x32xf32> -> vector<8x32xf32>
    %45 = vector.extract_strided_slice %2 {offsets = [0, 0, 0], sizes = [1, 8, 8], strides = [1, 1, 1]} : vector<2x8x8xf32> to vector<1x8x8xf32>
    %46 = vector.shape_cast %45 : vector<1x8x8xf32> to vector<8x8xf32>
    %47 = vector.extract_strided_slice %40 {offsets = [0, 32], sizes = [8, 32], strides = [1, 1]} : vector<8x64xf32> to vector<8x32xf32>
    %cst_26 = arith.constant dense<0.000000e+00> : vector<8x32xf32>
    %48 = tpu.matmul %46, %47, %cst_26 {dimension_numbers = #tpu.dot_dimension_numbers<[1], [0], [0], [1], [0, 0, 1, 1], [], []>} : vector<8x8xf32>, vector<8x32xf32>, vector<8x32xf32> -> vector<8x32xf32>
    %49 = tpu.concatenate %44, %48 in 1 : vector<8x32xf32>, vector<8x32xf32> -> vector<8x64xf32>
    %50 = vector.extract_strided_slice %39 {offsets = [8, 0], sizes = [8, 64], strides = [1, 1]} : vector<16x64xf32> to vector<8x64xf32>
    %51 = vector.extract_strided_slice %1 {offsets = [1, 0, 0], sizes = [1, 8, 8], strides = [1, 1, 1]} : vector<2x8x8xf32> to vector<1x8x8xf32>
    %52 = vector.shape_cast %51 : vector<1x8x8xf32> to vector<8x8xf32>
    %53 = vector.extract_strided_slice %50 {offsets = [0, 0], sizes = [8, 32], strides = [1, 1]} : vector<8x64xf32> to vector<8x32xf32>
    %cst_27 = arith.constant dense<0.000000e+00> : vector<8x32xf32>
    %54 = tpu.matmul %52, %53, %cst_27 {dimension_numbers = #tpu.dot_dimension_numbers<[1], [0], [0], [1], [0, 0, 1, 1], [], []>} : vector<8x8xf32>, vector<8x32xf32>, vector<8x32xf32> -> vector<8x32xf32>
    %55 = vector.extract_strided_slice %2 {offsets = [1, 0, 0], sizes = [1, 8, 8], strides = [1, 1, 1]} : vector<2x8x8xf32> to vector<1x8x8xf32>
    %56 = vector.shape_cast %55 : vector<1x8x8xf32> to vector<8x8xf32>
    %57 = vector.extract_strided_slice %50 {offsets = [0, 32], sizes = [8, 32], strides = [1, 1]} : vector<8x64xf32> to vector<8x32xf32>
    %cst_28 = arith.constant dense<0.000000e+00> : vector<8x32xf32>
    %58 = tpu.matmul %56, %57, %cst_28 {dimension_numbers = #tpu.dot_dimension_numbers<[1], [0], [0], [1], [0, 0, 1, 1], [], []>} : vector<8x8xf32>, vector<8x32xf32>, vector<8x32xf32> -> vector<8x32xf32>
    %59 = tpu.concatenate %54, %58 in 1 : vector<8x32xf32>, vector<8x32xf32> -> vector<8x64xf32>
    %60 = tpu.concatenate %49, %59 in 0 : vector<8x64xf32>, vector<8x64xf32> -> vector<16x64xf32>
    %c0_29 = arith.constant 0 : index
    %c0_30 = arith.constant 0 : index
    %61 = vector.load %arg8[%c0_29, %c0_30] : memref<1x64xf32, #tpu.memory_space<vmem>>, vector<1x64xf32>
    %62 = vector.broadcast %61 : vector<1x64xf32> to vector<16x64xf32>
    %63 = arith.addf %60, %62 : vector<16x64xf32>
    %cst_31 = arith.constant 0.000000e+00 : f32
    %64 = vector.broadcast %cst_31 : f32 to vector<16x64xf32>
    %65 = arith.maximumf %63, %64 : vector<16x64xf32>
    %66 = tpu.concatenate %4, %65 in 1 : vector<16x32xf32>, vector<16x64xf32> -> vector<16x96xf32>
    %c0_32 = arith.constant 0 : index
    %c0_33 = arith.constant 0 : index
    %67 = vector.load %arg9[%c0_32, %c0_33] : memref<96x128xf32, #tpu.memory_space<vmem>>, vector<96x128xf32>
    %cst_34 = arith.constant dense<0.000000e+00> : vector<16x128xf32>
    %68 = tpu.matmul %66, %67, %cst_34 {dimension_numbers = #tpu.dot_dimension_numbers<[1], [0], [0], [1], [0, 0, 1, 1], [], []>} : vector<16x96xf32>, vector<96x128xf32>, vector<16x128xf32> -> vector<16x128xf32>
    %c0_35 = arith.constant 0 : index
    %c0_36 = arith.constant 0 : index
    %69 = vector.load %arg11[%c0_35, %c0_36] : memref<1x128xf32, #tpu.memory_space<vmem>>, vector<1x128xf32>
    %70 = vector.broadcast %69 : vector<1x128xf32> to vector<16x128xf32>
    %71 = arith.addf %68, %70 : vector<16x128xf32>
    %72 = vector.shape_cast %71 : vector<16x128xf32> to vector<2x8x128xf32>
    %cst_37 = arith.constant 0.000000e+00 : f32
    %73 = vector.broadcast %cst_37 : f32 to vector<2x32xf32>
    %cst_38 = arith.constant 0.000000e+00 : f32
    %74 = vector.broadcast %cst_38 : f32 to vector<2x32xf32>
    %75 = vector.extract_strided_slice %72 {offsets = [0, 0, 0], sizes = [2, 1, 128], strides = [1, 1, 1]} : vector<2x8x128xf32> to vector<2x1x128xf32>
    %76 = vector.shape_cast %75 : vector<2x1x128xf32> to vector<2x128xf32>
    %c0_39 = arith.constant 0 : index
    %c0_40 = arith.constant 0 : index
    %77 = vector.load %arg10[%c0_39, %c0_40] : memref<32x128xf32, #tpu.memory_space<vmem>>, vector<32x128xf32>
    %cst_41 = arith.constant dense<0.000000e+00> : vector<2x128xf32>
    %78 = tpu.matmul %73, %77, %cst_41 {dimension_numbers = #tpu.dot_dimension_numbers<[1], [0], [0], [1], [0, 0, 1, 1], [], []>} : vector<2x32xf32>, vector<32x128xf32>, vector<2x128xf32> -> vector<2x128xf32>
    %79 = arith.addf %76, %78 : vector<2x128xf32>
    %80 = vector.extract_strided_slice %79 {offsets = [0, 0], sizes = [2, 32], strides = [1, 1]} : vector<2x128xf32> to vector<2x32xf32>
    %81 = arith.negf %80 : vector<2x32xf32>
    %82 = math.exp %81 : vector<2x32xf32>
    %cst_42 = arith.constant 1.000000e+00 : f32
    %83 = vector.broadcast %cst_42 : f32 to vector<2x32xf32>
    %84 = arith.addf %83, %82 : vector<2x32xf32>
    %85 = arith.divf %83, %84 : vector<2x32xf32>
    %86 = vector.extract_strided_slice %79 {offsets = [0, 32], sizes = [2, 32], strides = [1, 1]} : vector<2x128xf32> to vector<2x32xf32>
    %87 = arith.negf %86 : vector<2x32xf32>
    %88 = math.exp %87 : vector<2x32xf32>
    %cst_43 = arith.constant 1.000000e+00 : f32
    %89 = vector.broadcast %cst_43 : f32 to vector<2x32xf32>
    %90 = arith.addf %89, %88 : vector<2x32xf32>
    %91 = arith.divf %89, %90 : vector<2x32xf32>
    %92 = vector.extract_strided_slice %79 {offsets = [0, 64], sizes = [2, 32], strides = [1, 1]} : vector<2x128xf32> to vector<2x32xf32>
    %93 = math.tanh %92 : vector<2x32xf32>
    %94 = vector.extract_strided_slice %79 {offsets = [0, 96], sizes = [2, 32], strides = [1, 1]} : vector<2x128xf32> to vector<2x32xf32>
    %95 = arith.negf %94 : vector<2x32xf32>
    %96 = math.exp %95 : vector<2x32xf32>
    %cst_44 = arith.constant 1.000000e+00 : f32
    %97 = vector.broadcast %cst_44 : f32 to vector<2x32xf32>
    %98 = arith.addf %97, %96 : vector<2x32xf32>
    %99 = arith.divf %97, %98 : vector<2x32xf32>
    %100 = arith.mulf %91, %74 : vector<2x32xf32>
    %101 = arith.mulf %85, %93 : vector<2x32xf32>
    %102 = arith.addf %100, %101 : vector<2x32xf32>
    %103 = math.tanh %102 : vector<2x32xf32>
    %104 = arith.mulf %99, %103 : vector<2x32xf32>
    %105 = vector.shape_cast %104 : vector<2x32xf32> to vector<2x1x32xf32>
    %c0_45 = arith.constant 0 : index
    %c0_46 = arith.constant 0 : index
    %c0_47 = arith.constant 0 : index
    %106 = vector.load %arg17[%c0_45, %c0_46, %c0_47] : memref<2x8x32xf32, #tpu.memory_space<vmem>>, vector<2x1x32xf32>
    tpu.vector_store %arg17[%c0_45, %c0_46, %c0_47], %105 {strides = array<i32>} : memref<2x8x32xf32, #tpu.memory_space<vmem>>, vector<2x1x32xf32>,
    %107 = vector.extract_strided_slice %72 {offsets = [0, 1, 0], sizes = [2, 1, 128], strides = [1, 1, 1]} : vector<2x8x128xf32> to vector<2x1x128xf32>
    %108 = vector.shape_cast %107 : vector<2x1x128xf32> to vector<2x128xf32>
    %c0_48 = arith.constant 0 : index
    %c0_49 = arith.constant 0 : index
    %109 = vector.load %arg10[%c0_48, %c0_49] : memref<32x128xf32, #tpu.memory_space<vmem>>, vector<32x128xf32>
    %cst_50 = arith.constant dense<0.000000e+00> : vector<2x128xf32>
    %110 = tpu.matmul %104, %109, %cst_50 {dimension_numbers = #tpu.dot_dimension_numbers<[1], [0], [0], [1], [0, 0, 1, 1], [], []>} : vector<2x32xf32>, vector<32x128xf32>, vector<2x128xf32> -> vector<2x128xf32>
    %111 = arith.addf %108, %110 : vector<2x128xf32>
    %112 = vector.extract_strided_slice %111 {offsets = [0, 0], sizes = [2, 32], strides = [1, 1]} : vector<2x128xf32> to vector<2x32xf32>
    %113 = arith.negf %112 : vector<2x32xf32>
    %114 = math.exp %113 : vector<2x32xf32>
    %cst_51 = arith.constant 1.000000e+00 : f32
    %115 = vector.broadcast %cst_51 : f32 to vector<2x32xf32>
    %116 = arith.addf %115, %114 : vector<2x32xf32>
    %117 = arith.divf %115, %116 : vector<2x32xf32>
    %118 = vector.extract_strided_slice %111 {offsets = [0, 32], sizes = [2, 32], strides = [1, 1]} : vector<2x128xf32> to vector<2x32xf32>
    %119 = arith.negf %118 : vector<2x32xf32>
    %120 = math.exp %119 : vector<2x32xf32>
    %cst_52 = arith.constant 1.000000e+00 : f32
    %121 = vector.broadcast %cst_52 : f32 to vector<2x32xf32>
    %122 = arith.addf %121, %120 : vector<2x32xf32>
    %123 = arith.divf %121, %122 : vector<2x32xf32>
    %124 = vector.extract_strided_slice %111 {offsets = [0, 64], sizes = [2, 32], strides = [1, 1]} : vector<2x128xf32> to vector<2x32xf32>
    %125 = math.tanh %124 : vector<2x32xf32>
    %126 = vector.extract_strided_slice %111 {offsets = [0, 96], sizes = [2, 32], strides = [1, 1]} : vector<2x128xf32> to vector<2x32xf32>
    %127 = arith.negf %126 : vector<2x32xf32>
    %128 = math.exp %127 : vector<2x32xf32>
    %cst_53 = arith.constant 1.000000e+00 : f32
    %129 = vector.broadcast %cst_53 : f32 to vector<2x32xf32>
    %130 = arith.addf %129, %128 : vector<2x32xf32>
    %131 = arith.divf %129, %130 : vector<2x32xf32>
    %132 = arith.mulf %123, %102 : vector<2x32xf32>
    %133 = arith.mulf %117, %125 : vector<2x32xf32>
    %134 = arith.addf %132, %133 : vector<2x32xf32>
    %135 = math.tanh %134 : vector<2x32xf32>
    %136 = arith.mulf %131, %135 : vector<2x32xf32>
    %137 = vector.shape_cast %136 : vector<2x32xf32> to vector<2x1x32xf32>
    %c0_54 = arith.constant 0 : index
    %c1 = arith.constant 1 : index
    %c0_55 = arith.constant 0 : index
    %138 = vector.load %arg17[%c0_54, %c1, %c0_55] : memref<2x8x32xf32, #tpu.memory_space<vmem>>, vector<2x1x32xf32>
    tpu.vector_store %arg17[%c0_54, %c1, %c0_55], %137 {strides = array<i32>} : memref<2x8x32xf32, #tpu.memory_space<vmem>>, vector<2x1x32xf32>,
    %139 = vector.extract_strided_slice %72 {offsets = [0, 2, 0], sizes = [2, 1, 128], strides = [1, 1, 1]} : vector<2x8x128xf32> to vector<2x1x128xf32>
    %140 = vector.shape_cast %139 : vector<2x1x128xf32> to vector<2x128xf32>
    %c0_56 = arith.constant 0 : index
    %c0_57 = arith.constant 0 : index
    %141 = vector.load %arg10[%c0_56, %c0_57] : memref<32x128xf32, #tpu.memory_space<vmem>>, vector<32x128xf32>
    %cst_58 = arith.constant dense<0.000000e+00> : vector<2x128xf32>
    %142 = tpu.matmul %136, %141, %cst_58 {dimension_numbers = #tpu.dot_dimension_numbers<[1], [0], [0], [1], [0, 0, 1, 1], [], []>} : vector<2x32xf32>, vector<32x128xf32>, vector<2x128xf32> -> vector<2x128xf32>
    %143 = arith.addf %140, %142 : vector<2x128xf32>
    %144 = vector.extract_strided_slice %143 {offsets = [0, 0], sizes = [2, 32], strides = [1, 1]} : vector<2x128xf32> to vector<2x32xf32>
    %145 = arith.negf %144 : vector<2x32xf32>
    %146 = math.exp %145 : vector<2x32xf32>
    %cst_59 = arith.constant 1.000000e+00 : f32
    %147 = vector.broadcast %cst_59 : f32 to vector<2x32xf32>
    %148 = arith.addf %147, %146 : vector<2x32xf32>
    %149 = arith.divf %147, %148 : vector<2x32xf32>
    %150 = vector.extract_strided_slice %143 {offsets = [0, 32], sizes = [2, 32], strides = [1, 1]} : vector<2x128xf32> to vector<2x32xf32>
    %151 = arith.negf %150 : vector<2x32xf32>
    %152 = math.exp %151 : vector<2x32xf32>
    %cst_60 = arith.constant 1.000000e+00 : f32
    %153 = vector.broadcast %cst_60 : f32 to vector<2x32xf32>
    %154 = arith.addf %153, %152 : vector<2x32xf32>
    %155 = arith.divf %153, %154 : vector<2x32xf32>
    %156 = vector.extract_strided_slice %143 {offsets = [0, 64], sizes = [2, 32], strides = [1, 1]} : vector<2x128xf32> to vector<2x32xf32>
    %157 = math.tanh %156 : vector<2x32xf32>
    %158 = vector.extract_strided_slice %143 {offsets = [0, 96], sizes = [2, 32], strides = [1, 1]} : vector<2x128xf32> to vector<2x32xf32>
    %159 = arith.negf %158 : vector<2x32xf32>
    %160 = math.exp %159 : vector<2x32xf32>
    %cst_61 = arith.constant 1.000000e+00 : f32
    %161 = vector.broadcast %cst_61 : f32 to vector<2x32xf32>
    %162 = arith.addf %161, %160 : vector<2x32xf32>
    %163 = arith.divf %161, %162 : vector<2x32xf32>
    %164 = arith.mulf %155, %134 : vector<2x32xf32>
    %165 = arith.mulf %149, %157 : vector<2x32xf32>
    %166 = arith.addf %164, %165 : vector<2x32xf32>
    %167 = math.tanh %166 : vector<2x32xf32>
    %168 = arith.mulf %163, %167 : vector<2x32xf32>
    %169 = vector.shape_cast %168 : vector<2x32xf32> to vector<2x1x32xf32>
    %c0_62 = arith.constant 0 : index
    %c2 = arith.constant 2 : index
    %c0_63 = arith.constant 0 : index
    %170 = vector.load %arg17[%c0_62, %c2, %c0_63] : memref<2x8x32xf32, #tpu.memory_space<vmem>>, vector<2x1x32xf32>
    tpu.vector_store %arg17[%c0_62, %c2, %c0_63], %169 {strides = array<i32>} : memref<2x8x32xf32, #tpu.memory_space<vmem>>, vector<2x1x32xf32>,
    %171 = vector.extract_strided_slice %72 {offsets = [0, 3, 0], sizes = [2, 1, 128], strides = [1, 1, 1]} : vector<2x8x128xf32> to vector<2x1x128xf32>
    %172 = vector.shape_cast %171 : vector<2x1x128xf32> to vector<2x128xf32>
    %c0_64 = arith.constant 0 : index
    %c0_65 = arith.constant 0 : index
    %173 = vector.load %arg10[%c0_64, %c0_65] : memref<32x128xf32, #tpu.memory_space<vmem>>, vector<32x128xf32>
    %cst_66 = arith.constant dense<0.000000e+00> : vector<2x128xf32>
    %174 = tpu.matmul %168, %173, %cst_66 {dimension_numbers = #tpu.dot_dimension_numbers<[1], [0], [0], [1], [0, 0, 1, 1], [], []>} : vector<2x32xf32>, vector<32x128xf32>, vector<2x128xf32> -> vector<2x128xf32>
    %175 = arith.addf %172, %174 : vector<2x128xf32>
    %176 = vector.extract_strided_slice %175 {offsets = [0, 0], sizes = [2, 32], strides = [1, 1]} : vector<2x128xf32> to vector<2x32xf32>
    %177 = arith.negf %176 : vector<2x32xf32>
    %178 = math.exp %177 : vector<2x32xf32>
    %cst_67 = arith.constant 1.000000e+00 : f32
    %179 = vector.broadcast %cst_67 : f32 to vector<2x32xf32>
    %180 = arith.addf %179, %178 : vector<2x32xf32>
    %181 = arith.divf %179, %180 : vector<2x32xf32>
    %182 = vector.extract_strided_slice %175 {offsets = [0, 32], sizes = [2, 32], strides = [1, 1]} : vector<2x128xf32> to vector<2x32xf32>
    %183 = arith.negf %182 : vector<2x32xf32>
    %184 = math.exp %183 : vector<2x32xf32>
    %cst_68 = arith.constant 1.000000e+00 : f32
    %185 = vector.broadcast %cst_68 : f32 to vector<2x32xf32>
    %186 = arith.addf %185, %184 : vector<2x32xf32>
    %187 = arith.divf %185, %186 : vector<2x32xf32>
    %188 = vector.extract_strided_slice %175 {offsets = [0, 64], sizes = [2, 32], strides = [1, 1]} : vector<2x128xf32> to vector<2x32xf32>
    %189 = math.tanh %188 : vector<2x32xf32>
    %190 = vector.extract_strided_slice %175 {offsets = [0, 96], sizes = [2, 32], strides = [1, 1]} : vector<2x128xf32> to vector<2x32xf32>
    %191 = arith.negf %190 : vector<2x32xf32>
    %192 = math.exp %191 : vector<2x32xf32>
    %cst_69 = arith.constant 1.000000e+00 : f32
    %193 = vector.broadcast %cst_69 : f32 to vector<2x32xf32>
    %194 = arith.addf %193, %192 : vector<2x32xf32>
    %195 = arith.divf %193, %194 : vector<2x32xf32>
    %196 = arith.mulf %187, %166 : vector<2x32xf32>
    %197 = arith.mulf %181, %189 : vector<2x32xf32>
    %198 = arith.addf %196, %197 : vector<2x32xf32>
    %199 = math.tanh %198 : vector<2x32xf32>
    %200 = arith.mulf %195, %199 : vector<2x32xf32>
    %201 = vector.shape_cast %200 : vector<2x32xf32> to vector<2x1x32xf32>
    %c0_70 = arith.constant 0 : index
    %c3 = arith.constant 3 : index
    %c0_71 = arith.constant 0 : index
    %202 = vector.load %arg17[%c0_70, %c3, %c0_71] : memref<2x8x32xf32, #tpu.memory_space<vmem>>, vector<2x1x32xf32>
    tpu.vector_store %arg17[%c0_70, %c3, %c0_71], %201 {strides = array<i32>} : memref<2x8x32xf32, #tpu.memory_space<vmem>>, vector<2x1x32xf32>,
    %203 = vector.extract_strided_slice %72 {offsets = [0, 4, 0], sizes = [2, 1, 128], strides = [1, 1, 1]} : vector<2x8x128xf32> to vector<2x1x128xf32>
    %204 = vector.shape_cast %203 : vector<2x1x128xf32> to vector<2x128xf32>
    %c0_72 = arith.constant 0 : index
    %c0_73 = arith.constant 0 : index
    %205 = vector.load %arg10[%c0_72, %c0_73] : memref<32x128xf32, #tpu.memory_space<vmem>>, vector<32x128xf32>
    %cst_74 = arith.constant dense<0.000000e+00> : vector<2x128xf32>
    %206 = tpu.matmul %200, %205, %cst_74 {dimension_numbers = #tpu.dot_dimension_numbers<[1], [0], [0], [1], [0, 0, 1, 1], [], []>} : vector<2x32xf32>, vector<32x128xf32>, vector<2x128xf32> -> vector<2x128xf32>
    %207 = arith.addf %204, %206 : vector<2x128xf32>
    %208 = vector.extract_strided_slice %207 {offsets = [0, 0], sizes = [2, 32], strides = [1, 1]} : vector<2x128xf32> to vector<2x32xf32>
    %209 = arith.negf %208 : vector<2x32xf32>
    %210 = math.exp %209 : vector<2x32xf32>
    %cst_75 = arith.constant 1.000000e+00 : f32
    %211 = vector.broadcast %cst_75 : f32 to vector<2x32xf32>
    %212 = arith.addf %211, %210 : vector<2x32xf32>
    %213 = arith.divf %211, %212 : vector<2x32xf32>
    %214 = vector.extract_strided_slice %207 {offsets = [0, 32], sizes = [2, 32], strides = [1, 1]} : vector<2x128xf32> to vector<2x32xf32>
    %215 = arith.negf %214 : vector<2x32xf32>
    %216 = math.exp %215 : vector<2x32xf32>
    %cst_76 = arith.constant 1.000000e+00 : f32
    %217 = vector.broadcast %cst_76 : f32 to vector<2x32xf32>
    %218 = arith.addf %217, %216 : vector<2x32xf32>
    %219 = arith.divf %217, %218 : vector<2x32xf32>
    %220 = vector.extract_strided_slice %207 {offsets = [0, 64], sizes = [2, 32], strides = [1, 1]} : vector<2x128xf32> to vector<2x32xf32>
    %221 = math.tanh %220 : vector<2x32xf32>
    %222 = vector.extract_strided_slice %207 {offsets = [0, 96], sizes = [2, 32], strides = [1, 1]} : vector<2x128xf32> to vector<2x32xf32>
    %223 = arith.negf %222 : vector<2x32xf32>
    %224 = math.exp %223 : vector<2x32xf32>
    %cst_77 = arith.constant 1.000000e+00 : f32
    %225 = vector.broadcast %cst_77 : f32 to vector<2x32xf32>
    %226 = arith.addf %225, %224 : vector<2x32xf32>
    %227 = arith.divf %225, %226 : vector<2x32xf32>
    %228 = arith.mulf %219, %198 : vector<2x32xf32>
    %229 = arith.mulf %213, %221 : vector<2x32xf32>
    %230 = arith.addf %228, %229 : vector<2x32xf32>
    %231 = math.tanh %230 : vector<2x32xf32>
    %232 = arith.mulf %227, %231 : vector<2x32xf32>
    %233 = vector.shape_cast %232 : vector<2x32xf32> to vector<2x1x32xf32>
    %c0_78 = arith.constant 0 : index
    %c4 = arith.constant 4 : index
    %c0_79 = arith.constant 0 : index
    %234 = vector.load %arg17[%c0_78, %c4, %c0_79] : memref<2x8x32xf32, #tpu.memory_space<vmem>>, vector<2x1x32xf32>
    tpu.vector_store %arg17[%c0_78, %c4, %c0_79], %233 {strides = array<i32>} : memref<2x8x32xf32, #tpu.memory_space<vmem>>, vector<2x1x32xf32>,
    %235 = vector.extract_strided_slice %72 {offsets = [0, 5, 0], sizes = [2, 1, 128], strides = [1, 1, 1]} : vector<2x8x128xf32> to vector<2x1x128xf32>
    %236 = vector.shape_cast %235 : vector<2x1x128xf32> to vector<2x128xf32>
    %c0_80 = arith.constant 0 : index
    %c0_81 = arith.constant 0 : index
    %237 = vector.load %arg10[%c0_80, %c0_81] : memref<32x128xf32, #tpu.memory_space<vmem>>, vector<32x128xf32>
    %cst_82 = arith.constant dense<0.000000e+00> : vector<2x128xf32>
    %238 = tpu.matmul %232, %237, %cst_82 {dimension_numbers = #tpu.dot_dimension_numbers<[1], [0], [0], [1], [0, 0, 1, 1], [], []>} : vector<2x32xf32>, vector<32x128xf32>, vector<2x128xf32> -> vector<2x128xf32>
    %239 = arith.addf %236, %238 : vector<2x128xf32>
    %240 = vector.extract_strided_slice %239 {offsets = [0, 0], sizes = [2, 32], strides = [1, 1]} : vector<2x128xf32> to vector<2x32xf32>
    %241 = arith.negf %240 : vector<2x32xf32>
    %242 = math.exp %241 : vector<2x32xf32>
    %cst_83 = arith.constant 1.000000e+00 : f32
    %243 = vector.broadcast %cst_83 : f32 to vector<2x32xf32>
    %244 = arith.addf %243, %242 : vector<2x32xf32>
    %245 = arith.divf %243, %244 : vector<2x32xf32>
    %246 = vector.extract_strided_slice %239 {offsets = [0, 32], sizes = [2, 32], strides = [1, 1]} : vector<2x128xf32> to vector<2x32xf32>
    %247 = arith.negf %246 : vector<2x32xf32>
    %248 = math.exp %247 : vector<2x32xf32>
    %cst_84 = arith.constant 1.000000e+00 : f32
    %249 = vector.broadcast %cst_84 : f32 to vector<2x32xf32>
    %250 = arith.addf %249, %248 : vector<2x32xf32>
    %251 = arith.divf %249, %250 : vector<2x32xf32>
    %252 = vector.extract_strided_slice %239 {offsets = [0, 64], sizes = [2, 32], strides = [1, 1]} : vector<2x128xf32> to vector<2x32xf32>
    %253 = math.tanh %252 : vector<2x32xf32>
    %254 = vector.extract_strided_slice %239 {offsets = [0, 96], sizes = [2, 32], strides = [1, 1]} : vector<2x128xf32> to vector<2x32xf32>
    %255 = arith.negf %254 : vector<2x32xf32>
    %256 = math.exp %255 : vector<2x32xf32>
    %cst_85 = arith.constant 1.000000e+00 : f32
    %257 = vector.broadcast %cst_85 : f32 to vector<2x32xf32>
    %258 = arith.addf %257, %256 : vector<2x32xf32>
    %259 = arith.divf %257, %258 : vector<2x32xf32>
    %260 = arith.mulf %251, %230 : vector<2x32xf32>
    %261 = arith.mulf %245, %253 : vector<2x32xf32>
    %262 = arith.addf %260, %261 : vector<2x32xf32>
    %263 = math.tanh %262 : vector<2x32xf32>
    %264 = arith.mulf %259, %263 : vector<2x32xf32>
    %265 = vector.shape_cast %264 : vector<2x32xf32> to vector<2x1x32xf32>
    %c0_86 = arith.constant 0 : index
    %c5 = arith.constant 5 : index
    %c0_87 = arith.constant 0 : index
    %266 = vector.load %arg17[%c0_86, %c5, %c0_87] : memref<2x8x32xf32, #tpu.memory_space<vmem>>, vector<2x1x32xf32>
    tpu.vector_store %arg17[%c0_86, %c5, %c0_87], %265 {strides = array<i32>} : memref<2x8x32xf32, #tpu.memory_space<vmem>>, vector<2x1x32xf32>,
    %267 = vector.extract_strided_slice %72 {offsets = [0, 6, 0], sizes = [2, 1, 128], strides = [1, 1, 1]} : vector<2x8x128xf32> to vector<2x1x128xf32>
    %268 = vector.shape_cast %267 : vector<2x1x128xf32> to vector<2x128xf32>
    %c0_88 = arith.constant 0 : index
    %c0_89 = arith.constant 0 : index
    %269 = vector.load %arg10[%c0_88, %c0_89] : memref<32x128xf32, #tpu.memory_space<vmem>>, vector<32x128xf32>
    %cst_90 = arith.constant dense<0.000000e+00> : vector<2x128xf32>
    %270 = tpu.matmul %264, %269, %cst_90 {dimension_numbers = #tpu.dot_dimension_numbers<[1], [0], [0], [1], [0, 0, 1, 1], [], []>} : vector<2x32xf32>, vector<32x128xf32>, vector<2x128xf32> -> vector<2x128xf32>
    %271 = arith.addf %268, %270 : vector<2x128xf32>
    %272 = vector.extract_strided_slice %271 {offsets = [0, 0], sizes = [2, 32], strides = [1, 1]} : vector<2x128xf32> to vector<2x32xf32>
    %273 = arith.negf %272 : vector<2x32xf32>
    %274 = math.exp %273 : vector<2x32xf32>
    %cst_91 = arith.constant 1.000000e+00 : f32
    %275 = vector.broadcast %cst_91 : f32 to vector<2x32xf32>
    %276 = arith.addf %275, %274 : vector<2x32xf32>
    %277 = arith.divf %275, %276 : vector<2x32xf32>
    %278 = vector.extract_strided_slice %271 {offsets = [0, 32], sizes = [2, 32], strides = [1, 1]} : vector<2x128xf32> to vector<2x32xf32>
    %279 = arith.negf %278 : vector<2x32xf32>
    %280 = math.exp %279 : vector<2x32xf32>
    %cst_92 = arith.constant 1.000000e+00 : f32
    %281 = vector.broadcast %cst_92 : f32 to vector<2x32xf32>
    %282 = arith.addf %281, %280 : vector<2x32xf32>
    %283 = arith.divf %281, %282 : vector<2x32xf32>
    %284 = vector.extract_strided_slice %271 {offsets = [0, 64], sizes = [2, 32], strides = [1, 1]} : vector<2x128xf32> to vector<2x32xf32>
    %285 = math.tanh %284 : vector<2x32xf32>
    %286 = vector.extract_strided_slice %271 {offsets = [0, 96], sizes = [2, 32], strides = [1, 1]} : vector<2x128xf32> to vector<2x32xf32>
    %287 = arith.negf %286 : vector<2x32xf32>
    %288 = math.exp %287 : vector<2x32xf32>
    %cst_93 = arith.constant 1.000000e+00 : f32
    %289 = vector.broadcast %cst_93 : f32 to vector<2x32xf32>
    %290 = arith.addf %289, %288 : vector<2x32xf32>
    %291 = arith.divf %289, %290 : vector<2x32xf32>
    %292 = arith.mulf %283, %262 : vector<2x32xf32>
    %293 = arith.mulf %277, %285 : vector<2x32xf32>
    %294 = arith.addf %292, %293 : vector<2x32xf32>
    %295 = math.tanh %294 : vector<2x32xf32>
    %296 = arith.mulf %291, %295 : vector<2x32xf32>
    %297 = vector.shape_cast %296 : vector<2x32xf32> to vector<2x1x32xf32>
    %c0_94 = arith.constant 0 : index
    %c6 = arith.constant 6 : index
    %c0_95 = arith.constant 0 : index
    %298 = vector.load %arg17[%c0_94, %c6, %c0_95] : memref<2x8x32xf32, #tpu.memory_space<vmem>>, vector<2x1x32xf32>
    tpu.vector_store %arg17[%c0_94, %c6, %c0_95], %297 {strides = array<i32>} : memref<2x8x32xf32, #tpu.memory_space<vmem>>, vector<2x1x32xf32>,
    %299 = vector.extract_strided_slice %72 {offsets = [0, 7, 0], sizes = [2, 1, 128], strides = [1, 1, 1]} : vector<2x8x128xf32> to vector<2x1x128xf32>
    %300 = vector.shape_cast %299 : vector<2x1x128xf32> to vector<2x128xf32>
    %c0_96 = arith.constant 0 : index
    %c0_97 = arith.constant 0 : index
    %301 = vector.load %arg10[%c0_96, %c0_97] : memref<32x128xf32, #tpu.memory_space<vmem>>, vector<32x128xf32>
    %cst_98 = arith.constant dense<0.000000e+00> : vector<2x128xf32>
    %302 = tpu.matmul %296, %301, %cst_98 {dimension_numbers = #tpu.dot_dimension_numbers<[1], [0], [0], [1], [0, 0, 1, 1], [], []>} : vector<2x32xf32>, vector<32x128xf32>, vector<2x128xf32> -> vector<2x128xf32>
    %303 = arith.addf %300, %302 : vector<2x128xf32>
    %304 = vector.extract_strided_slice %303 {offsets = [0, 0], sizes = [2, 32], strides = [1, 1]} : vector<2x128xf32> to vector<2x32xf32>
    %305 = arith.negf %304 : vector<2x32xf32>
    %306 = math.exp %305 : vector<2x32xf32>
    %cst_99 = arith.constant 1.000000e+00 : f32
    %307 = vector.broadcast %cst_99 : f32 to vector<2x32xf32>
    %308 = arith.addf %307, %306 : vector<2x32xf32>
    %309 = arith.divf %307, %308 : vector<2x32xf32>
    %310 = vector.extract_strided_slice %303 {offsets = [0, 32], sizes = [2, 32], strides = [1, 1]} : vector<2x128xf32> to vector<2x32xf32>
    %311 = arith.negf %310 : vector<2x32xf32>
    %312 = math.exp %311 : vector<2x32xf32>
    %cst_100 = arith.constant 1.000000e+00 : f32
    %313 = vector.broadcast %cst_100 : f32 to vector<2x32xf32>
    %314 = arith.addf %313, %312 : vector<2x32xf32>
    %315 = arith.divf %313, %314 : vector<2x32xf32>
    %316 = vector.extract_strided_slice %303 {offsets = [0, 64], sizes = [2, 32], strides = [1, 1]} : vector<2x128xf32> to vector<2x32xf32>
    %317 = math.tanh %316 : vector<2x32xf32>
    %318 = vector.extract_strided_slice %303 {offsets = [0, 96], sizes = [2, 32], strides = [1, 1]} : vector<2x128xf32> to vector<2x32xf32>
    %319 = arith.negf %318 : vector<2x32xf32>
    %320 = math.exp %319 : vector<2x32xf32>
    %cst_101 = arith.constant 1.000000e+00 : f32
    %321 = vector.broadcast %cst_101 : f32 to vector<2x32xf32>
    %322 = arith.addf %321, %320 : vector<2x32xf32>
    %323 = arith.divf %321, %322 : vector<2x32xf32>
    %324 = arith.mulf %315, %294 : vector<2x32xf32>
    %325 = arith.mulf %309, %317 : vector<2x32xf32>
    %326 = arith.addf %324, %325 : vector<2x32xf32>
    %327 = math.tanh %326 : vector<2x32xf32>
    %328 = arith.mulf %323, %327 : vector<2x32xf32>
    %329 = vector.shape_cast %328 : vector<2x32xf32> to vector<2x1x32xf32>
    %c0_102 = arith.constant 0 : index
    %c7 = arith.constant 7 : index
    %c0_103 = arith.constant 0 : index
    %330 = vector.load %arg17[%c0_102, %c7, %c0_103] : memref<2x8x32xf32, #tpu.memory_space<vmem>>, vector<2x1x32xf32>
    tpu.vector_store %arg17[%c0_102, %c7, %c0_103], %329 {strides = array<i32>} : memref<2x8x32xf32, #tpu.memory_space<vmem>>, vector<2x1x32xf32>,
    %c0_104 = arith.constant 0 : index
    %c0_105 = arith.constant 0 : index
    %c0_106 = arith.constant 0 : index
    %331 = vector.load %arg17[%c0_104, %c0_105, %c0_106] : memref<2x8x32xf32, #tpu.memory_space<vmem>>, vector<2x8x32xf32>
    %332 = vector.shape_cast %331 : vector<2x8x32xf32> to vector<16x32xf32>
    %c0_107 = arith.constant 0 : index
    %c0_108 = arith.constant 0 : index
    %333 = vector.load %arg12[%c0_107, %c0_108] : memref<32x96xf32, #tpu.memory_space<vmem>>, vector<32x96xf32>
    %cst_109 = arith.constant dense<0.000000e+00> : vector<16x96xf32>
    %334 = tpu.matmul %332, %333, %cst_109 {dimension_numbers = #tpu.dot_dimension_numbers<[1], [0], [0], [1], [0, 0, 1, 1], [], []>} : vector<16x32xf32>, vector<32x96xf32>, vector<16x96xf32> -> vector<16x96xf32>
    %c0_110 = arith.constant 0 : index
    %c0_111 = arith.constant 0 : index
    %335 = vector.load %arg13[%c0_110, %c0_111] : memref<1x96xf32, #tpu.memory_space<vmem>>, vector<1x96xf32>
    %336 = vector.broadcast %335 : vector<1x96xf32> to vector<16x96xf32>
    %337 = arith.addf %334, %336 : vector<16x96xf32>
    %338 = vector.extract_strided_slice %3 {offsets = [0, 0], sizes = [1, 8], strides = [1, 1]} : vector<2x8xf32> to vector<1x8xf32>
    %cst_112 = arith.constant 1.000000e+00 : f32
    %339 = vector.broadcast %cst_112 : f32 to vector<1x8xf32>
    %340 = arith.subf %339, %338 : vector<1x8xf32>
    %cst_113 = arith.constant -1.000000e+04 : f32
    %341 = vector.broadcast %cst_113 : f32 to vector<1x8xf32>
    %342 = arith.mulf %340, %341 : vector<1x8xf32>
    %343 = vector.extract_strided_slice %337 {offsets = [0, 0], sizes = [8, 32], strides = [1, 1]} : vector<16x96xf32> to vector<8x32xf32>
    %344 = vector.extract_strided_slice %337 {offsets = [0, 32], sizes = [8, 32], strides = [1, 1]} : vector<16x96xf32> to vector<8x32xf32>
    %345 = vector.extract_strided_slice %337 {offsets = [0, 64], sizes = [8, 32], strides = [1, 1]} : vector<16x96xf32> to vector<8x32xf32>
    %346 = vector.extract_strided_slice %343 {offsets = [0, 0], sizes = [8, 8], strides = [1, 1]} : vector<8x32xf32> to vector<8x8xf32>
    %347 = vector.extract_strided_slice %344 {offsets = [0, 0], sizes = [8, 8], strides = [1, 1]} : vector<8x32xf32> to vector<8x8xf32>
    %cst_114 = arith.constant dense<0.000000e+00> : vector<8x8xf32>
    %348 = tpu.matmul %346, %347, %cst_114 {dimension_numbers = #tpu.dot_dimension_numbers<[1], [1], [0], [0], [0, 0, 1, 0], [], []>} : vector<8x8xf32>, vector<8x8xf32>, vector<8x8xf32> -> vector<8x8xf32>
    %cst_115 = arith.constant 0.353553385 : f32
    %349 = vector.broadcast %cst_115 : f32 to vector<8x8xf32>
    %350 = arith.mulf %348, %349 : vector<8x8xf32>
    %351 = vector.broadcast %342 : vector<1x8xf32> to vector<8x8xf32>
    %352 = arith.addf %350, %351 : vector<8x8xf32>
    %cst_116 = arith.constant dense<0xFF800000> : vector<8xf32>
    %353 = vector.multi_reduction <maximumf>, %352, %cst_116 [1] : vector<8x8xf32> to vector<8xf32>
    %cst_117 = arith.constant 0xFF800000 : f32
    %354 = vector.broadcast %cst_117 : f32 to vector<8xf32>
    %355 = arith.maximumf %354, %353 : vector<8xf32>
    %356 = vector.shape_cast %355 : vector<8xf32> to vector<8x1xf32>
    %357 = vector.broadcast %356 : vector<8x1xf32> to vector<8x8xf32>
    %358 = arith.subf %352, %357 : vector<8x8xf32>
    %359 = math.exp %358 : vector<8x8xf32>
    %cst_118 = arith.constant dense<0.000000e+00> : vector<8xf32>
    %360 = vector.multi_reduction <add>, %359, %cst_118 [1] : vector<8x8xf32> to vector<8xf32>
    %361 = vector.shape_cast %360 : vector<8xf32> to vector<8x1xf32>
    %362 = vector.broadcast %361 : vector<8x1xf32> to vector<8x8xf32>
    %363 = arith.divf %359, %362 : vector<8x8xf32>
    %364 = vector.extract_strided_slice %345 {offsets = [0, 0], sizes = [8, 8], strides = [1, 1]} : vector<8x32xf32> to vector<8x8xf32>
    %cst_119 = arith.constant dense<0.000000e+00> : vector<8x8xf32>
    %365 = tpu.matmul %363, %364, %cst_119 {dimension_numbers = #tpu.dot_dimension_numbers<[1], [0], [0], [1], [0, 0, 1, 1], [], []>} : vector<8x8xf32>, vector<8x8xf32>, vector<8x8xf32> -> vector<8x8xf32>
    %366 = vector.extract_strided_slice %343 {offsets = [0, 8], sizes = [8, 8], strides = [1, 1]} : vector<8x32xf32> to vector<8x8xf32>
    %367 = vector.extract_strided_slice %344 {offsets = [0, 8], sizes = [8, 8], strides = [1, 1]} : vector<8x32xf32> to vector<8x8xf32>
    %cst_120 = arith.constant dense<0.000000e+00> : vector<8x8xf32>
    %368 = tpu.matmul %366, %367, %cst_120 {dimension_numbers = #tpu.dot_dimension_numbers<[1], [1], [0], [0], [0, 0, 1, 0], [], []>} : vector<8x8xf32>, vector<8x8xf32>, vector<8x8xf32> -> vector<8x8xf32>
    %cst_121 = arith.constant 0.353553385 : f32
    %369 = vector.broadcast %cst_121 : f32 to vector<8x8xf32>
    %370 = arith.mulf %368, %369 : vector<8x8xf32>
    %371 = vector.broadcast %342 : vector<1x8xf32> to vector<8x8xf32>
    %372 = arith.addf %370, %371 : vector<8x8xf32>
    %cst_122 = arith.constant dense<0xFF800000> : vector<8xf32>
    %373 = vector.multi_reduction <maximumf>, %372, %cst_122 [1] : vector<8x8xf32> to vector<8xf32>
    %cst_123 = arith.constant 0xFF800000 : f32
    %374 = vector.broadcast %cst_123 : f32 to vector<8xf32>
    %375 = arith.maximumf %374, %373 : vector<8xf32>
    %376 = vector.shape_cast %375 : vector<8xf32> to vector<8x1xf32>
    %377 = vector.broadcast %376 : vector<8x1xf32> to vector<8x8xf32>
    %378 = arith.subf %372, %377 : vector<8x8xf32>
    %379 = math.exp %378 : vector<8x8xf32>
    %cst_124 = arith.constant dense<0.000000e+00> : vector<8xf32>
    %380 = vector.multi_reduction <add>, %379, %cst_124 [1] : vector<8x8xf32> to vector<8xf32>
    %381 = vector.shape_cast %380 : vector<8xf32> to vector<8x1xf32>
    %382 = vector.broadcast %381 : vector<8x1xf32> to vector<8x8xf32>
    %383 = arith.divf %379, %382 : vector<8x8xf32>
    %384 = vector.extract_strided_slice %345 {offsets = [0, 8], sizes = [8, 8], strides = [1, 1]} : vector<8x32xf32> to vector<8x8xf32>
    %cst_125 = arith.constant dense<0.000000e+00> : vector<8x8xf32>
    %385 = tpu.matmul %383, %384, %cst_125 {dimension_numbers = #tpu.dot_dimension_numbers<[1], [0], [0], [1], [0, 0, 1, 1], [], []>} : vector<8x8xf32>, vector<8x8xf32>, vector<8x8xf32> -> vector<8x8xf32>
    %386 = vector.extract_strided_slice %343 {offsets = [0, 16], sizes = [8, 8], strides = [1, 1]} : vector<8x32xf32> to vector<8x8xf32>
    %387 = vector.extract_strided_slice %344 {offsets = [0, 16], sizes = [8, 8], strides = [1, 1]} : vector<8x32xf32> to vector<8x8xf32>
    %cst_126 = arith.constant dense<0.000000e+00> : vector<8x8xf32>
    %388 = tpu.matmul %386, %387, %cst_126 {dimension_numbers = #tpu.dot_dimension_numbers<[1], [1], [0], [0], [0, 0, 1, 0], [], []>} : vector<8x8xf32>, vector<8x8xf32>, vector<8x8xf32> -> vector<8x8xf32>
    %cst_127 = arith.constant 0.353553385 : f32
    %389 = vector.broadcast %cst_127 : f32 to vector<8x8xf32>
    %390 = arith.mulf %388, %389 : vector<8x8xf32>
    %391 = vector.broadcast %342 : vector<1x8xf32> to vector<8x8xf32>
    %392 = arith.addf %390, %391 : vector<8x8xf32>
    %cst_128 = arith.constant dense<0xFF800000> : vector<8xf32>
    %393 = vector.multi_reduction <maximumf>, %392, %cst_128 [1] : vector<8x8xf32> to vector<8xf32>
    %cst_129 = arith.constant 0xFF800000 : f32
    %394 = vector.broadcast %cst_129 : f32 to vector<8xf32>
    %395 = arith.maximumf %394, %393 : vector<8xf32>
    %396 = vector.shape_cast %395 : vector<8xf32> to vector<8x1xf32>
    %397 = vector.broadcast %396 : vector<8x1xf32> to vector<8x8xf32>
    %398 = arith.subf %392, %397 : vector<8x8xf32>
    %399 = math.exp %398 : vector<8x8xf32>
    %cst_130 = arith.constant dense<0.000000e+00> : vector<8xf32>
    %400 = vector.multi_reduction <add>, %399, %cst_130 [1] : vector<8x8xf32> to vector<8xf32>
    %401 = vector.shape_cast %400 : vector<8xf32> to vector<8x1xf32>
    %402 = vector.broadcast %401 : vector<8x1xf32> to vector<8x8xf32>
    %403 = arith.divf %399, %402 : vector<8x8xf32>
    %404 = vector.extract_strided_slice %345 {offsets = [0, 16], sizes = [8, 8], strides = [1, 1]} : vector<8x32xf32> to vector<8x8xf32>
    %cst_131 = arith.constant dense<0.000000e+00> : vector<8x8xf32>
    %405 = tpu.matmul %403, %404, %cst_131 {dimension_numbers = #tpu.dot_dimension_numbers<[1], [0], [0], [1], [0, 0, 1, 1], [], []>} : vector<8x8xf32>, vector<8x8xf32>, vector<8x8xf32> -> vector<8x8xf32>
    %406 = vector.extract_strided_slice %343 {offsets = [0, 24], sizes = [8, 8], strides = [1, 1]} : vector<8x32xf32> to vector<8x8xf32>
    %407 = vector.extract_strided_slice %344 {offsets = [0, 24], sizes = [8, 8], strides = [1, 1]} : vector<8x32xf32> to vector<8x8xf32>
    %cst_132 = arith.constant dense<0.000000e+00> : vector<8x8xf32>
    %408 = tpu.matmul %406, %407, %cst_132 {dimension_numbers = #tpu.dot_dimension_numbers<[1], [1], [0], [0], [0, 0, 1, 0], [], []>} : vector<8x8xf32>, vector<8x8xf32>, vector<8x8xf32> -> vector<8x8xf32>
    %cst_133 = arith.constant 0.353553385 : f32
    %409 = vector.broadcast %cst_133 : f32 to vector<8x8xf32>
    %410 = arith.mulf %408, %409 : vector<8x8xf32>
    %411 = vector.broadcast %342 : vector<1x8xf32> to vector<8x8xf32>
    %412 = arith.addf %410, %411 : vector<8x8xf32>
    %cst_134 = arith.constant dense<0xFF800000> : vector<8xf32>
    %413 = vector.multi_reduction <maximumf>, %412, %cst_134 [1] : vector<8x8xf32> to vector<8xf32>
    %cst_135 = arith.constant 0xFF800000 : f32
    %414 = vector.broadcast %cst_135 : f32 to vector<8xf32>
    %415 = arith.maximumf %414, %413 : vector<8xf32>
    %416 = vector.shape_cast %415 : vector<8xf32> to vector<8x1xf32>
    %417 = vector.broadcast %416 : vector<8x1xf32> to vector<8x8xf32>
    %418 = arith.subf %412, %417 : vector<8x8xf32>
    %419 = math.exp %418 : vector<8x8xf32>
    %cst_136 = arith.constant dense<0.000000e+00> : vector<8xf32>
    %420 = vector.multi_reduction <add>, %419, %cst_136 [1] : vector<8x8xf32> to vector<8xf32>
    %421 = vector.shape_cast %420 : vector<8xf32> to vector<8x1xf32>
    %422 = vector.broadcast %421 : vector<8x1xf32> to vector<8x8xf32>
    %423 = arith.divf %419, %422 : vector<8x8xf32>
    %424 = vector.extract_strided_slice %345 {offsets = [0, 24], sizes = [8, 8], strides = [1, 1]} : vector<8x32xf32> to vector<8x8xf32>
    %cst_137 = arith.constant dense<0.000000e+00> : vector<8x8xf32>
    %425 = tpu.matmul %423, %424, %cst_137 {dimension_numbers = #tpu.dot_dimension_numbers<[1], [0], [0], [1], [0, 0, 1, 1], [], []>} : vector<8x8xf32>, vector<8x8xf32>, vector<8x8xf32> -> vector<8x8xf32>
    %426 = tpu.concatenate %365, %385, %405, %425 in 1 : vector<8x8xf32>, vector<8x8xf32>, vector<8x8xf32>, vector<8x8xf32> -> vector<8x32xf32>
    %cst_138 = arith.constant dense<0.000000e+00> : vector<32xf32>
    %427 = vector.multi_reduction <add>, %426, %cst_138 [0] : vector<8x32xf32> to vector<32xf32>
    %428 = vector.shape_cast %427 : vector<32xf32> to vector<1x32xf32>
    %429 = vector.extract_strided_slice %3 {offsets = [1, 0], sizes = [1, 8], strides = [1, 1]} : vector<2x8xf32> to vector<1x8xf32>
    %cst_139 = arith.constant 1.000000e+00 : f32
    %430 = vector.broadcast %cst_139 : f32 to vector<1x8xf32>
    %431 = arith.subf %430, %429 : vector<1x8xf32>
    %cst_140 = arith.constant -1.000000e+04 : f32
    %432 = vector.broadcast %cst_140 : f32 to vector<1x8xf32>
    %433 = arith.mulf %431, %432 : vector<1x8xf32>
    %434 = vector.extract_strided_slice %337 {offsets = [8, 0], sizes = [8, 32], strides = [1, 1]} : vector<16x96xf32> to vector<8x32xf32>
    %435 = vector.extract_strided_slice %337 {offsets = [8, 32], sizes = [8, 32], strides = [1, 1]} : vector<16x96xf32> to vector<8x32xf32>
    %436 = vector.extract_strided_slice %337 {offsets = [8, 64], sizes = [8, 32], strides = [1, 1]} : vector<16x96xf32> to vector<8x32xf32>
    %437 = vector.extract_strided_slice %434 {offsets = [0, 0], sizes = [8, 8], strides = [1, 1]} : vector<8x32xf32> to vector<8x8xf32>
    %438 = vector.extract_strided_slice %435 {offsets = [0, 0], sizes = [8, 8], strides = [1, 1]} : vector<8x32xf32> to vector<8x8xf32>
    %cst_141 = arith.constant dense<0.000000e+00> : vector<8x8xf32>
    %439 = tpu.matmul %437, %438, %cst_141 {dimension_numbers = #tpu.dot_dimension_numbers<[1], [1], [0], [0], [0, 0, 1, 0], [], []>} : vector<8x8xf32>, vector<8x8xf32>, vector<8x8xf32> -> vector<8x8xf32>
    %cst_142 = arith.constant 0.353553385 : f32
    %440 = vector.broadcast %cst_142 : f32 to vector<8x8xf32>
    %441 = arith.mulf %439, %440 : vector<8x8xf32>
    %442 = vector.broadcast %433 : vector<1x8xf32> to vector<8x8xf32>
    %443 = arith.addf %441, %442 : vector<8x8xf32>
    %cst_143 = arith.constant dense<0xFF800000> : vector<8xf32>
    %444 = vector.multi_reduction <maximumf>, %443, %cst_143 [1] : vector<8x8xf32> to vector<8xf32>
    %cst_144 = arith.constant 0xFF800000 : f32
    %445 = vector.broadcast %cst_144 : f32 to vector<8xf32>
    %446 = arith.maximumf %445, %444 : vector<8xf32>
    %447 = vector.shape_cast %446 : vector<8xf32> to vector<8x1xf32>
    %448 = vector.broadcast %447 : vector<8x1xf32> to vector<8x8xf32>
    %449 = arith.subf %443, %448 : vector<8x8xf32>
    %450 = math.exp %449 : vector<8x8xf32>
    %cst_145 = arith.constant dense<0.000000e+00> : vector<8xf32>
    %451 = vector.multi_reduction <add>, %450, %cst_145 [1] : vector<8x8xf32> to vector<8xf32>
    %452 = vector.shape_cast %451 : vector<8xf32> to vector<8x1xf32>
    %453 = vector.broadcast %452 : vector<8x1xf32> to vector<8x8xf32>
    %454 = arith.divf %450, %453 : vector<8x8xf32>
    %455 = vector.extract_strided_slice %436 {offsets = [0, 0], sizes = [8, 8], strides = [1, 1]} : vector<8x32xf32> to vector<8x8xf32>
    %cst_146 = arith.constant dense<0.000000e+00> : vector<8x8xf32>
    %456 = tpu.matmul %454, %455, %cst_146 {dimension_numbers = #tpu.dot_dimension_numbers<[1], [0], [0], [1], [0, 0, 1, 1], [], []>} : vector<8x8xf32>, vector<8x8xf32>, vector<8x8xf32> -> vector<8x8xf32>
    %457 = vector.extract_strided_slice %434 {offsets = [0, 8], sizes = [8, 8], strides = [1, 1]} : vector<8x32xf32> to vector<8x8xf32>
    %458 = vector.extract_strided_slice %435 {offsets = [0, 8], sizes = [8, 8], strides = [1, 1]} : vector<8x32xf32> to vector<8x8xf32>
    %cst_147 = arith.constant dense<0.000000e+00> : vector<8x8xf32>
    %459 = tpu.matmul %457, %458, %cst_147 {dimension_numbers = #tpu.dot_dimension_numbers<[1], [1], [0], [0], [0, 0, 1, 0], [], []>} : vector<8x8xf32>, vector<8x8xf32>, vector<8x8xf32> -> vector<8x8xf32>
    %cst_148 = arith.constant 0.353553385 : f32
    %460 = vector.broadcast %cst_148 : f32 to vector<8x8xf32>
    %461 = arith.mulf %459, %460 : vector<8x8xf32>
    %462 = vector.broadcast %433 : vector<1x8xf32> to vector<8x8xf32>
    %463 = arith.addf %461, %462 : vector<8x8xf32>
    %cst_149 = arith.constant dense<0xFF800000> : vector<8xf32>
    %464 = vector.multi_reduction <maximumf>, %463, %cst_149 [1] : vector<8x8xf32> to vector<8xf32>
    %cst_150 = arith.constant 0xFF800000 : f32
    %465 = vector.broadcast %cst_150 : f32 to vector<8xf32>
    %466 = arith.maximumf %465, %464 : vector<8xf32>
    %467 = vector.shape_cast %466 : vector<8xf32> to vector<8x1xf32>
    %468 = vector.broadcast %467 : vector<8x1xf32> to vector<8x8xf32>
    %469 = arith.subf %463, %468 : vector<8x8xf32>
    %470 = math.exp %469 : vector<8x8xf32>
    %cst_151 = arith.constant dense<0.000000e+00> : vector<8xf32>
    %471 = vector.multi_reduction <add>, %470, %cst_151 [1] : vector<8x8xf32> to vector<8xf32>
    %472 = vector.shape_cast %471 : vector<8xf32> to vector<8x1xf32>
    %473 = vector.broadcast %472 : vector<8x1xf32> to vector<8x8xf32>
    %474 = arith.divf %470, %473 : vector<8x8xf32>
    %475 = vector.extract_strided_slice %436 {offsets = [0, 8], sizes = [8, 8], strides = [1, 1]} : vector<8x32xf32> to vector<8x8xf32>
    %cst_152 = arith.constant dense<0.000000e+00> : vector<8x8xf32>
    %476 = tpu.matmul %474, %475, %cst_152 {dimension_numbers = #tpu.dot_dimension_numbers<[1], [0], [0], [1], [0, 0, 1, 1], [], []>} : vector<8x8xf32>, vector<8x8xf32>, vector<8x8xf32> -> vector<8x8xf32>
    %477 = vector.extract_strided_slice %434 {offsets = [0, 16], sizes = [8, 8], strides = [1, 1]} : vector<8x32xf32> to vector<8x8xf32>
    %478 = vector.extract_strided_slice %435 {offsets = [0, 16], sizes = [8, 8], strides = [1, 1]} : vector<8x32xf32> to vector<8x8xf32>
    %cst_153 = arith.constant dense<0.000000e+00> : vector<8x8xf32>
    %479 = tpu.matmul %477, %478, %cst_153 {dimension_numbers = #tpu.dot_dimension_numbers<[1], [1], [0], [0], [0, 0, 1, 0], [], []>} : vector<8x8xf32>, vector<8x8xf32>, vector<8x8xf32> -> vector<8x8xf32>
    %cst_154 = arith.constant 0.353553385 : f32
    %480 = vector.broadcast %cst_154 : f32 to vector<8x8xf32>
    %481 = arith.mulf %479, %480 : vector<8x8xf32>
    %482 = vector.broadcast %433 : vector<1x8xf32> to vector<8x8xf32>
    %483 = arith.addf %481, %482 : vector<8x8xf32>
    %cst_155 = arith.constant dense<0xFF800000> : vector<8xf32>
    %484 = vector.multi_reduction <maximumf>, %483, %cst_155 [1] : vector<8x8xf32> to vector<8xf32>
    %cst_156 = arith.constant 0xFF800000 : f32
    %485 = vector.broadcast %cst_156 : f32 to vector<8xf32>
    %486 = arith.maximumf %485, %484 : vector<8xf32>
    %487 = vector.shape_cast %486 : vector<8xf32> to vector<8x1xf32>
    %488 = vector.broadcast %487 : vector<8x1xf32> to vector<8x8xf32>
    %489 = arith.subf %483, %488 : vector<8x8xf32>
    %490 = math.exp %489 : vector<8x8xf32>
    %cst_157 = arith.constant dense<0.000000e+00> : vector<8xf32>
    %491 = vector.multi_reduction <add>, %490, %cst_157 [1] : vector<8x8xf32> to vector<8xf32>
    %492 = vector.shape_cast %491 : vector<8xf32> to vector<8x1xf32>
    %493 = vector.broadcast %492 : vector<8x1xf32> to vector<8x8xf32>
    %494 = arith.divf %490, %493 : vector<8x8xf32>
    %495 = vector.extract_strided_slice %436 {offsets = [0, 16], sizes = [8, 8], strides = [1, 1]} : vector<8x32xf32> to vector<8x8xf32>
    %cst_158 = arith.constant dense<0.000000e+00> : vector<8x8xf32>
    %496 = tpu.matmul %494, %495, %cst_158 {dimension_numbers = #tpu.dot_dimension_numbers<[1], [0], [0], [1], [0, 0, 1, 1], [], []>} : vector<8x8xf32>, vector<8x8xf32>, vector<8x8xf32> -> vector<8x8xf32>
    %497 = vector.extract_strided_slice %434 {offsets = [0, 24], sizes = [8, 8], strides = [1, 1]} : vector<8x32xf32> to vector<8x8xf32>
    %498 = vector.extract_strided_slice %435 {offsets = [0, 24], sizes = [8, 8], strides = [1, 1]} : vector<8x32xf32> to vector<8x8xf32>
    %cst_159 = arith.constant dense<0.000000e+00> : vector<8x8xf32>
    %499 = tpu.matmul %497, %498, %cst_159 {dimension_numbers = #tpu.dot_dimension_numbers<[1], [1], [0], [0], [0, 0, 1, 0], [], []>} : vector<8x8xf32>, vector<8x8xf32>, vector<8x8xf32> -> vector<8x8xf32>
    %cst_160 = arith.constant 0.353553385 : f32
    %500 = vector.broadcast %cst_160 : f32 to vector<8x8xf32>
    %501 = arith.mulf %499, %500 : vector<8x8xf32>
    %502 = vector.broadcast %433 : vector<1x8xf32> to vector<8x8xf32>
    %503 = arith.addf %501, %502 : vector<8x8xf32>
    %cst_161 = arith.constant dense<0xFF800000> : vector<8xf32>
    %504 = vector.multi_reduction <maximumf>, %503, %cst_161 [1] : vector<8x8xf32> to vector<8xf32>
    %cst_162 = arith.constant 0xFF800000 : f32
    %505 = vector.broadcast %cst_162 : f32 to vector<8xf32>
    %506 = arith.maximumf %505, %504 : vector<8xf32>
    %507 = vector.shape_cast %506 : vector<8xf32> to vector<8x1xf32>
    %508 = vector.broadcast %507 : vector<8x1xf32> to vector<8x8xf32>
    %509 = arith.subf %503, %508 : vector<8x8xf32>
    %510 = math.exp %509 : vector<8x8xf32>
    %cst_163 = arith.constant dense<0.000000e+00> : vector<8xf32>
    %511 = vector.multi_reduction <add>, %510, %cst_163 [1] : vector<8x8xf32> to vector<8xf32>
    %512 = vector.shape_cast %511 : vector<8xf32> to vector<8x1xf32>
    %513 = vector.broadcast %512 : vector<8x1xf32> to vector<8x8xf32>
    %514 = arith.divf %510, %513 : vector<8x8xf32>
    %515 = vector.extract_strided_slice %436 {offsets = [0, 24], sizes = [8, 8], strides = [1, 1]} : vector<8x32xf32> to vector<8x8xf32>
    %cst_164 = arith.constant dense<0.000000e+00> : vector<8x8xf32>
    %516 = tpu.matmul %514, %515, %cst_164 {dimension_numbers = #tpu.dot_dimension_numbers<[1], [0], [0], [1], [0, 0, 1, 1], [], []>} : vector<8x8xf32>, vector<8x8xf32>, vector<8x8xf32> -> vector<8x8xf32>
    %517 = tpu.concatenate %456, %476, %496, %516 in 1 : vector<8x8xf32>, vector<8x8xf32>, vector<8x8xf32>, vector<8x8xf32> -> vector<8x32xf32>
    %cst_165 = arith.constant dense<0.000000e+00> : vector<32xf32>
    %518 = vector.multi_reduction <add>, %517, %cst_165 [0] : vector<8x32xf32> to vector<32xf32>
    %519 = vector.shape_cast %518 : vector<32xf32> to vector<1x32xf32>
    %520 = tpu.concatenate %428, %519 in 0 : vector<1x32xf32>, vector<1x32xf32> -> vector<2x32xf32>
    %c0_166 = arith.constant 0 : index
    %c0_167 = arith.constant 0 : index
    %521 = vector.load %arg14[%c0_166, %c0_167] : memref<32x1xf32, #tpu.memory_space<vmem>>, vector<32x1xf32>
    %cst_168 = arith.constant dense<0.000000e+00> : vector<2x1xf32>
    %522 = tpu.matmul %520, %521, %cst_168 {dimension_numbers = #tpu.dot_dimension_numbers<[1], [0], [0], [1], [0, 0, 1, 1], [], []>} : vector<2x32xf32>, vector<32x1xf32>, vector<2x1xf32> -> vector<2x1xf32>
    %c0_169 = arith.constant 0 : index
    %c0_170 = arith.constant 0 : index
    %523 = vector.load %arg15[%c0_169, %c0_170] : memref<1x1xf32, #tpu.memory_space<vmem>>, vector<1x1xf32>
    %524 = vector.broadcast %523 : vector<1x1xf32> to vector<2x1xf32>
    %525 = arith.addf %522, %524 : vector<2x1xf32>
    %526 = arith.negf %525 : vector<2x1xf32>
    %527 = math.exp %526 : vector<2x1xf32>
    %cst_171 = arith.constant 1.000000e+00 : f32
    %528 = vector.broadcast %cst_171 : f32 to vector<2x1xf32>
    %529 = arith.addf %528, %527 : vector<2x1xf32>
    %530 = arith.divf %528, %529 : vector<2x1xf32>
    %c0_172 = arith.constant 0 : index
    %c0_173 = arith.constant 0 : index
    %531 = vector.load %arg16[%c0_172, %c0_173] : memref<2x1xf32, #tpu.memory_space<vmem>>, vector<2x1xf32>
    tpu.vector_store %arg16[%c0_172, %c0_173], %530 {strides = array<i32>} : memref<2x1xf32, #tpu.memory_space<vmem>>, vector<2x1xf32>,
    return
  }
}

</mosaic_0001>

<llo_original>
// kernel: sent_sel_two_gcn_cat_forward.1
$region0: #{sent_sel_two_gcn_cat_forward.1}
  #allocation0 [shape = 'u32[]', space=smem, size = 0x4, offset = 0x4, fixed_abs, tag = 'smem constant byte address 0x4 - core index']
  #allocation1 [shape = 'u32[144,128]{1,0:T(1,128)}', space=vmem, size = 0x12000, scoped, tag = 'internal scratch']
  #allocation2 [shape = 'f32[2,8,32]{2,1,0:T(8,128)}', space=vmem, size = 0x2000, scoped, tag = 'scratch operand']
  #allocation3 [shape = 'f32[1,1]{1,0:T(1,128)S(1)}', space=vmem, size = 0x200, scoped, tag = 'scoped memory for sent_sel_two_gcn_cat_forward.1']
  %s0 = inlined_call_operand.vmem [shape: f32[2,8,32], index: 0, kind: input, shape index: {}]
  %s1 = inlined_call_operand.vmem [shape: f32[2,8,8], index: 1, kind: input, shape index: {}]
  %s2 = inlined_call_operand.vmem [shape: f32[2,8,8], index: 2, kind: input, shape index: {}]
  %s3 = inlined_call_operand.vmem [shape: f32[2,8], index: 3, kind: input, shape index: {}]
  %s4 = inlined_call_operand.vmem [shape: f32[32,64], index: 4, kind: input, shape index: {}]
  %s5 = inlined_call_operand.vmem [shape: f32[1,64], index: 5, kind: input, shape index: {}]
  %s6 = inlined_call_operand.vmem [shape: f32[32,32], index: 6, kind: input, shape index: {}]
  %s7 = inlined_call_operand.vmem [shape: f32[32,32], index: 7, kind: input, shape index: {}]
  %s8 = inlined_call_operand.vmem [shape: f32[1,64], index: 8, kind: input, shape index: {}]
  %s9 = inlined_call_operand.vmem [shape: f32[96,128], index: 9, kind: input, shape index: {}]
  %s10 = inlined_call_operand.vmem [shape: f32[32,128], index: 10, kind: input, shape index: {}]
  %s11 = inlined_call_operand.vmem [shape: f32[1,128], index: 11, kind: input, shape index: {}]
  %s12 = inlined_call_operand.vmem [shape: f32[32,96], index: 12, kind: input, shape index: {}]
  %s13 = inlined_call_operand.vmem [shape: f32[1,96], index: 13, kind: input, shape index: {}]
  %s14 = inlined_call_operand.vmem [shape: f32[32,1], index: 14, kind: input, shape index: {}]
  %s15 = inlined_call_operand.<no memory space> [shape: f32[1,1], index: 15, kind: input, shape index: {}]
  %s16 = inlined_call_operand.vmem [shape: f32[2,1], index: 16, kind: output, shape index: {}]
  %s17 = sld [smem:[#allocation0]]
  $region74: #{sent_sel_two_gcn_cat_forward.1} parent=0
    _
  %s19 = ssub.s32 1, %s17
  %s20 = scalar_select 0, %s19, %s17
  %v21 = vstv %s15
  %22 = vst [vmem:[#allocation3] sm:$0x1] %v21
  // Predicated region
  $region2: #{sent_sel_two_gcn_cat_forward.1} parent=0 // pred_check
    _
  $region3: #{sent_sel_two_gcn_cat_forward.1} parent=0 // pred_check_branch
    %24 = sbr.rel (0) target = $region5
  $region4: #{sent_sel_two_gcn_cat_forward.1} parent=0 // pred_region
    _
  $region5: #{sent_sel_two_gcn_cat_forward.1} parent=0 // pred_fallthru
    _
  // Predicated region
  $region6: #{sent_sel_two_gcn_cat_forward.1} parent=0 // pred_check
    _
  $region7: #{sent_sel_two_gcn_cat_forward.1} parent=0 // pred_check_branch
    %26 = sbr.rel (0) target = $region9
  $region8: #{sent_sel_two_gcn_cat_forward.1} parent=0 // pred_region
    _
  $region9: #{sent_sel_two_gcn_cat_forward.1} parent=0 // pred_fallthru
    _
  // Predicated region
  $region10: #{sent_sel_two_gcn_cat_forward.1} parent=0 // pred_check
    _
  $region11: #{sent_sel_two_gcn_cat_forward.1} parent=0 // pred_check_branch
    %28 = sbr.rel (0) target = $region13
  $region12: #{sent_sel_two_gcn_cat_forward.1} parent=0 // pred_region
    _
  $region13: #{sent_sel_two_gcn_cat_forward.1} parent=0 // pred_fallthru
    _
  // Predicated region
  $region14: #{sent_sel_two_gcn_cat_forward.1} parent=0 // pred_check
    _
  $region15: #{sent_sel_two_gcn_cat_forward.1} parent=0 // pred_check_branch
    %30 = sbr.rel (0) target = $region17
  $region16: #{sent_sel_two_gcn_cat_forward.1} parent=0 // pred_region
    _
  $region17: #{sent_sel_two_gcn_cat_forward.1} parent=0 // pred_fallthru
    _
  // Predicated region
  $region18: #{sent_sel_two_gcn_cat_forward.1} parent=0 // pred_check
    _
  $region19: #{sent_sel_two_gcn_cat_forward.1} parent=0 // pred_check_branch
    %32 = sbr.rel (0) target = $region21
  $region20: #{sent_sel_two_gcn_cat_forward.1} parent=0 // pred_region
    _
  $region21: #{sent_sel_two_gcn_cat_forward.1} parent=0 // pred_fallthru
    _
  // Predicated region
  $region22: #{sent_sel_two_gcn_cat_forward.1} parent=0 // pred_check
    _
  $region23: #{sent_sel_two_gcn_cat_forward.1} parent=0 // pred_check_branch
    %34 = sbr.rel (0) target = $region25
  $region24: #{sent_sel_two_gcn_cat_forward.1} parent=0 // pred_region
    _
  $region25: #{sent_sel_two_gcn_cat_forward.1} parent=0 // pred_fallthru
    _
  // Predicated region
  $region26: #{sent_sel_two_gcn_cat_forward.1} parent=0 // pred_check
    _
  $region27: #{sent_sel_two_gcn_cat_forward.1} parent=0 // pred_check_branch
    %36 = sbr.rel (0) target = $region29
  $region28: #{sent_sel_two_gcn_cat_forward.1} parent=0 // pred_region
    _
  $region29: #{sent_sel_two_gcn_cat_forward.1} parent=0 // pred_fallthru
    _
  // Predicated region
  $region30: #{sent_sel_two_gcn_cat_forward.1} parent=0 // pred_check
    _
  $region31: #{sent_sel_two_gcn_cat_forward.1} parent=0 // pred_check_branch
    %38 = sbr.rel (0) target = $region33
  $region32: #{sent_sel_two_gcn_cat_forward.1} parent=0 // pred_region
    _
  $region33: #{sent_sel_two_gcn_cat_forward.1} parent=0 // pred_fallthru
    _
  // Predicated region
  $region34: #{sent_sel_two_gcn_cat_forward.1} parent=0 // pred_check
    _
  $region35: #{sent_sel_two_gcn_cat_forward.1} parent=0 // pred_check_branch
    %40 = sbr.rel (0) target = $region37
  $region36: #{sent_sel_two_gcn_cat_forward.1} parent=0 // pred_region
    _
  $region37: #{sent_sel_two_gcn_cat_forward.1} parent=0 // pred_fallthru
    _
  // Predicated region
  $region38: #{sent_sel_two_gcn_cat_forward.1} parent=0 // pred_check
    _
  $region39: #{sent_sel_two_gcn_cat_forward.1} parent=0 // pred_check_branch
    %42 = sbr.rel (0) target = $region41
  $region40: #{sent_sel_two_gcn_cat_forward.1} parent=0 // pred_region
    _
  $region41: #{sent_sel_two_gcn_cat_forward.1} parent=0 // pred_fallthru
    _
  // Predicated region
  $region42: #{sent_sel_two_gcn_cat_forward.1} parent=0 // pred_check
    _
  $region43: #{sent_sel_two_gcn_cat_forward.1} parent=0 // pred_check_branch
    %44 = sbr.rel (0) target = $region45
  $region44: #{sent_sel_two_gcn_cat_forward.1} parent=0 // pred_region
    _
  $region45: #{sent_sel_two_gcn_cat_forward.1} parent=0 // pred_fallthru
    _
  // Predicated region
  $region46: #{sent_sel_two_gcn_cat_forward.1} parent=0 // pred_check
    _
  $region47: #{sent_sel_two_gcn_cat_forward.1} parent=0 // pred_check_branch
    %46 = sbr.rel (0) target = $region49
  $region48: #{sent_sel_two_gcn_cat_forward.1} parent=0 // pred_region
    _
  $region49: #{sent_sel_two_gcn_cat_forward.1} parent=0 // pred_fallthru
    _
  // Predicated region
  $region50: #{sent_sel_two_gcn_cat_forward.1} parent=0 // pred_check
    _
  $region51: #{sent_sel_two_gcn_cat_forward.1} parent=0 // pred_check_branch
    %48 = sbr.rel (0) target = $region53
  $region52: #{sent_sel_two_gcn_cat_forward.1} parent=0 // pred_region
    _
  $region53: #{sent_sel_two_gcn_cat_forward.1} parent=0 // pred_fallthru
    _
  // Predicated region
  $region54: #{sent_sel_two_gcn_cat_forward.1} parent=0 // pred_check
    _
  $region55: #{sent_sel_two_gcn_cat_forward.1} parent=0 // pred_check_branch
    %50 = sbr.rel (0) target = $region57
  $region56: #{sent_sel_two_gcn_cat_forward.1} parent=0 // pred_region
    _
  $region57: #{sent_sel_two_gcn_cat_forward.1} parent=0 // pred_fallthru
    _
  // Predicated region
  $region58: #{sent_sel_two_gcn_cat_forward.1} parent=0 // pred_check
    _
  $region59: #{sent_sel_two_gcn_cat_forward.1} parent=0 // pred_check_branch
    %52 = sbr.rel (0) target = $region61
  $region60: #{sent_sel_two_gcn_cat_forward.1} parent=0 // pred_region
    _
  $region61: #{sent_sel_two_gcn_cat_forward.1} parent=0 // pred_fallthru
    _
  // Predicated region
  $region62: #{sent_sel_two_gcn_cat_forward.1} parent=0 // pred_check
    _
  $region63: #{sent_sel_two_gcn_cat_forward.1} parent=0 // pred_check_branch
    %54 = sbr.rel (0) target = $region65
  $region64: #{sent_sel_two_gcn_cat_forward.1} parent=0 // pred_region
    _
  $region65: #{sent_sel_two_gcn_cat_forward.1} parent=0 // pred_fallthru
    _
  %v55 = vld [vmem:[%s0] sm:$0xff]
  %v56 = vld [vmem:[%s0 + $0x8] sm:$0xff]
  %v57 = vld [vmem:[%s1] sm:$0xff]
  %v58 = vld [vmem:[%s1 + $0x8] sm:$0xff]
  %v59 = vld [vmem:[%s2] sm:$0xff]
  %v60 = vld [vmem:[%s2 + $0x8] sm:$0xff]
  %v61 = vld [vmem:[%s3] sm:$0x3]
  %v62 = vld [vmem:[%s4] sm:$0xff]
  %v63 = vld [vmem:[%s4 + $0x8] sm:$0xff]
  %v64 = vld [vmem:[%s4 + $0x10] sm:$0xff]
  %v65 = vld [vmem:[%s4 + $0x18] sm:$0xff]
  %vm66 = vcmask 261120
  %v68 = vsel %vm66, %v55, 0
  %v71 = vsel %vm66, %v56, 0
  %73 = vmatprep.subr.mxu0 0.0
  %74 = vmatpush1.msra.mxu0 %v62
  %75 = vmatprep.subr.mxu0 0.0
  %76 = vmatpush1.msra.mxu0 %v63
  %77 = vmatprep.subr.mxu0 0.0
  %78 = vmatpush1.msra.mxu0 %v64
  %79 = vmatprep.subr.mxu0 0.0
  %80 = vmatpush1.msra.mxu0 %v65
  %81 = vmatprep.subr.mxu0 0.0
  %82 = vmatpush1.msra.mxu0 0.0
  %83 = vmatprep.subr.mxu0 0.0
  %84 = vmatpush1.msra.mxu0 0.0
  %85 = vmatprep.subr.mxu0 0.0
  %86 = vmatpush1.msra.mxu0 0.0
  %87 = vmatprep.subr.mxu0 0.0
  %88 = vmatpush1.msra.mxu0 0.0
  %89 = vmatprep.subr.mxu0 0.0
  %90 = vmatpush1.msra.mxu0 0.0
  %91 = vmatprep.subr.mxu0 0.0
  %92 = vmatpush1.msra.mxu0 0.0
  %93 = vmatprep.subr.mxu0 0.0
  %94 = vmatpush1.msra.mxu0 0.0
  %95 = vmatprep.subr.mxu0 0.0
  %96 = vmatpush1.msra.mxu0 0.0
  %97 = vmatprep.subr.mxu0 0.0
  %98 = vmatpush1.msra.mxu0 0.0
  %99 = vmatprep.subr.mxu0 0.0
  %100 = vmatpush1.msra.mxu0 0.0
  %101 = vmatprep.subr.mxu0 0.0
  %102 = vmatpush1.msra.mxu0 0.0
  %103 = vmatprep.subr.mxu0 0.0
  %104 = vmatpush1.msra.mxu0 0.0
  %105 = vmatprep.subr.mxu0 0.0
  %106 = vmatpush1.msra.mxu0 0.0
  %107 = vmatprep.subr.mxu0 0.0
  %108 = vmatpush1.msra.mxu0 0.0
  %109 = vmatprep.subr.mxu0 0.0
  %110 = vmatpush1.msra.mxu0 0.0
  %111 = vmatprep.subr.mxu0 0.0
  %112 = vmatpush1.msra.mxu0 0.0
  %113 = vmatprep.subr.mxu0 0.0
  %114 = vmatpush1.msra.mxu0 0.0
  %115 = vmatprep.subr.mxu0 0.0
  %116 = vmatpush1.msra.mxu0 0.0
  %117 = vmatprep.subr.mxu0 0.0
  %118 = vmatpush1.msra.mxu0 0.0
  %119 = vmatprep.subr.mxu0 0.0
  %120 = vmatpush1.msra.mxu0 0.0
  %121 = vmatprep.subr.mxu0 0.0
  %122 = vmatpush1.msra.mxu0 0.0
  %123 = vmatprep.subr.mxu0 0.0
  %124 = vmatpush1.msra.mxu0 0.0
  %125 = vmatprep.subr.mxu0 0.0
  %126 = vmatpush1.msra.mxu0 0.0
  %127 = vmatprep.subr.mxu0 0.0
  %128 = vmatpush1.msra.mxu0 0.0
  %129 = vmatprep.subr.mxu0 0.0
  %130 = vmatpush1.msra.mxu0 0.0
  %131 = vmatprep.subr.mxu0 0.0
  %132 = vmatpush1.msra.mxu0 0.0
  %133 = vmatprep.subr.mxu0 0.0
  %134 = vmatpush1.msra.mxu0 0.0
  %135 = vmatprep.subr.mxu0 0.0
  %136 = vmatpush1.msra.mxu0 0.0
  %137 = vmatprep.mubr.f32.mxu0 0.0
  %138 = vmatmul.mubr.f32.gmra.mrb[0].mxu0 %v68
  %v139 = vpop.f32.mrb[0].mxu0
  %v140 = vadd.f32 0.0, %v139
  %v141 = vpop.f32.mrb[0].mxu0
  %142 = vmatprep.mubr.f32.mxu0 0.0
  %143 = vmatmul.mubr.f32.gmra.mrb[0].mxu0 %v71
  %v144 = vpop.f32.mrb[0].mxu0
  %v145 = vadd.f32 0.0, %v144
  %v146 = vpop.f32.mrb[0].mxu0
  %147 = vdwg.mxu0
  %vm148 = vcmask 64512
  %v150 = vsel %vm148, %v57, 0
  %152 = vmatprep.subr.mxu0 0.0
  %153 = vmatpush1.msra.mxu0 %v140
  %154 = vmatprep.subr.mxu0 0.0
  %155 = vmatpush1.msra.mxu0 0.0
  %156 = vmatprep.subr.mxu0 0.0
  %157 = vmatpush1.msra.mxu0 0.0
  %158 = vmatprep.subr.mxu0 0.0
  %159 = vmatpush1.msra.mxu0 0.0
  %160 = vmatprep.subr.mxu0 0.0
  %161 = vmatpush1.msra.mxu0 0.0
  %162 = vmatprep.subr.mxu0 0.0
  %163 = vmatpush1.msra.mxu0 0.0
  %164 = vmatprep.subr.mxu0 0.0
  %165 = vmatpush1.msra.mxu0 0.0
  %166 = vmatprep.subr.mxu0 0.0
  %167 = vmatpush1.msra.mxu0 0.0
  %168 = vmatprep.subr.mxu0 0.0
  %169 = vmatpush1.msra.mxu0 0.0
  %170 = vmatprep.subr.mxu0 0.0
  %171 = vmatpush1.msra.mxu0 0.0
  %172 = vmatprep.subr.mxu0 0.0
  %173 = vmatpush1.msra.mxu0 0.0
  %174 = vmatprep.subr.mxu0 0.0
  %175 = vmatpush1.msra.mxu0 0.0
  %176 = vmatprep.subr.mxu0 0.0
  %177 = vmatpush1.msra.mxu0 0.0
  %178 = vmatprep.subr.mxu0 0.0
  %179 = vmatpush1.msra.mxu0 0.0
  %180 = vmatprep.subr.mxu0 0.0
  %181 = vmatpush1.msra.mxu0 0.0
  %182 = vmatprep.subr.mxu0 0.0
  %183 = vmatpush1.msra.mxu0 0.0
  %184 = vmatprep.subr.mxu0 0.0
  %185 = vmatpush1.msra.mxu0 0.0
  %186 = vmatprep.subr.mxu0 0.0
  %187 = vmatpush1.msra.mxu0 0.0
  %188 = vmatprep.subr.mxu0 0.0
  %189 = vmatpush1.msra.mxu0 0.0
  %190 = vmatprep.subr.mxu0 0.0
  %191 = vmatpush1.msra.mxu0 0.0
  %192 = vmatprep.subr.mxu0 0.0
  %193 = vmatpush1.msra.mxu0 0.0
  %194 = vmatprep.subr.mxu0 0.0
  %195 = vmatpush1.msra.mxu0 0.0
  %196 = vmatprep.subr.mxu0 0.0
  %197 = vmatpush1.msra.mxu0 0.0
  %198 = vmatprep.subr.mxu0 0.0
  %199 = vmatpush1.msra.mxu0 0.0
  %200 = vmatprep.subr.mxu0 0.0
  %201 = vmatpush1.msra.mxu0 0.0
  %202 = vmatprep.subr.mxu0 0.0
  %203 = vmatpush1.msra.mxu0 0.0
  %204 = vmatprep.subr.mxu0 0.0
  %205 = vmatpush1.msra.mxu0 0.0
  %206 = vmatprep.subr.mxu0 0.0
  %207 = vmatpush1.msra.mxu0 0.0
  %208 = vmatprep.subr.mxu0 0.0
  %209 = vmatpush1.msra.mxu0 0.0
  %210 = vmatprep.subr.mxu0 0.0
  %211 = vmatpush1.msra.mxu0 0.0
  %212 = vmatprep.subr.mxu0 0.0
  %213 = vmatpush1.msra.mxu0 0.0
  %214 = vmatprep.subr.mxu0 0.0
  %215 = vmatpush1.msra.mxu0 0.0
  %216 = vmatprep.mubr.f32.mxu0 0.0
  %217 = vmatmul.mubr.f32.gmra.mrb[0].mxu0 %v150
  %v218 = vpop.f32.mrb[0].mxu0
  %v219 = vadd.f32 0.0, %v218
  %v220 = vpop.f32.mrb[0].mxu0
  %221 = vdwg.mxu0
  %223 = vrot.lane.b32.xlu0 %v140, 96
  %v224 = vpop.permute.xlu0 %223
  %v227 = vsel %vm148, %v59, 0
  %229 = vmatprep.subr.mxu0 0.0
  %230 = vmatpush1.msra.mxu0 %v224
  %231 = vmatprep.subr.mxu0 0.0
  %232 = vmatpush1.msra.mxu0 0.0
  %233 = vmatprep.subr.mxu0 0.0
  %234 = vmatpush1.msra.mxu0 0.0
  %235 = vmatprep.subr.mxu0 0.0
  %236 = vmatpush1.msra.mxu0 0.0
  %237 = vmatprep.subr.mxu0 0.0
  %238 = vmatpush1.msra.mxu0 0.0
  %239 = vmatprep.subr.mxu0 0.0
  %240 = vmatpush1.msra.mxu0 0.0
  %241 = vmatprep.subr.mxu0 0.0
  %242 = vmatpush1.msra.mxu0 0.0
  %243 = vmatprep.subr.mxu0 0.0
  %244 = vmatpush1.msra.mxu0 0.0
  %245 = vmatprep.subr.mxu0 0.0
  %246 = vmatpush1.msra.mxu0 0.0
  %247 = vmatprep.subr.mxu0 0.0
  %248 = vmatpush1.msra.mxu0 0.0
  %249 = vmatprep.subr.mxu0 0.0
  %250 = vmatpush1.msra.mxu0 0.0
  %251 = vmatprep.subr.mxu0 0.0
  %252 = vmatpush1.msra.mxu0 0.0
  %253 = vmatprep.subr.mxu0 0.0
  %254 = vmatpush1.msra.mxu0 0.0
  %255 = vmatprep.subr.mxu0 0.0
  %256 = vmatpush1.msra.mxu0 0.0
  %257 = vmatprep.subr.mxu0 0.0
  %258 = vmatpush1.msra.mxu0 0.0
  %259 = vmatprep.subr.mxu0 0.0
  %260 = vmatpush1.msra.mxu0 0.0
  %261 = vmatprep.subr.mxu0 0.0
  %262 = vmatpush1.msra.mxu0 0.0
  %263 = vmatprep.subr.mxu0 0.0
  %264 = vmatpush1.msra.mxu0 0.0
  %265 = vmatprep.subr.mxu0 0.0
  %266 = vmatpush1.msra.mxu0 0.0
  %267 = vmatprep.subr.mxu0 0.0
  %268 = vmatpush1.msra.mxu0 0.0
  %269 = vmatprep.subr.mxu0 0.0
  %270 = vmatpush1.msra.mxu0 0.0
  %271 = vmatprep.subr.mxu0 0.0
  %272 = vmatpush1.msra.mxu0 0.0
  %273 = vmatprep.subr.mxu0 0.0
  %274 = vmatpush1.msra.mxu0 0.0
  %275 = vmatprep.subr.mxu0 0.0
  %276 = vmatpush1.msra.mxu0 0.0
  %277 = vmatprep.subr.mxu0 0.0
  %278 = vmatpush1.msra.mxu0 0.0
  %279 = vmatprep.subr.mxu0 0.0
  %280 = vmatpush1.msra.mxu0 0.0
  %281 = vmatprep.subr.mxu0 0.0
  %282 = vmatpush1.msra.mxu0 0.0
  %283 = vmatprep.subr.mxu0 0.0
  %284 = vmatpush1.msra.mxu0 0.0
  %285 = vmatprep.subr.mxu0 0.0
  %286 = vmatpush1.msra.mxu0 0.0
  %287 = vmatprep.subr.mxu0 0.0
  %288 = vmatpush1.msra.mxu0 0.0
  %289 = vmatprep.subr.mxu0 0.0
  %290 = vmatpush1.msra.mxu0 0.0
  %291 = vmatprep.subr.mxu0 0.0
  %292 = vmatpush1.msra.mxu0 0.0
  %293 = vmatprep.mubr.f32.mxu0 0.0
  %294 = vmatmul.mubr.f32.gmra.mrb[0].mxu0 %v227
  %v295 = vpop.f32.mrb[0].mxu0
  %v296 = vadd.f32 0.0, %v295
  %v297 = vpop.f32.mrb[0].mxu0
  %298 = vdwg.mxu0
  %300 = vrot.lane.b32.xlu0 %v296, 32
  %v301 = vpop.permute.xlu0 %300
  %v303 = vsel %vm66, %v219, %v301
  %v305 = vsel %vm148, %v58, 0
  %307 = vmatprep.subr.mxu0 0.0
  %308 = vmatpush1.msra.mxu0 %v145
  %309 = vmatprep.subr.mxu0 0.0
  %310 = vmatpush1.msra.mxu0 0.0
  %311 = vmatprep.subr.mxu0 0.0
  %312 = vmatpush1.msra.mxu0 0.0
  %313 = vmatprep.subr.mxu0 0.0
  %314 = vmatpush1.msra.mxu0 0.0
  %315 = vmatprep.subr.mxu0 0.0
  %316 = vmatpush1.msra.mxu0 0.0
  %317 = vmatprep.subr.mxu0 0.0
  %318 = vmatpush1.msra.mxu0 0.0
  %319 = vmatprep.subr.mxu0 0.0
  %320 = vmatpush1.msra.mxu0 0.0
  %321 = vmatprep.subr.mxu0 0.0
  %322 = vmatpush1.msra.mxu0 0.0
  %323 = vmatprep.subr.mxu0 0.0
  %324 = vmatpush1.msra.mxu0 0.0
  %325 = vmatprep.subr.mxu0 0.0
  %326 = vmatpush1.msra.mxu0 0.0
  %327 = vmatprep.subr.mxu0 0.0
  %328 = vmatpush1.msra.mxu0 0.0
  %329 = vmatprep.subr.mxu0 0.0
  %330 = vmatpush1.msra.mxu0 0.0
  %331 = vmatprep.subr.mxu0 0.0
  %332 = vmatpush1.msra.mxu0 0.0
  %333 = vmatprep.subr.mxu0 0.0
  %334 = vmatpush1.msra.mxu0 0.0
  %335 = vmatprep.subr.mxu0 0.0
  %336 = vmatpush1.msra.mxu0 0.0
  %337 = vmatprep.subr.mxu0 0.0
  %338 = vmatpush1.msra.mxu0 0.0
  %339 = vmatprep.subr.mxu0 0.0
  %340 = vmatpush1.msra.mxu0 0.0
  %341 = vmatprep.subr.mxu0 0.0
  %342 = vmatpush1.msra.mxu0 0.0
  %343 = vmatprep.subr.mxu0 0.0
  %344 = vmatpush1.msra.mxu0 0.0
  %345 = vmatprep.subr.mxu0 0.0
  %346 = vmatpush1.msra.mxu0 0.0
  %347 = vmatprep.subr.mxu0 0.0
  %348 = vmatpush1.msra.mxu0 0.0
  %349 = vmatprep.subr.mxu0 0.0
  %350 = vmatpush1.msra.mxu0 0.0
  %351 = vmatprep.subr.mxu0 0.0
  %352 = vmatpush1.msra.mxu0 0.0
  %353 = vmatprep.subr.mxu0 0.0
  %354 = vmatpush1.msra.mxu0 0.0
  %355 = vmatprep.subr.mxu0 0.0
  %356 = vmatpush1.msra.mxu0 0.0
  %357 = vmatprep.subr.mxu0 0.0
  %358 = vmatpush1.msra.mxu0 0.0
  %359 = vmatprep.subr.mxu0 0.0
  %360 = vmatpush1.msra.mxu0 0.0
  %361 = vmatprep.subr.mxu0 0.0
  %362 = vmatpush1.msra.mxu0 0.0
  %363 = vmatprep.subr.mxu0 0.0
  %364 = vmatpush1.msra.mxu0 0.0
  %365 = vmatprep.subr.mxu0 0.0
  %366 = vmatpush1.msra.mxu0 0.0
  %367 = vmatprep.subr.mxu0 0.0
  %368 = vmatpush1.msra.mxu0 0.0
  %369 = vmatprep.subr.mxu0 0.0
  %370 = vmatpush1.msra.mxu0 0.0
  %371 = vmatprep.mubr.f32.mxu0 0.0
  %372 = vmatmul.mubr.f32.gmra.mrb[0].mxu0 %v305
  %v373 = vpop.f32.mrb[0].mxu0
  %v374 = vadd.f32 0.0, %v373
  %v375 = vpop.f32.mrb[0].mxu0
  %376 = vdwg.mxu0
  %378 = vrot.lane.b32.xlu0 %v145, 96
  %v379 = vpop.permute.xlu0 %378
  %v382 = vsel %vm148, %v60, 0
  %384 = vmatprep.subr.mxu0 0.0
  %385 = vmatpush1.msra.mxu0 %v379
  %386 = vmatprep.subr.mxu0 0.0
  %387 = vmatpush1.msra.mxu0 0.0
  %388 = vmatprep.subr.mxu0 0.0
  %389 = vmatpush1.msra.mxu0 0.0
  %390 = vmatprep.subr.mxu0 0.0
  %391 = vmatpush1.msra.mxu0 0.0
  %392 = vmatprep.subr.mxu0 0.0
  %393 = vmatpush1.msra.mxu0 0.0
  %394 = vmatprep.subr.mxu0 0.0
  %395 = vmatpush1.msra.mxu0 0.0
  %396 = vmatprep.subr.mxu0 0.0
  %397 = vmatpush1.msra.mxu0 0.0
  %398 = vmatprep.subr.mxu0 0.0
  %399 = vmatpush1.msra.mxu0 0.0
  %400 = vmatprep.subr.mxu0 0.0
  %401 = vmatpush1.msra.mxu0 0.0
  %402 = vmatprep.subr.mxu0 0.0
  %403 = vmatpush1.msra.mxu0 0.0
  %404 = vmatprep.subr.mxu0 0.0
  %405 = vmatpush1.msra.mxu0 0.0
  %406 = vmatprep.subr.mxu0 0.0
  %407 = vmatpush1.msra.mxu0 0.0
  %408 = vmatprep.subr.mxu0 0.0
  %409 = vmatpush1.msra.mxu0 0.0
  %410 = vmatprep.subr.mxu0 0.0
  %411 = vmatpush1.msra.mxu0 0.0
  %412 = vmatprep.subr.mxu0 0.0
  %413 = vmatpush1.msra.mxu0 0.0
  %414 = vmatprep.subr.mxu0 0.0
  %415 = vmatpush1.msra.mxu0 0.0
  %416 = vmatprep.subr.mxu0 0.0
  %417 = vmatpush1.msra.mxu0 0.0
  %418 = vmatprep.subr.mxu0 0.0
  %419 = vmatpush1.msra.mxu0 0.0
  %420 = vmatprep.subr.mxu0 0.0
  %421 = vmatpush1.msra.mxu0 0.0
  %422 = vmatprep.subr.mxu0 0.0
  %423 = vmatpush1.msra.mxu0 0.0
  %424 = vmatprep.subr.mxu0 0.0
  %425 = vmatpush1.msra.mxu0 0.0
  %426 = vmatprep.subr.mxu0 0.0
  %427 = vmatpush1.msra.mxu0 0.0
  %428 = vmatprep.subr.mxu0 0.0
  %429 = vmatpush1.msra.mxu0 0.0
  %430 = vmatprep.subr.mxu0 0.0
  %431 = vmatpush1.msra.mxu0 0.0
  %432 = vmatprep.subr.mxu0 0.0
  %433 = vmatpush1.msra.mxu0 0.0
  %434 = vmatprep.subr.mxu0 0.0
  %435 = vmatpush1.msra.mxu0 0.0
  %436 = vmatprep.subr.mxu0 0.0
  %437 = vmatpush1.msra.mxu0 0.0
  %438 = vmatprep.subr.mxu0 0.0
  %439 = vmatpush1.msra.mxu0 0.0
  %440 = vmatprep.subr.mxu0 0.0
  %441 = vmatpush1.msra.mxu0 0.0
  %442 = vmatprep.subr.mxu0 0.0
  %443 = vmatpush1.msra.mxu0 0.0
  %444 = vmatprep.subr.mxu0 0.0
  %445 = vmatpush1.msra.mxu0 0.0
  %446 = vmatprep.subr.mxu0 0.0
  %447 = vmatpush1.msra.mxu0 0.0
  %448 = vmatprep.mubr.f32.mxu0 0.0
  %449 = vmatmul.mubr.f32.gmra.mrb[0].mxu0 %v382
  %v450 = vpop.f32.mrb[0].mxu0
  %v451 = vadd.f32 0.0, %v450
  %v452 = vpop.f32.mrb[0].mxu0
  %453 = vdwg.mxu0
  %455 = vrot.lane.b32.xlu0 %v451, 32
  %v456 = vpop.permute.xlu0 %455
  %v458 = vsel %vm66, %v374, %v456
  %v459 = vld [vmem:[%s5] sm:$0x1]
  %v461 = vlaneseq
  %v462 = vshrl.u32 %v461, 7
  %v463 = vsub.s32 0, %v462
  %v464 = vrot.slane %v459, %v463
  %v466 = vadd.f32 %v303, %v464
  %v467 = vadd.f32 %v458, %v464
  %v468 = vmax.f32 %v466, 0.0
  %v469 = vmax.f32 %v467, 0.0
  %v470 = vld [vmem:[%s6] sm:$0xff]
  %v471 = vld [vmem:[%s6 + $0x8] sm:$0xff]
  %v472 = vld [vmem:[%s6 + $0x10] sm:$0xff]
  %v473 = vld [vmem:[%s6 + $0x18] sm:$0xff]
  %v475 = vsel %vm66, %v468, 0
  %v478 = vsel %vm66, %v469, 0
  %480 = vmatprep.subr.mxu0 0.0
  %481 = vmatpush1.msra.mxu0 %v470
  %482 = vmatprep.subr.mxu0 0.0
  %483 = vmatpush1.msra.mxu0 %v471
  %484 = vmatprep.subr.mxu0 0.0
  %485 = vmatpush1.msra.mxu0 %v472
  %486 = vmatprep.subr.mxu0 0.0
  %487 = vmatpush1.msra.mxu0 %v473
  %488 = vmatprep.subr.mxu0 0.0
  %489 = vmatpush1.msra.mxu0 0.0
  %490 = vmatprep.subr.mxu0 0.0
  %491 = vmatpush1.msra.mxu0 0.0
  %492 = vmatprep.subr.mxu0 0.0
  %493 = vmatpush1.msra.mxu0 0.0
  %494 = vmatprep.subr.mxu0 0.0
  %495 = vmatpush1.msra.mxu0 0.0
  %496 = vmatprep.subr.mxu0 0.0
  %497 = vmatpush1.msra.mxu0 0.0
  %498 = vmatprep.subr.mxu0 0.0
  %499 = vmatpush1.msra.mxu0 0.0
  %500 = vmatprep.subr.mxu0 0.0
  %501 = vmatpush1.msra.mxu0 0.0
  %502 = vmatprep.subr.mxu0 0.0
  %503 = vmatpush1.msra.mxu0 0.0
  %504 = vmatprep.subr.mxu0 0.0
  %505 = vmatpush1.msra.mxu0 0.0
  %506 = vmatprep.subr.mxu0 0.0
  %507 = vmatpush1.msra.mxu0 0.0
  %508 = vmatprep.subr.mxu0 0.0
  %509 = vmatpush1.msra.mxu0 0.0
  %510 = vmatprep.subr.mxu0 0.0
  %511 = vmatpush1.msra.mxu0 0.0
  %512 = vmatprep.subr.mxu0 0.0
  %513 = vmatpush1.msra.mxu0 0.0
  %514 = vmatprep.subr.mxu0 0.0
  %515 = vmatpush1.msra.mxu0 0.0
  %516 = vmatprep.subr.mxu0 0.0
  %517 = vmatpush1.msra.mxu0 0.0
  %518 = vmatprep.subr.mxu0 0.0
  %519 = vmatpush1.msra.mxu0 0.0
  %520 = vmatprep.subr.mxu0 0.0
  %521 = vmatpush1.msra.mxu0 0.0
  %522 = vmatprep.subr.mxu0 0.0
  %523 = vmatpush1.msra.mxu0 0.0
  %524 = vmatprep.subr.mxu0 0.0
  %525 = vmatpush1.msra.mxu0 0.0
  %526 = vmatprep.subr.mxu0 0.0
  %527 = vmatpush1.msra.mxu0 0.0
  %528 = vmatprep.subr.mxu0 0.0
  %529 = vmatpush1.msra.mxu0 0.0
  %530 = vmatprep.subr.mxu0 0.0
  %531 = vmatpush1.msra.mxu0 0.0
  %532 = vmatprep.subr.mxu0 0.0
  %533 = vmatpush1.msra.mxu0 0.0
  %534 = vmatprep.subr.mxu0 0.0
  %535 = vmatpush1.msra.mxu0 0.0
  %536 = vmatprep.subr.mxu0 0.0
  %537 = vmatpush1.msra.mxu0 0.0
  %538 = vmatprep.subr.mxu0 0.0
  %539 = vmatpush1.msra.mxu0 0.0
  %540 = vmatprep.subr.mxu0 0.0
  %541 = vmatpush1.msra.mxu0 0.0
  %542 = vmatprep.subr.mxu0 0.0
  %543 = vmatpush1.msra.mxu0 0.0
  %544 = vmatprep.mubr.f32.mxu0 0.0
  %545 = vmatmul.mubr.f32.gmra.mrb[0].mxu0 %v475
  %v546 = vpop.f32.mrb[0].mxu0
  %v547 = vadd.f32 0.0, %v546
  %v548 = vpop.f32.mrb[0].mxu0
  %549 = vmatprep.mubr.f32.mxu0 0.0
  %550 = vmatmul.mubr.f32.gmra.mrb[0].mxu0 %v478
  %v551 = vpop.f32.mrb[0].mxu0
  %v552 = vadd.f32 0.0, %v551
  %v553 = vpop.f32.mrb[0].mxu0
  %554 = vdwg.mxu0
  %v555 = vld [vmem:[%s7] sm:$0xff]
  %v556 = vld [vmem:[%s7 + $0x8] sm:$0xff]
  %v557 = vld [vmem:[%s7 + $0x10] sm:$0xff]
  %v558 = vld [vmem:[%s7 + $0x18] sm:$0xff]
  %559 = vrot.lane.b32.xlu0 %v468, 96
  %v560 = vpop.permute.xlu0 %559
  %561 = vrot.lane.b32.xlu0 %v469, 96
  %v562 = vpop.permute.xlu0 %561
  %v563 = vsel %vm66, %v560, 0
  %v565 = vsel %vm66, %v562, 0
  %567 = vmatprep.subr.mxu0 0.0
  %568 = vmatpush1.msra.mxu0 %v555
  %569 = vmatprep.subr.mxu0 0.0
  %570 = vmatpush1.msra.mxu0 %v556
  %571 = vmatprep.subr.mxu0 0.0
  %572 = vmatpush1.msra.mxu0 %v557
  %573 = vmatprep.subr.mxu0 0.0
  %574 = vmatpush1.msra.mxu0 %v558
  %575 = vmatprep.subr.mxu0 0.0
  %576 = vmatpush1.msra.mxu0 0.0
  %577 = vmatprep.subr.mxu0 0.0
  %578 = vmatpush1.msra.mxu0 0.0
  %579 = vmatprep.subr.mxu0 0.0
  %580 = vmatpush1.msra.mxu0 0.0
  %581 = vmatprep.subr.mxu0 0.0
  %582 = vmatpush1.msra.mxu0 0.0
  %583 = vmatprep.subr.mxu0 0.0
  %584 = vmatpush1.msra.mxu0 0.0
  %585 = vmatprep.subr.mxu0 0.0
  %586 = vmatpush1.msra.mxu0 0.0
  %587 = vmatprep.subr.mxu0 0.0
  %588 = vmatpush1.msra.mxu0 0.0
  %589 = vmatprep.subr.mxu0 0.0
  %590 = vmatpush1.msra.mxu0 0.0
  %591 = vmatprep.subr.mxu0 0.0
  %592 = vmatpush1.msra.mxu0 0.0
  %593 = vmatprep.subr.mxu0 0.0
  %594 = vmatpush1.msra.mxu0 0.0
  %595 = vmatprep.subr.mxu0 0.0
  %596 = vmatpush1.msra.mxu0 0.0
  %597 = vmatprep.subr.mxu0 0.0
  %598 = vmatpush1.msra.mxu0 0.0
  %599 = vmatprep.subr.mxu0 0.0
  %600 = vmatpush1.msra.mxu0 0.0
  %601 = vmatprep.subr.mxu0 0.0
  %602 = vmatpush1.msra.mxu0 0.0
  %603 = vmatprep.subr.mxu0 0.0
  %604 = vmatpush1.msra.mxu0 0.0
  %605 = vmatprep.subr.mxu0 0.0
  %606 = vmatpush1.msra.mxu0 0.0
  %607 = vmatprep.subr.mxu0 0.0
  %608 = vmatpush1.msra.mxu0 0.0
  %609 = vmatprep.subr.mxu0 0.0
  %610 = vmatpush1.msra.mxu0 0.0
  %611 = vmatprep.subr.mxu0 0.0
  %612 = vmatpush1.msra.mxu0 0.0
  %613 = vmatprep.subr.mxu0 0.0
  %614 = vmatpush1.msra.mxu0 0.0
  %615 = vmatprep.subr.mxu0 0.0
  %616 = vmatpush1.msra.mxu0 0.0
  %617 = vmatprep.subr.mxu0 0.0
  %618 = vmatpush1.msra.mxu0 0.0
  %619 = vmatprep.subr.mxu0 0.0
  %620 = vmatpush1.msra.mxu0 0.0
  %621 = vmatprep.subr.mxu0 0.0
  %622 = vmatpush1.msra.mxu0 0.0
  %623 = vmatprep.subr.mxu0 0.0
  %624 = vmatpush1.msra.mxu0 0.0
  %625 = vmatprep.subr.mxu0 0.0
  %626 = vmatpush1.msra.mxu0 0.0
  %627 = vmatprep.subr.mxu0 0.0
  %628 = vmatpush1.msra.mxu0 0.0
  %629 = vmatprep.subr.mxu0 0.0
  %630 = vmatpush1.msra.mxu0 0.0
  %631 = vmatprep.mubr.f32.mxu0 0.0
  %632 = vmatmul.mubr.f32.gmra.mrb[0].mxu0 %v563
  %v633 = vpop.f32.mrb[0].mxu0
  %v634 = vadd.f32 0.0, %v633
  %v635 = vpop.f32.mrb[0].mxu0
  %636 = vmatprep.mubr.f32.mxu0 0.0
  %637 = vmatmul.mubr.f32.gmra.mrb[0].mxu0 %v565
  %v638 = vpop.f32.mrb[0].mxu0
  %v639 = vadd.f32 0.0, %v638
  %v640 = vpop.f32.mrb[0].mxu0
  %641 = vdwg.mxu0
  %644 = vrot.lane.b32.xlu0 %v634, 32
  %v645 = vpop.permute.xlu0 %644
  %646 = vrot.lane.b32.xlu0 %v639, 32
  %v647 = vpop.permute.xlu0 %646
  %v650 = vsel %vm66, %v547, %v645
  %v651 = vsel %vm66, %v552, %v647
  %652 = vmatprep.subr.mxu0 0.0
  %653 = vmatpush1.msra.mxu0 %v650
  %654 = vmatprep.subr.mxu0 0.0
  %655 = vmatpush1.msra.mxu0 0.0
  %656 = vmatprep.subr.mxu0 0.0
  %657 = vmatpush1.msra.mxu0 0.0
  %658 = vmatprep.subr.mxu0 0.0
  %659 = vmatpush1.msra.mxu0 0.0
  %660 = vmatprep.subr.mxu0 0.0
  %661 = vmatpush1.msra.mxu0 0.0
  %662 = vmatprep.subr.mxu0 0.0
  %663 = vmatpush1.msra.mxu0 0.0
  %664 = vmatprep.subr.mxu0 0.0
  %665 = vmatpush1.msra.mxu0 0.0
  %666 = vmatprep.subr.mxu0 0.0
  %667 = vmatpush1.msra.mxu0 0.0
  %668 = vmatprep.subr.mxu0 0.0
  %669 = vmatpush1.msra.mxu0 0.0
  %670 = vmatprep.subr.mxu0 0.0
  %671 = vmatpush1.msra.mxu0 0.0
  %672 = vmatprep.subr.mxu0 0.0
  %673 = vmatpush1.msra.mxu0 0.0
  %674 = vmatprep.subr.mxu0 0.0
  %675 = vmatpush1.msra.mxu0 0.0
  %676 = vmatprep.subr.mxu0 0.0
  %677 = vmatpush1.msra.mxu0 0.0
  %678 = vmatprep.subr.mxu0 0.0
  %679 = vmatpush1.msra.mxu0 0.0
  %680 = vmatprep.subr.mxu0 0.0
  %681 = vmatpush1.msra.mxu0 0.0
  %682 = vmatprep.subr.mxu0 0.0
  %683 = vmatpush1.msra.mxu0 0.0
  %684 = vmatprep.subr.mxu0 0.0
  %685 = vmatpush1.msra.mxu0 0.0
  %686 = vmatprep.subr.mxu0 0.0
  %687 = vmatpush1.msra.mxu0 0.0
  %688 = vmatprep.subr.mxu0 0.0
  %689 = vmatpush1.msra.mxu0 0.0
  %690 = vmatprep.subr.mxu0 0.0
  %691 = vmatpush1.msra.mxu0 0.0
  %692 = vmatprep.subr.mxu0 0.0
  %693 = vmatpush1.msra.mxu0 0.0
  %694 = vmatprep.subr.mxu0 0.0
  %695 = vmatpush1.msra.mxu0 0.0
  %696 = vmatprep.subr.mxu0 0.0
  %697 = vmatpush1.msra.mxu0 0.0
  %698 = vmatprep.subr.mxu0 0.0
  %699 = vmatpush1.msra.mxu0 0.0
  %700 = vmatprep.subr.mxu0 0.0
  %701 = vmatpush1.msra.mxu0 0.0
  %702 = vmatprep.subr.mxu0 0.0
  %703 = vmatpush1.msra.mxu0 0.0
  %704 = vmatprep.subr.mxu0 0.0
  %705 = vmatpush1.msra.mxu0 0.0
  %706 = vmatprep.subr.mxu0 0.0
  %707 = vmatpush1.msra.mxu0 0.0
  %708 = vmatprep.subr.mxu0 0.0
  %709 = vmatpush1.msra.mxu0 0.0
  %710 = vmatprep.subr.mxu0 0.0
  %711 = vmatpush1.msra.mxu0 0.0
  %712 = vmatprep.subr.mxu0 0.0
  %713 = vmatpush1.msra.mxu0 0.0
  %714 = vmatprep.subr.mxu0 0.0
  %715 = vmatpush1.msra.mxu0 0.0
  %716 = vmatprep.mubr.f32.mxu0 0.0
  %717 = vmatmul.mubr.f32.gmra.mrb[0].mxu0 %v150
  %v718 = vpop.f32.mrb[0].mxu0
  %v719 = vadd.f32 0.0, %v718
  %v720 = vpop.f32.mrb[0].mxu0
  %721 = vdwg.mxu0
  %723 = vrot.lane.b32.xlu0 %v650, 96
  %v724 = vpop.permute.xlu0 %723
  %726 = vmatprep.subr.mxu0 0.0
  %727 = vmatpush1.msra.mxu0 %v724
  %728 = vmatprep.subr.mxu0 0.0
  %729 = vmatpush1.msra.mxu0 0.0
  %730 = vmatprep.subr.mxu0 0.0
  %731 = vmatpush1.msra.mxu0 0.0
  %732 = vmatprep.subr.mxu0 0.0
  %733 = vmatpush1.msra.mxu0 0.0
  %734 = vmatprep.subr.mxu0 0.0
  %735 = vmatpush1.msra.mxu0 0.0
  %736 = vmatprep.subr.mxu0 0.0
  %737 = vmatpush1.msra.mxu0 0.0
  %738 = vmatprep.subr.mxu0 0.0
  %739 = vmatpush1.msra.mxu0 0.0
  %740 = vmatprep.subr.mxu0 0.0
  %741 = vmatpush1.msra.mxu0 0.0
  %742 = vmatprep.subr.mxu0 0.0
  %743 = vmatpush1.msra.mxu0 0.0
  %744 = vmatprep.subr.mxu0 0.0
  %745 = vmatpush1.msra.mxu0 0.0
  %746 = vmatprep.subr.mxu0 0.0
  %747 = vmatpush1.msra.mxu0 0.0
  %748 = vmatprep.subr.mxu0 0.0
  %749 = vmatpush1.msra.mxu0 0.0
  %750 = vmatprep.subr.mxu0 0.0
  %751 = vmatpush1.msra.mxu0 0.0
  %752 = vmatprep.subr.mxu0 0.0
  %753 = vmatpush1.msra.mxu0 0.0
  %754 = vmatprep.subr.mxu0 0.0
  %755 = vmatpush1.msra.mxu0 0.0
  %756 = vmatprep.subr.mxu0 0.0
  %757 = vmatpush1.msra.mxu0 0.0
  %758 = vmatprep.subr.mxu0 0.0
  %759 = vmatpush1.msra.mxu0 0.0
  %760 = vmatprep.subr.mxu0 0.0
  %761 = vmatpush1.msra.mxu0 0.0
  %762 = vmatprep.subr.mxu0 0.0
  %763 = vmatpush1.msra.mxu0 0.0
  %764 = vmatprep.subr.mxu0 0.0
  %765 = vmatpush1.msra.mxu0 0.0
  %766 = vmatprep.subr.mxu0 0.0
  %767 = vmatpush1.msra.mxu0 0.0
  %768 = vmatprep.subr.mxu0 0.0
  %769 = vmatpush1.msra.mxu0 0.0
  %770 = vmatprep.subr.mxu0 0.0
  %771 = vmatpush1.msra.mxu0 0.0
  %772 = vmatprep.subr.mxu0 0.0
  %773 = vmatpush1.msra.mxu0 0.0
  %774 = vmatprep.subr.mxu0 0.0
  %775 = vmatpush1.msra.mxu0 0.0
  %776 = vmatprep.subr.mxu0 0.0
  %777 = vmatpush1.msra.mxu0 0.0
  %778 = vmatprep.subr.mxu0 0.0
  %779 = vmatpush1.msra.mxu0 0.0
  %780 = vmatprep.subr.mxu0 0.0
  %781 = vmatpush1.msra.mxu0 0.0
  %782 = vmatprep.subr.mxu0 0.0
  %783 = vmatpush1.msra.mxu0 0.0
  %784 = vmatprep.subr.mxu0 0.0
  %785 = vmatpush1.msra.mxu0 0.0
  %786 = vmatprep.subr.mxu0 0.0
  %787 = vmatpush1.msra.mxu0 0.0
  %788 = vmatprep.subr.mxu0 0.0
  %789 = vmatpush1.msra.mxu0 0.0
  %790 = vmatprep.mubr.f32.mxu0 0.0
  %791 = vmatmul.mubr.f32.gmra.mrb[0].mxu0 %v227
  %v792 = vpop.f32.mrb[0].mxu0
  %v793 = vadd.f32 0.0, %v792
  %v794 = vpop.f32.mrb[0].mxu0
  %795 = vdwg.mxu0
  %797 = vrot.lane.b32.xlu0 %v793, 32
  %v798 = vpop.permute.xlu0 %797
  %v800 = vsel %vm66, %v719, %v798
  %801 = vmatprep.subr.mxu0 0.0
  %802 = vmatpush1.msra.mxu0 %v651
  %803 = vmatprep.subr.mxu0 0.0
  %804 = vmatpush1.msra.mxu0 0.0
  %805 = vmatprep.subr.mxu0 0.0
  %806 = vmatpush1.msra.mxu0 0.0
  %807 = vmatprep.subr.mxu0 0.0
  %808 = vmatpush1.msra.mxu0 0.0
  %809 = vmatprep.subr.mxu0 0.0
  %810 = vmatpush1.msra.mxu0 0.0
  %811 = vmatprep.subr.mxu0 0.0
  %812 = vmatpush1.msra.mxu0 0.0
  %813 = vmatprep.subr.mxu0 0.0
  %814 = vmatpush1.msra.mxu0 0.0
  %815 = vmatprep.subr.mxu0 0.0
  %816 = vmatpush1.msra.mxu0 0.0
  %817 = vmatprep.subr.mxu0 0.0
  %818 = vmatpush1.msra.mxu0 0.0
  %819 = vmatprep.subr.mxu0 0.0
  %820 = vmatpush1.msra.mxu0 0.0
  %821 = vmatprep.subr.mxu0 0.0
  %822 = vmatpush1.msra.mxu0 0.0
  %823 = vmatprep.subr.mxu0 0.0
  %824 = vmatpush1.msra.mxu0 0.0
  %825 = vmatprep.subr.mxu0 0.0
  %826 = vmatpush1.msra.mxu0 0.0
  %827 = vmatprep.subr.mxu0 0.0
  %828 = vmatpush1.msra.mxu0 0.0
  %829 = vmatprep.subr.mxu0 0.0
  %830 = vmatpush1.msra.mxu0 0.0
  %831 = vmatprep.subr.mxu0 0.0
  %832 = vmatpush1.msra.mxu0 0.0
  %833 = vmatprep.subr.mxu0 0.0
  %834 = vmatpush1.msra.mxu0 0.0
  %835 = vmatprep.subr.mxu0 0.0
  %836 = vmatpush1.msra.mxu0 0.0
  %837 = vmatprep.subr.mxu0 0.0
  %838 = vmatpush1.msra.mxu0 0.0
  %839 = vmatprep.subr.mxu0 0.0
  %840 = vmatpush1.msra.mxu0 0.0
  %841 = vmatprep.subr.mxu0 0.0
  %842 = vmatpush1.msra.mxu0 0.0
  %843 = vmatprep.subr.mxu0 0.0
  %844 = vmatpush1.msra.mxu0 0.0
  %845 = vmatprep.subr.mxu0 0.0
  %846 = vmatpush1.msra.mxu0 0.0
  %847 = vmatprep.subr.mxu0 0.0
  %848 = vmatpush1.msra.mxu0 0.0
  %849 = vmatprep.subr.mxu0 0.0
  %850 = vmatpush1.msra.mxu0 0.0
  %851 = vmatprep.subr.mxu0 0.0
  %852 = vmatpush1.msra.mxu0 0.0
  %853 = vmatprep.subr.mxu0 0.0
  %854 = vmatpush1.msra.mxu0 0.0
  %855 = vmatprep.subr.mxu0 0.0
  %856 = vmatpush1.msra.mxu0 0.0
  %857 = vmatprep.subr.mxu0 0.0
  %858 = vmatpush1.msra.mxu0 0.0
  %859 = vmatprep.subr.mxu0 0.0
  %860 = vmatpush1.msra.mxu0 0.0
  %861 = vmatprep.subr.mxu0 0.0
  %862 = vmatpush1.msra.mxu0 0.0
  %863 = vmatprep.subr.mxu0 0.0
  %864 = vmatpush1.msra.mxu0 0.0
  %865 = vmatprep.mubr.f32.mxu0 0.0
  %866 = vmatmul.mubr.f32.gmra.mrb[0].mxu0 %v305
  %v867 = vpop.f32.mrb[0].mxu0
  %v868 = vadd.f32 0.0, %v867
  %v869 = vpop.f32.mrb[0].mxu0
  %870 = vdwg.mxu0
  %872 = vrot.lane.b32.xlu0 %v651, 96
  %v873 = vpop.permute.xlu0 %872
  %875 = vmatprep.subr.mxu0 0.0
  %876 = vmatpush1.msra.mxu0 %v873
  %877 = vmatprep.subr.mxu0 0.0
  %878 = vmatpush1.msra.mxu0 0.0
  %879 = vmatprep.subr.mxu0 0.0
  %880 = vmatpush1.msra.mxu0 0.0
  %881 = vmatprep.subr.mxu0 0.0
  %882 = vmatpush1.msra.mxu0 0.0
  %883 = vmatprep.subr.mxu0 0.0
  %884 = vmatpush1.msra.mxu0 0.0
  %885 = vmatprep.subr.mxu0 0.0
  %886 = vmatpush1.msra.mxu0 0.0
  %887 = vmatprep.subr.mxu0 0.0
  %888 = vmatpush1.msra.mxu0 0.0
  %889 = vmatprep.subr.mxu0 0.0
  %890 = vmatpush1.msra.mxu0 0.0
  %891 = vmatprep.subr.mxu0 0.0
  %892 = vmatpush1.msra.mxu0 0.0
  %893 = vmatprep.subr.mxu0 0.0
  %894 = vmatpush1.msra.mxu0 0.0
  %895 = vmatprep.subr.mxu0 0.0
  %896 = vmatpush1.msra.mxu0 0.0
  %897 = vmatprep.subr.mxu0 0.0
  %898 = vmatpush1.msra.mxu0 0.0
  %899 = vmatprep.subr.mxu0 0.0
  %900 = vmatpush1.msra.mxu0 0.0
  %901 = vmatprep.subr.mxu0 0.0
  %902 = vmatpush1.msra.mxu0 0.0
  %903 = vmatprep.subr.mxu0 0.0
  %904 = vmatpush1.msra.mxu0 0.0
  %905 = vmatprep.subr.mxu0 0.0
  %906 = vmatpush1.msra.mxu0 0.0
  %907 = vmatprep.subr.mxu0 0.0
  %908 = vmatpush1.msra.mxu0 0.0
  %909 = vmatprep.subr.mxu0 0.0
  %910 = vmatpush1.msra.mxu0 0.0
  %911 = vmatprep.subr.mxu0 0.0
  %912 = vmatpush1.msra.mxu0 0.0
  %913 = vmatprep.subr.mxu0 0.0
  %914 = vmatpush1.msra.mxu0 0.0
  %915 = vmatprep.subr.mxu0 0.0
  %916 = vmatpush1.msra.mxu0 0.0
  %917 = vmatprep.subr.mxu0 0.0
  %918 = vmatpush1.msra.mxu0 0.0
  %919 = vmatprep.subr.mxu0 0.0
  %920 = vmatpush1.msra.mxu0 0.0
  %921 = vmatprep.subr.mxu0 0.0
  %922 = vmatpush1.msra.mxu0 0.0
  %923 = vmatprep.subr.mxu0 0.0
  %924 = vmatpush1.msra.mxu0 0.0
  %925 = vmatprep.subr.mxu0 0.0
  %926 = vmatpush1.msra.mxu0 0.0
  %927 = vmatprep.subr.mxu0 0.0
  %928 = vmatpush1.msra.mxu0 0.0
  %929 = vmatprep.subr.mxu0 0.0
  %930 = vmatpush1.msra.mxu0 0.0
  %931 = vmatprep.subr.mxu0 0.0
  %932 = vmatpush1.msra.mxu0 0.0
  %933 = vmatprep.subr.mxu0 0.0
  %934 = vmatpush1.msra.mxu0 0.0
  %935 = vmatprep.subr.mxu0 0.0
  %936 = vmatpush1.msra.mxu0 0.0
  %937 = vmatprep.subr.mxu0 0.0
  %938 = vmatpush1.msra.mxu0 0.0
  %939 = vmatprep.mubr.f32.mxu0 0.0
  %940 = vmatmul.mubr.f32.gmra.mrb[0].mxu0 %v382
  %v941 = vpop.f32.mrb[0].mxu0
  %v942 = vadd.f32 0.0, %v941
  %v943 = vpop.f32.mrb[0].mxu0
  %944 = vdwg.mxu0
  %946 = vrot.lane.b32.xlu0 %v942, 32
  %v947 = vpop.permute.xlu0 %946
  %v949 = vsel %vm66, %v868, %v947
  %v950 = vld [vmem:[%s8] sm:$0x1]
  %v952 = vlaneseq
  %v953 = vshrl.u32 %v952, 7
  %v954 = vsub.s32 0, %v953
  %v955 = vrot.slane %v950, %v954
  %v957 = vadd.f32 %v800, %v955
  %v958 = vadd.f32 %v949, %v955
  %v959 = vmax.f32 %v957, 0.0
  %v960 = vmax.f32 %v958, 0.0
  %963 = vrot.lane.b32.xlu0 %v959, 32
  %v964 = vpop.permute.xlu0 %963
  %965 = vrot.lane.b32.xlu0 %v960, 32
  %v966 = vpop.permute.xlu0 %965
  %v969 = vsel %vm66, %v55, %v964
  %v970 = vsel %vm66, %v56, %v966
  %v971 = vld [vmem:[%s9] sm:$0xff]
  %v972 = vld [vmem:[%s9 + $0x8] sm:$0xff]
  %v973 = vld [vmem:[%s9 + $0x10] sm:$0xff]
  %v974 = vld [vmem:[%s9 + $0x18] sm:$0xff]
  %v975 = vld [vmem:[%s9 + $0x20] sm:$0xff]
  %v976 = vld [vmem:[%s9 + $0x28] sm:$0xff]
  %v977 = vld [vmem:[%s9 + $0x30] sm:$0xff]
  %v978 = vld [vmem:[%s9 + $0x38] sm:$0xff]
  %v979 = vld [vmem:[%s9 + $0x40] sm:$0xff]
  %v980 = vld [vmem:[%s9 + $0x48] sm:$0xff]
  %v981 = vld [vmem:[%s9 + $0x50] sm:$0xff]
  %v982 = vld [vmem:[%s9 + $0x58] sm:$0xff]
  %v983 = vld [vmem:[%s11] sm:$0x1]
  %v985 = vlaneseq
  %v986 = vshrl.u32 %v985, 7
  %v987 = vsub.s32 0, %v986
  %v988 = vrot.slane %v983, %v987
  %vm990 = vcmask 785408
  %v992 = vsel %vm990, %v969, 0
  %v995 = vsel %vm990, %v970, 0
  %997 = vmatprep.subr.mxu0 0.0
  %998 = vmatpush1.msra.mxu0 %v971
  %999 = vmatprep.subr.mxu0 0.0
  %1000 = vmatpush1.msra.mxu0 %v972
  %1001 = vmatprep.subr.mxu0 0.0
  %1002 = vmatpush1.msra.mxu0 %v973
  %1003 = vmatprep.subr.mxu0 0.0
  %1004 = vmatpush1.msra.mxu0 %v974
  %1005 = vmatprep.subr.mxu0 0.0
  %1006 = vmatpush1.msra.mxu0 %v975
  %1007 = vmatprep.subr.mxu0 0.0
  %1008 = vmatpush1.msra.mxu0 %v976
  %1009 = vmatprep.subr.mxu0 0.0
  %1010 = vmatpush1.msra.mxu0 %v977
  %1011 = vmatprep.subr.mxu0 0.0
  %1012 = vmatpush1.msra.mxu0 %v978
  %1013 = vmatprep.subr.mxu0 0.0
  %1014 = vmatpush1.msra.mxu0 %v979
  %1015 = vmatprep.subr.mxu0 0.0
  %1016 = vmatpush1.msra.mxu0 %v980
  %1017 = vmatprep.subr.mxu0 0.0
  %1018 = vmatpush1.msra.mxu0 %v981
  %1019 = vmatprep.subr.mxu0 0.0
  %1020 = vmatpush1.msra.mxu0 %v982
  %1021 = vmatprep.subr.mxu0 0.0
  %1022 = vmatpush1.msra.mxu0 0.0
  %1023 = vmatprep.subr.mxu0 0.0
  %1024 = vmatpush1.msra.mxu0 0.0
  %1025 = vmatprep.subr.mxu0 0.0
  %1026 = vmatpush1.msra.mxu0 0.0
  %1027 = vmatprep.subr.mxu0 0.0
  %1028 = vmatpush1.msra.mxu0 0.0
  %1029 = vmatprep.subr.mxu0 0.0
  %1030 = vmatpush1.msra.mxu0 0.0
  %1031 = vmatprep.subr.mxu0 0.0
  %1032 = vmatpush1.msra.mxu0 0.0
  %1033 = vmatprep.subr.mxu0 0.0
  %1034 = vmatpush1.msra.mxu0 0.0
  %1035 = vmatprep.subr.mxu0 0.0
  %1036 = vmatpush1.msra.mxu0 0.0
  %1037 = vmatprep.subr.mxu0 0.0
  %1038 = vmatpush1.msra.mxu0 0.0
  %1039 = vmatprep.subr.mxu0 0.0
  %1040 = vmatpush1.msra.mxu0 0.0
  %1041 = vmatprep.subr.mxu0 0.0
  %1042 = vmatpush1.msra.mxu0 0.0
  %1043 = vmatprep.subr.mxu0 0.0
  %1044 = vmatpush1.msra.mxu0 0.0
  %1045 = vmatprep.subr.mxu0 0.0
  %1046 = vmatpush1.msra.mxu0 0.0
  %1047 = vmatprep.subr.mxu0 0.0
  %1048 = vmatpush1.msra.mxu0 0.0
  %1049 = vmatprep.subr.mxu0 0.0
  %1050 = vmatpush1.msra.mxu0 0.0
  %1051 = vmatprep.subr.mxu0 0.0
  %1052 = vmatpush1.msra.mxu0 0.0
  %1053 = vmatprep.subr.mxu0 0.0
  %1054 = vmatpush1.msra.mxu0 0.0
  %1055 = vmatprep.subr.mxu0 0.0
  %1056 = vmatpush1.msra.mxu0 0.0
  %1057 = vmatprep.subr.mxu0 0.0
  %1058 = vmatpush1.msra.mxu0 0.0
  %1059 = vmatprep.subr.mxu0 0.0
  %1060 = vmatpush1.msra.mxu0 0.0
  %1061 = vmatprep.mubr.f32.mxu0 0.0
  %1062 = vmatmul.mubr.f32.gmra.mrb[0].mxu0 %v992
  %v1063 = vpop.f32.mrb[0].mxu0
  %v1064 = vadd.f32 %v988, %v1063
  %v1065 = vpop.f32.mrb[0].mxu0
  %1066 = vmatprep.mubr.f32.mxu0 0.0
  %1067 = vmatmul.mubr.f32.gmra.mrb[0].mxu0 %v995
  %v1068 = vpop.f32.mrb[0].mxu0
  %v1069 = vadd.f32 %v988, %v1068
  %v1070 = vpop.f32.mrb[0].mxu0
  %1071 = vdwg.mxu0
  %v1072 = vld [vmem:[%s10] sm:$0xff]
  %v1073 = vld [vmem:[%s10 + $0x8] sm:$0xff]
  %v1074 = vld [vmem:[%s10 + $0x10] sm:$0xff]
  %v1075 = vld [vmem:[%s10 + $0x18] sm:$0xff]
  %v1077 = vsel %vm66, 0.0, 0
  %1079 = vmatprep.subr.mxu0 0.0
  %1080 = vmatpush1.msra.mxu0 %v1072
  %1081 = vmatprep.subr.mxu0 0.0
  %1082 = vmatpush1.msra.mxu0 %v1073
  %1083 = vmatprep.subr.mxu0 0.0
  %1084 = vmatpush1.msra.mxu0 %v1074
  %1085 = vmatprep.subr.mxu0 0.0
  %1086 = vmatpush1.msra.mxu0 %v1075
  %1087 = vmatprep.subr.mxu0 0.0
  %1088 = vmatpush1.msra.mxu0 0.0
  %1089 = vmatprep.subr.mxu0 0.0
  %1090 = vmatpush1.msra.mxu0 0.0
  %1091 = vmatprep.subr.mxu0 0.0
  %1092 = vmatpush1.msra.mxu0 0.0
  %1093 = vmatprep.subr.mxu0 0.0
  %1094 = vmatpush1.msra.mxu0 0.0
  %1095 = vmatprep.subr.mxu0 0.0
  %1096 = vmatpush1.msra.mxu0 0.0
  %1097 = vmatprep.subr.mxu0 0.0
  %1098 = vmatpush1.msra.mxu0 0.0
  %1099 = vmatprep.subr.mxu0 0.0
  %1100 = vmatpush1.msra.mxu0 0.0
  %1101 = vmatprep.subr.mxu0 0.0
  %1102 = vmatpush1.msra.mxu0 0.0
  %1103 = vmatprep.subr.mxu0 0.0
  %1104 = vmatpush1.msra.mxu0 0.0
  %1105 = vmatprep.subr.mxu0 0.0
  %1106 = vmatpush1.msra.mxu0 0.0
  %1107 = vmatprep.subr.mxu0 0.0
  %1108 = vmatpush1.msra.mxu0 0.0
  %1109 = vmatprep.subr.mxu0 0.0
  %1110 = vmatpush1.msra.mxu0 0.0
  %1111 = vmatprep.subr.mxu0 0.0
  %1112 = vmatpush1.msra.mxu0 0.0
  %1113 = vmatprep.subr.mxu0 0.0
  %1114 = vmatpush1.msra.mxu0 0.0
  %1115 = vmatprep.subr.mxu0 0.0
  %1116 = vmatpush1.msra.mxu0 0.0
  %1117 = vmatprep.subr.mxu0 0.0
  %1118 = vmatpush1.msra.mxu0 0.0
  %1119 = vmatprep.subr.mxu0 0.0
  %1120 = vmatpush1.msra.mxu0 0.0
  %1121 = vmatprep.subr.mxu0 0.0
  %1122 = vmatpush1.msra.mxu0 0.0
  %1123 = vmatprep.subr.mxu0 0.0
  %1124 = vmatpush1.msra.mxu0 0.0
  %1125 = vmatprep.subr.mxu0 0.0
  %1126 = vmatpush1.msra.mxu0 0.0
  %1127 = vmatprep.subr.mxu0 0.0
  %1128 = vmatpush1.msra.mxu0 0.0
  %1129 = vmatprep.subr.mxu0 0.0
  %1130 = vmatpush1.msra.mxu0 0.0
  %1131 = vmatprep.subr.mxu0 0.0
  %1132 = vmatpush1.msra.mxu0 0.0
  %1133 = vmatprep.subr.mxu0 0.0
  %1134 = vmatpush1.msra.mxu0 0.0
  %1135 = vmatprep.subr.mxu0 0.0
  %1136 = vmatpush1.msra.mxu0 0.0
  %1137 = vmatprep.subr.mxu0 0.0
  %1138 = vmatpush1.msra.mxu0 0.0
  %1139 = vmatprep.subr.mxu0 0.0
  %1140 = vmatpush1.msra.mxu0 0.0
  %1141 = vmatprep.subr.mxu0 0.0
  %1142 = vmatpush1.msra.mxu0 0.0
  %1143 = vmatprep.mubr.f32.mxu0 0.0
  %1144 = vmatmul.mubr.f32.gmra.mrb[0].mxu0 %v1077
  %v1145 = vpop.f32.mrb[0].mxu0
  %v1146 = vadd.f32 0.0, %v1145
  %v1147 = vpop.f32.mrb[0].mxu0
  %1148 = vdwg.mxu0
  %v1150 = vrot.slane %v1146, 1
  %v1153 = vadd.f32 %v1064, %v1146
  %v1154 = vadd.f32 %v1069, %v1150
  %v1155 = vxor.u32 %v1153, 2147483648
  %v1156 = vxor.u32 %v1154, 2147483648
  %v1157 = vmul.f32 %v1155, 1.442695
  %v1158 = vpow.pop %v1157
  %v1159 = vmul.f32 %v1156, 1.442695
  %v1160 = vpow.pop %v1159
  %v1161 = vadd.f32 %v1158, 1.0
  %v1162 = vadd.f32 %v1160, 1.0
  %v1163 = vrcp.pop %v1161
  %v1164 = vmul.f32 1.0, %v1163
  %v1165 = vrcp.pop %v1162
  %v1166 = vmul.f32 1.0, %v1165
  %v1167 = vtanh.pop %v1153
  %v1168 = vtanh.pop %v1154
  %v1169 = vmul.f32 %v1164, 0.0
  %v1170 = vmul.f32 %v1166, 0.0
  %1173 = vrot.lane.b32.xlu0 %v1167, 64
  %v1174 = vpop.permute.xlu0 %1173
  %1175 = vrot.lane.b32.xlu0 %v1168, 64
  %v1176 = vpop.permute.xlu0 %1175
  %v1179 = vmul.f32 %v1164, %v1174
  %v1180 = vmul.f32 %v1166, %v1176
  %1183 = vrot.lane.b32.xlu0 %v1179, 32
  %v1184 = vpop.permute.xlu0 %1183
  %1185 = vrot.lane.b32.xlu0 %v1180, 32
  %v1186 = vpop.permute.xlu0 %1185
  %v1189 = vadd.f32 %v1169, %v1184
  %v1190 = vadd.f32 %v1170, %v1186
  %v1191 = vtanh.pop %v1189
  %v1192 = vtanh.pop %v1190
  %1195 = vrot.lane.b32.xlu0 %v1191, 64
  %v1196 = vpop.permute.xlu0 %1195
  %1197 = vrot.lane.b32.xlu0 %v1192, 64
  %v1198 = vpop.permute.xlu0 %1197
  %v1201 = vmul.f32 %v1164, %v1196
  %v1202 = vmul.f32 %v1166, %v1198
  %1205 = vrot.lane.b32.xlu0 %v1201, 32
  %v1206 = vpop.permute.xlu0 %1205
  %1207 = vrot.lane.b32.xlu0 %v1202, 32
  %v1208 = vpop.permute.xlu0 %1207
  %vm1211 = vcmask 253952
  %1212 = vst.msk [vmem:[#allocation2] sm:$0x1] %vm1211, %v1206
  %1213 = vst.msk [vmem:[#allocation2 + $0x8] sm:$0x1] %vm1211, %v1208
  %v1214 = vld [vmem:[%s10] sm:$0xff]
  %v1215 = vld [vmem:[%s10 + $0x8] sm:$0xff]
  %v1216 = vld [vmem:[%s10 + $0x10] sm:$0xff]
  %v1217 = vld [vmem:[%s10 + $0x18] sm:$0xff]
  %v1218 = vrot.slane %v1202, 7
  %vm1219 = vcmask 1041409
  %v1220 = vsel %vm1219, %v1218, %v1201
  %1221 = vrot.lane.b32.xlu0 %v1220, 32
  %v1222 = vpop.permute.xlu0 %1221
  %v1223 = vsel %vm66, %v1222, 0
  %1225 = vmatprep.subr.mxu0 0.0
  %1226 = vmatpush1.msra.mxu0 %v1214
  %1227 = vmatprep.subr.mxu0 0.0
  %1228 = vmatpush1.msra.mxu0 %v1215
  %1229 = vmatprep.subr.mxu0 0.0
  %1230 = vmatpush1.msra.mxu0 %v1216
  %1231 = vmatprep.subr.mxu0 0.0
  %1232 = vmatpush1.msra.mxu0 %v1217
  %1233 = vmatprep.subr.mxu0 0.0
  %1234 = vmatpush1.msra.mxu0 0.0
  %1235 = vmatprep.subr.mxu0 0.0
  %1236 = vmatpush1.msra.mxu0 0.0
  %1237 = vmatprep.subr.mxu0 0.0
  %1238 = vmatpush1.msra.mxu0 0.0
  %1239 = vmatprep.subr.mxu0 0.0
  %1240 = vmatpush1.msra.mxu0 0.0
  %1241 = vmatprep.subr.mxu0 0.0
  %1242 = vmatpush1.msra.mxu0 0.0
  %1243 = vmatprep.subr.mxu0 0.0
  %1244 = vmatpush1.msra.mxu0 0.0
  %1245 = vmatprep.subr.mxu0 0.0
  %1246 = vmatpush1.msra.mxu0 0.0
  %1247 = vmatprep.subr.mxu0 0.0
  %1248 = vmatpush1.msra.mxu0 0.0
  %1249 = vmatprep.subr.mxu0 0.0
  %1250 = vmatpush1.msra.mxu0 0.0
  %1251 = vmatprep.subr.mxu0 0.0
  %1252 = vmatpush1.msra.mxu0 0.0
  %1253 = vmatprep.subr.mxu0 0.0
  %1254 = vmatpush1.msra.mxu0 0.0
  %1255 = vmatprep.subr.mxu0 0.0
  %1256 = vmatpush1.msra.mxu0 0.0
  %1257 = vmatprep.subr.mxu0 0.0
  %1258 = vmatpush1.msra.mxu0 0.0
  %1259 = vmatprep.subr.mxu0 0.0
  %1260 = vmatpush1.msra.mxu0 0.0
  %1261 = vmatprep.subr.mxu0 0.0
  %1262 = vmatpush1.msra.mxu0 0.0
  %1263 = vmatprep.subr.mxu0 0.0
  %1264 = vmatpush1.msra.mxu0 0.0
  %1265 = vmatprep.subr.mxu0 0.0
  %1266 = vmatpush1.msra.mxu0 0.0
  %1267 = vmatprep.subr.mxu0 0.0
  %1268 = vmatpush1.msra.mxu0 0.0
  %1269 = vmatprep.subr.mxu0 0.0
  %1270 = vmatpush1.msra.mxu0 0.0
  %1271 = vmatprep.subr.mxu0 0.0
  %1272 = vmatpush1.msra.mxu0 0.0
  %1273 = vmatprep.subr.mxu0 0.0
  %1274 = vmatpush1.msra.mxu0 0.0
  %1275 = vmatprep.subr.mxu0 0.0
  %1276 = vmatpush1.msra.mxu0 0.0
  %1277 = vmatprep.subr.mxu0 0.0
  %1278 = vmatpush1.msra.mxu0 0.0
  %1279 = vmatprep.subr.mxu0 0.0
  %1280 = vmatpush1.msra.mxu0 0.0
  %1281 = vmatprep.subr.mxu0 0.0
  %1282 = vmatpush1.msra.mxu0 0.0
  %1283 = vmatprep.subr.mxu0 0.0
  %1284 = vmatpush1.msra.mxu0 0.0
  %1285 = vmatprep.subr.mxu0 0.0
  %1286 = vmatpush1.msra.mxu0 0.0
  %1287 = vmatprep.subr.mxu0 0.0
  %1288 = vmatpush1.msra.mxu0 0.0
  %1289 = vmatprep.mubr.f32.mxu0 0.0
  %1290 = vmatmul.mubr.f32.gmra.mrb[0].mxu0 %v1223
  %v1291 = vpop.f32.mrb[0].mxu0
  %v1292 = vadd.f32 0.0, %v1291
  %v1293 = vpop.f32.mrb[0].mxu0
  %1294 = vdwg.mxu0
  %v1296 = vrot.slane %v1292, 7
  %v1299 = vadd.f32 %v1064, %v1296
  %v1300 = vadd.f32 %v1069, %v1292
  %v1301 = vxor.u32 %v1299, 2147483648
  %v1302 = vxor.u32 %v1300, 2147483648
  %v1303 = vmul.f32 %v1301, 1.442695
  %v1304 = vpow.pop %v1303
  %v1305 = vmul.f32 %v1302, 1.442695
  %v1306 = vpow.pop %v1305
  %v1307 = vadd.f32 %v1304, 1.0
  %v1308 = vadd.f32 %v1306, 1.0
  %v1309 = vrcp.pop %v1307
  %v1310 = vmul.f32 1.0, %v1309
  %v1311 = vrcp.pop %v1308
  %v1312 = vmul.f32 1.0, %v1311
  %v1313 = vtanh.pop %v1299
  %v1314 = vtanh.pop %v1300
  %v1317 = vrot.slane %v1189, 7
  %v1318 = vrot.slane %v1190, 7
  %v1321 = vmul.f32 %v1310, %v1317
  %v1322 = vmul.f32 %v1312, %v1318
  %1325 = vrot.lane.b32.xlu0 %v1313, 64
  %v1326 = vpop.permute.xlu0 %1325
  %1327 = vrot.lane.b32.xlu0 %v1314, 64
  %v1328 = vpop.permute.xlu0 %1327
  %v1331 = vmul.f32 %v1310, %v1326
  %v1332 = vmul.f32 %v1312, %v1328
  %1335 = vrot.lane.b32.xlu0 %v1331, 32
  %v1336 = vpop.permute.xlu0 %1335
  %1337 = vrot.lane.b32.xlu0 %v1332, 32
  %v1338 = vpop.permute.xlu0 %1337
  %v1341 = vadd.f32 %v1321, %v1336
  %v1342 = vadd.f32 %v1322, %v1338
  %v1343 = vtanh.pop %v1341
  %v1344 = vtanh.pop %v1342
  %1347 = vrot.lane.b32.xlu0 %v1343, 64
  %v1348 = vpop.permute.xlu0 %1347
  %1349 = vrot.lane.b32.xlu0 %v1344, 64
  %v1350 = vpop.permute.xlu0 %1349
  %v1353 = vmul.f32 %v1310, %v1348
  %v1354 = vmul.f32 %v1312, %v1350
  %1357 = vrot.lane.b32.xlu0 %v1353, 32
  %v1358 = vpop.permute.xlu0 %1357
  %1359 = vrot.lane.b32.xlu0 %v1354, 32
  %v1360 = vpop.permute.xlu0 %1359
  %vm1363 = vcmask 254977
  %1364 = vst.msk [vmem:[#allocation2] sm:$0x2] %vm1363, %v1358
  %1365 = vst.msk [vmem:[#allocation2 + $0x8] sm:$0x2] %vm1363, %v1360
  %v1366 = vld [vmem:[%s10] sm:$0xff]
  %v1367 = vld [vmem:[%s10 + $0x8] sm:$0xff]
  %v1368 = vld [vmem:[%s10 + $0x10] sm:$0xff]
  %v1369 = vld [vmem:[%s10 + $0x18] sm:$0xff]
  %v1370 = vrot.slane %v1353, 1
  %v1371 = vsel %vm1219, %v1354, %v1370
  %1372 = vrot.lane.b32.xlu0 %v1371, 32
  %v1373 = vpop.permute.xlu0 %1372
  %v1374 = vsel %vm66, %v1373, 0
  %1376 = vmatprep.subr.mxu0 0.0
  %1377 = vmatpush1.msra.mxu0 %v1366
  %1378 = vmatprep.subr.mxu0 0.0
  %1379 = vmatpush1.msra.mxu0 %v1367
  %1380 = vmatprep.subr.mxu0 0.0
  %1381 = vmatpush1.msra.mxu0 %v1368
  %1382 = vmatprep.subr.mxu0 0.0
  %1383 = vmatpush1.msra.mxu0 %v1369
  %1384 = vmatprep.subr.mxu0 0.0
  %1385 = vmatpush1.msra.mxu0 0.0
  %1386 = vmatprep.subr.mxu0 0.0
  %1387 = vmatpush1.msra.mxu0 0.0
  %1388 = vmatprep.subr.mxu0 0.0
  %1389 = vmatpush1.msra.mxu0 0.0
  %1390 = vmatprep.subr.mxu0 0.0
  %1391 = vmatpush1.msra.mxu0 0.0
  %1392 = vmatprep.subr.mxu0 0.0
  %1393 = vmatpush1.msra.mxu0 0.0
  %1394 = vmatprep.subr.mxu0 0.0
  %1395 = vmatpush1.msra.mxu0 0.0
  %1396 = vmatprep.subr.mxu0 0.0
  %1397 = vmatpush1.msra.mxu0 0.0
  %1398 = vmatprep.subr.mxu0 0.0
  %1399 = vmatpush1.msra.mxu0 0.0
  %1400 = vmatprep.subr.mxu0 0.0
  %1401 = vmatpush1.msra.mxu0 0.0
  %1402 = vmatprep.subr.mxu0 0.0
  %1403 = vmatpush1.msra.mxu0 0.0
  %1404 = vmatprep.subr.mxu0 0.0
  %1405 = vmatpush1.msra.mxu0 0.0
  %1406 = vmatprep.subr.mxu0 0.0
  %1407 = vmatpush1.msra.mxu0 0.0
  %1408 = vmatprep.subr.mxu0 0.0
  %1409 = vmatpush1.msra.mxu0 0.0
  %1410 = vmatprep.subr.mxu0 0.0
  %1411 = vmatpush1.msra.mxu0 0.0
  %1412 = vmatprep.subr.mxu0 0.0
  %1413 = vmatpush1.msra.mxu0 0.0
  %1414 = vmatprep.subr.mxu0 0.0
  %1415 = vmatpush1.msra.mxu0 0.0
  %1416 = vmatprep.subr.mxu0 0.0
  %1417 = vmatpush1.msra.mxu0 0.0
  %1418 = vmatprep.subr.mxu0 0.0
  %1419 = vmatpush1.msra.mxu0 0.0
  %1420 = vmatprep.subr.mxu0 0.0
  %1421 = vmatpush1.msra.mxu0 0.0
  %1422 = vmatprep.subr.mxu0 0.0
  %1423 = vmatpush1.msra.mxu0 0.0
  %1424 = vmatprep.subr.mxu0 0.0
  %1425 = vmatpush1.msra.mxu0 0.0
  %1426 = vmatprep.subr.mxu0 0.0
  %1427 = vmatpush1.msra.mxu0 0.0
  %1428 = vmatprep.subr.mxu0 0.0
  %1429 = vmatpush1.msra.mxu0 0.0
  %1430 = vmatprep.subr.mxu0 0.0
  %1431 = vmatpush1.msra.mxu0 0.0
  %1432 = vmatprep.subr.mxu0 0.0
  %1433 = vmatpush1.msra.mxu0 0.0
  %1434 = vmatprep.subr.mxu0 0.0
  %1435 = vmatpush1.msra.mxu0 0.0
  %1436 = vmatprep.subr.mxu0 0.0
  %1437 = vmatpush1.msra.mxu0 0.0
  %1438 = vmatprep.subr.mxu0 0.0
  %1439 = vmatpush1.msra.mxu0 0.0
  %1440 = vmatprep.mubr.f32.mxu0 0.0
  %1441 = vmatmul.mubr.f32.gmra.mrb[0].mxu0 %v1374
  %v1442 = vpop.f32.mrb[0].mxu0
  %v1443 = vadd.f32 0.0, %v1442
  %v1444 = vpop.f32.mrb[0].mxu0
  %1445 = vdwg.mxu0
  %v1447 = vrot.slane %v1443, 6
  %v1448 = vrot.slane %v1443, 7
  %v1451 = vadd.f32 %v1064, %v1447
  %v1452 = vadd.f32 %v1069, %v1448
  %v1453 = vxor.u32 %v1451, 2147483648
  %v1454 = vxor.u32 %v1452, 2147483648
  %v1455 = vmul.f32 %v1453, 1.442695
  %v1456 = vpow.pop %v1455
  %v1457 = vmul.f32 %v1454, 1.442695
  %v1458 = vpow.pop %v1457
  %v1459 = vadd.f32 %v1456, 1.0
  %v1460 = vadd.f32 %v1458, 1.0
  %v1461 = vrcp.pop %v1459
  %v1462 = vmul.f32 1.0, %v1461
  %v1463 = vrcp.pop %v1460
  %v1464 = vmul.f32 1.0, %v1463
  %v1465 = vtanh.pop %v1451
  %v1466 = vtanh.pop %v1452
  %v1469 = vrot.slane %v1341, 7
  %v1470 = vrot.slane %v1342, 7
  %v1473 = vmul.f32 %v1462, %v1469
  %v1474 = vmul.f32 %v1464, %v1470
  %1477 = vrot.lane.b32.xlu0 %v1465, 64
  %v1478 = vpop.permute.xlu0 %1477
  %1479 = vrot.lane.b32.xlu0 %v1466, 64
  %v1480 = vpop.permute.xlu0 %1479
  %v1483 = vmul.f32 %v1462, %v1478
  %v1484 = vmul.f32 %v1464, %v1480
  %1487 = vrot.lane.b32.xlu0 %v1483, 32
  %v1488 = vpop.permute.xlu0 %1487
  %1489 = vrot.lane.b32.xlu0 %v1484, 32
  %v1490 = vpop.permute.xlu0 %1489
  %v1493 = vadd.f32 %v1473, %v1488
  %v1494 = vadd.f32 %v1474, %v1490
  %v1495 = vtanh.pop %v1493
  %v1496 = vtanh.pop %v1494
  %1499 = vrot.lane.b32.xlu0 %v1495, 64
  %v1500 = vpop.permute.xlu0 %1499
  %1501 = vrot.lane.b32.xlu0 %v1496, 64
  %v1502 = vpop.permute.xlu0 %1501
  %v1505 = vmul.f32 %v1462, %v1500
  %v1506 = vmul.f32 %v1464, %v1502
  %1509 = vrot.lane.b32.xlu0 %v1505, 32
  %v1510 = vpop.permute.xlu0 %1509
  %1511 = vrot.lane.b32.xlu0 %v1506, 32
  %v1512 = vpop.permute.xlu0 %1511
  %vm1515 = vcmask 256002
  %1516 = vst.msk [vmem:[#allocation2] sm:$0x4] %vm1515, %v1510
  %1517 = vst.msk [vmem:[#allocation2 + $0x8] sm:$0x4] %vm1515, %v1512
  %v1518 = vld [vmem:[%s10] sm:$0xff]
  %v1519 = vld [vmem:[%s10 + $0x8] sm:$0xff]
  %v1520 = vld [vmem:[%s10 + $0x10] sm:$0xff]
  %v1521 = vld [vmem:[%s10 + $0x18] sm:$0xff]
  %v1522 = vrot.slane %v1505, 2
  %v1523 = vrot.slane %v1506, 1
  %v1524 = vsel %vm1219, %v1523, %v1522
  %1525 = vrot.lane.b32.xlu0 %v1524, 32
  %v1526 = vpop.permute.xlu0 %1525
  %v1527 = vsel %vm66, %v1526, 0
  %1529 = vmatprep.subr.mxu0 0.0
  %1530 = vmatpush1.msra.mxu0 %v1518
  %1531 = vmatprep.subr.mxu0 0.0
  %1532 = vmatpush1.msra.mxu0 %v1519
  %1533 = vmatprep.subr.mxu0 0.0
  %1534 = vmatpush1.msra.mxu0 %v1520
  %1535 = vmatprep.subr.mxu0 0.0
  %1536 = vmatpush1.msra.mxu0 %v1521
  %1537 = vmatprep.subr.mxu0 0.0
  %1538 = vmatpush1.msra.mxu0 0.0
  %1539 = vmatprep.subr.mxu0 0.0
  %1540 = vmatpush1.msra.mxu0 0.0
  %1541 = vmatprep.subr.mxu0 0.0
  %1542 = vmatpush1.msra.mxu0 0.0
  %1543 = vmatprep.subr.mxu0 0.0
  %1544 = vmatpush1.msra.mxu0 0.0
  %1545 = vmatprep.subr.mxu0 0.0
  %1546 = vmatpush1.msra.mxu0 0.0
  %1547 = vmatprep.subr.mxu0 0.0
  %1548 = vmatpush1.msra.mxu0 0.0
  %1549 = vmatprep.subr.mxu0 0.0
  %1550 = vmatpush1.msra.mxu0 0.0
  %1551 = vmatprep.subr.mxu0 0.0
  %1552 = vmatpush1.msra.mxu0 0.0
  %1553 = vmatprep.subr.mxu0 0.0
  %1554 = vmatpush1.msra.mxu0 0.0
  %1555 = vmatprep.subr.mxu0 0.0
  %1556 = vmatpush1.msra.mxu0 0.0
  %1557 = vmatprep.subr.mxu0 0.0
  %1558 = vmatpush1.msra.mxu0 0.0
  %1559 = vmatprep.subr.mxu0 0.0
  %1560 = vmatpush1.msra.mxu0 0.0
  %1561 = vmatprep.subr.mxu0 0.0
  %1562 = vmatpush1.msra.mxu0 0.0
  %1563 = vmatprep.subr.mxu0 0.0
  %1564 = vmatpush1.msra.mxu0 0.0
  %1565 = vmatprep.subr.mxu0 0.0
  %1566 = vmatpush1.msra.mxu0 0.0
  %1567 = vmatprep.subr.mxu0 0.0
  %1568 = vmatpush1.msra.mxu0 0.0
  %1569 = vmatprep.subr.mxu0 0.0
  %1570 = vmatpush1.msra.mxu0 0.0
  %1571 = vmatprep.subr.mxu0 0.0
  %1572 = vmatpush1.msra.mxu0 0.0
  %1573 = vmatprep.subr.mxu0 0.0
  %1574 = vmatpush1.msra.mxu0 0.0
  %1575 = vmatprep.subr.mxu0 0.0
  %1576 = vmatpush1.msra.mxu0 0.0
  %1577 = vmatprep.subr.mxu0 0.0
  %1578 = vmatpush1.msra.mxu0 0.0
  %1579 = vmatprep.subr.mxu0 0.0
  %1580 = vmatpush1.msra.mxu0 0.0
  %1581 = vmatprep.subr.mxu0 0.0
  %1582 = vmatpush1.msra.mxu0 0.0
  %1583 = vmatprep.subr.mxu0 0.0
  %1584 = vmatpush1.msra.mxu0 0.0
  %1585 = vmatprep.subr.mxu0 0.0
  %1586 = vmatpush1.msra.mxu0 0.0
  %1587 = vmatprep.subr.mxu0 0.0
  %1588 = vmatpush1.msra.mxu0 0.0
  %1589 = vmatprep.subr.mxu0 0.0
  %1590 = vmatpush1.msra.mxu0 0.0
  %1591 = vmatprep.subr.mxu0 0.0
  %1592 = vmatpush1.msra.mxu0 0.0
  %1593 = vmatprep.mubr.f32.mxu0 0.0
  %1594 = vmatmul.mubr.f32.gmra.mrb[0].mxu0 %v1527
  %v1595 = vpop.f32.mrb[0].mxu0
  %v1596 = vadd.f32 0.0, %v1595
  %v1597 = vpop.f32.mrb[0].mxu0
  %1598 = vdwg.mxu0
  %v1600 = vrot.slane %v1596, 5
  %v1601 = vrot.slane %v1596, 6
  %v1604 = vadd.f32 %v1064, %v1600
  %v1605 = vadd.f32 %v1069, %v1601
  %v1606 = vxor.u32 %v1604, 2147483648
  %v1607 = vxor.u32 %v1605, 2147483648
  %v1608 = vmul.f32 %v1606, 1.442695
  %v1609 = vpow.pop %v1608
  %v1610 = vmul.f32 %v1607, 1.442695
  %v1611 = vpow.pop %v1610
  %v1612 = vadd.f32 %v1609, 1.0
  %v1613 = vadd.f32 %v1611, 1.0
  %v1614 = vrcp.pop %v1612
  %v1615 = vmul.f32 1.0, %v1614
  %v1616 = vrcp.pop %v1613
  %v1617 = vmul.f32 1.0, %v1616
  %v1618 = vtanh.pop %v1604
  %v1619 = vtanh.pop %v1605
  %v1622 = vrot.slane %v1493, 7
  %v1623 = vrot.slane %v1494, 7
  %v1626 = vmul.f32 %v1615, %v1622
  %v1627 = vmul.f32 %v1617, %v1623
  %1630 = vrot.lane.b32.xlu0 %v1618, 64
  %v1631 = vpop.permute.xlu0 %1630
  %1632 = vrot.lane.b32.xlu0 %v1619, 64
  %v1633 = vpop.permute.xlu0 %1632
  %v1636 = vmul.f32 %v1615, %v1631
  %v1637 = vmul.f32 %v1617, %v1633
  %1640 = vrot.lane.b32.xlu0 %v1636, 32
  %v1641 = vpop.permute.xlu0 %1640
  %1642 = vrot.lane.b32.xlu0 %v1637, 32
  %v1643 = vpop.permute.xlu0 %1642
  %v1646 = vadd.f32 %v1626, %v1641
  %v1647 = vadd.f32 %v1627, %v1643
  %v1648 = vtanh.pop %v1646
  %v1649 = vtanh.pop %v1647
  %1652 = vrot.lane.b32.xlu0 %v1648, 64
  %v1653 = vpop.permute.xlu0 %1652
  %1654 = vrot.lane.b32.xlu0 %v1649, 64
  %v1655 = vpop.permute.xlu0 %1654
  %v1658 = vmul.f32 %v1615, %v1653
  %v1659 = vmul.f32 %v1617, %v1655
  %1662 = vrot.lane.b32.xlu0 %v1658, 32
  %v1663 = vpop.permute.xlu0 %1662
  %1664 = vrot.lane.b32.xlu0 %v1659, 32
  %v1665 = vpop.permute.xlu0 %1664
  %vm1668 = vcmask 257027
  %1669 = vst.msk [vmem:[#allocation2] sm:$0x8] %vm1668, %v1663
  %1670 = vst.msk [vmem:[#allocation2 + $0x8] sm:$0x8] %vm1668, %v1665
  %v1671 = vld [vmem:[%s10] sm:$0xff]
  %v1672 = vld [vmem:[%s10 + $0x8] sm:$0xff]
  %v1673 = vld [vmem:[%s10 + $0x10] sm:$0xff]
  %v1674 = vld [vmem:[%s10 + $0x18] sm:$0xff]
  %v1675 = vrot.slane %v1658, 3
  %v1676 = vrot.slane %v1659, 2
  %v1677 = vsel %vm1219, %v1676, %v1675
  %1678 = vrot.lane.b32.xlu0 %v1677, 32
  %v1679 = vpop.permute.xlu0 %1678
  %v1680 = vsel %vm66, %v1679, 0
  %1682 = vmatprep.subr.mxu0 0.0
  %1683 = vmatpush1.msra.mxu0 %v1671
  %1684 = vmatprep.subr.mxu0 0.0
  %1685 = vmatpush1.msra.mxu0 %v1672
  %1686 = vmatprep.subr.mxu0 0.0
  %1687 = vmatpush1.msra.mxu0 %v1673
  %1688 = vmatprep.subr.mxu0 0.0
  %1689 = vmatpush1.msra.mxu0 %v1674
  %1690 = vmatprep.subr.mxu0 0.0
  %1691 = vmatpush1.msra.mxu0 0.0
  %1692 = vmatprep.subr.mxu0 0.0
  %1693 = vmatpush1.msra.mxu0 0.0
  %1694 = vmatprep.subr.mxu0 0.0
  %1695 = vmatpush1.msra.mxu0 0.0
  %1696 = vmatprep.subr.mxu0 0.0
  %1697 = vmatpush1.msra.mxu0 0.0
  %1698 = vmatprep.subr.mxu0 0.0
  %1699 = vmatpush1.msra.mxu0 0.0
  %1700 = vmatprep.subr.mxu0 0.0
  %1701 = vmatpush1.msra.mxu0 0.0
  %1702 = vmatprep.subr.mxu0 0.0
  %1703 = vmatpush1.msra.mxu0 0.0
  %1704 = vmatprep.subr.mxu0 0.0
  %1705 = vmatpush1.msra.mxu0 0.0
  %1706 = vmatprep.subr.mxu0 0.0
  %1707 = vmatpush1.msra.mxu0 0.0
  %1708 = vmatprep.subr.mxu0 0.0
  %1709 = vmatpush1.msra.mxu0 0.0
  %1710 = vmatprep.subr.mxu0 0.0
  %1711 = vmatpush1.msra.mxu0 0.0
  %1712 = vmatprep.subr.mxu0 0.0
  %1713 = vmatpush1.msra.mxu0 0.0
  %1714 = vmatprep.subr.mxu0 0.0
  %1715 = vmatpush1.msra.mxu0 0.0
  %1716 = vmatprep.subr.mxu0 0.0
  %1717 = vmatpush1.msra.mxu0 0.0
  %1718 = vmatprep.subr.mxu0 0.0
  %1719 = vmatpush1.msra.mxu0 0.0
  %1720 = vmatprep.subr.mxu0 0.0
  %1721 = vmatpush1.msra.mxu0 0.0
  %1722 = vmatprep.subr.mxu0 0.0
  %1723 = vmatpush1.msra.mxu0 0.0
  %1724 = vmatprep.subr.mxu0 0.0
  %1725 = vmatpush1.msra.mxu0 0.0
  %1726 = vmatprep.subr.mxu0 0.0
  %1727 = vmatpush1.msra.mxu0 0.0
  %1728 = vmatprep.subr.mxu0 0.0
  %1729 = vmatpush1.msra.mxu0 0.0
  %1730 = vmatprep.subr.mxu0 0.0
  %1731 = vmatpush1.msra.mxu0 0.0
  %1732 = vmatprep.subr.mxu0 0.0
  %1733 = vmatpush1.msra.mxu0 0.0
  %1734 = vmatprep.subr.mxu0 0.0
  %1735 = vmatpush1.msra.mxu0 0.0
  %1736 = vmatprep.subr.mxu0 0.0
  %1737 = vmatpush1.msra.mxu0 0.0
  %1738 = vmatprep.subr.mxu0 0.0
  %1739 = vmatpush1.msra.mxu0 0.0
  %1740 = vmatprep.subr.mxu0 0.0
  %1741 = vmatpush1.msra.mxu0 0.0
  %1742 = vmatprep.subr.mxu0 0.0
  %1743 = vmatpush1.msra.mxu0 0.0
  %1744 = vmatprep.subr.mxu0 0.0
  %1745 = vmatpush1.msra.mxu0 0.0
  %1746 = vmatprep.mubr.f32.mxu0 0.0
  %1747 = vmatmul.mubr.f32.gmra.mrb[0].mxu0 %v1680
  %v1748 = vpop.f32.mrb[0].mxu0
  %v1749 = vadd.f32 0.0, %v1748
  %v1750 = vpop.f32.mrb[0].mxu0
  %1751 = vdwg.mxu0
  %v1753 = vrot.slane %v1749, 4
  %v1754 = vrot.slane %v1749, 5
  %v1757 = vadd.f32 %v1064, %v1753
  %v1758 = vadd.f32 %v1069, %v1754
  %v1759 = vxor.u32 %v1757, 2147483648
  %v1760 = vxor.u32 %v1758, 2147483648
  %v1761 = vmul.f32 %v1759, 1.442695
  %v1762 = vpow.pop %v1761
  %v1763 = vmul.f32 %v1760, 1.442695
  %v1764 = vpow.pop %v1763
  %v1765 = vadd.f32 %v1762, 1.0
  %v1766 = vadd.f32 %v1764, 1.0
  %v1767 = vrcp.pop %v1765
  %v1768 = vmul.f32 1.0, %v1767
  %v1769 = vrcp.pop %v1766
  %v1770 = vmul.f32 1.0, %v1769
  %v1771 = vtanh.pop %v1757
  %v1772 = vtanh.pop %v1758
  %v1775 = vrot.slane %v1646, 7
  %v1776 = vrot.slane %v1647, 7
  %v1779 = vmul.f32 %v1768, %v1775
  %v1780 = vmul.f32 %v1770, %v1776
  %1783 = vrot.lane.b32.xlu0 %v1771, 64
  %v1784 = vpop.permute.xlu0 %1783
  %1785 = vrot.lane.b32.xlu0 %v1772, 64
  %v1786 = vpop.permute.xlu0 %1785
  %v1789 = vmul.f32 %v1768, %v1784
  %v1790 = vmul.f32 %v1770, %v1786
  %1793 = vrot.lane.b32.xlu0 %v1789, 32
  %v1794 = vpop.permute.xlu0 %1793
  %1795 = vrot.lane.b32.xlu0 %v1790, 32
  %v1796 = vpop.permute.xlu0 %1795
  %v1799 = vadd.f32 %v1779, %v1794
  %v1800 = vadd.f32 %v1780, %v1796
  %v1801 = vtanh.pop %v1799
  %v1802 = vtanh.pop %v1800
  %1805 = vrot.lane.b32.xlu0 %v1801, 64
  %v1806 = vpop.permute.xlu0 %1805
  %1807 = vrot.lane.b32.xlu0 %v1802, 64
  %v1808 = vpop.permute.xlu0 %1807
  %v1811 = vmul.f32 %v1768, %v1806
  %v1812 = vmul.f32 %v1770, %v1808
  %1815 = vrot.lane.b32.xlu0 %v1811, 32
  %v1816 = vpop.permute.xlu0 %1815
  %1817 = vrot.lane.b32.xlu0 %v1812, 32
  %v1818 = vpop.permute.xlu0 %1817
  %vm1821 = vcmask 258052
  %1822 = vst.msk [vmem:[#allocation2] sm:$0x10] %vm1821, %v1816
  %1823 = vst.msk [vmem:[#allocation2 + $0x8] sm:$0x10] %vm1821, %v1818
  %v1824 = vld [vmem:[%s10] sm:$0xff]
  %v1825 = vld [vmem:[%s10 + $0x8] sm:$0xff]
  %v1826 = vld [vmem:[%s10 + $0x10] sm:$0xff]
  %v1827 = vld [vmem:[%s10 + $0x18] sm:$0xff]
  %v1828 = vrot.slane %v1811, 4
  %v1829 = vrot.slane %v1812, 3
  %v1830 = vsel %vm1219, %v1829, %v1828
  %1831 = vrot.lane.b32.xlu0 %v1830, 32
  %v1832 = vpop.permute.xlu0 %1831
  %v1833 = vsel %vm66, %v1832, 0
  %1835 = vmatprep.subr.mxu0 0.0
  %1836 = vmatpush1.msra.mxu0 %v1824
  %1837 = vmatprep.subr.mxu0 0.0
  %1838 = vmatpush1.msra.mxu0 %v1825
  %1839 = vmatprep.subr.mxu0 0.0
  %1840 = vmatpush1.msra.mxu0 %v1826
  %1841 = vmatprep.subr.mxu0 0.0
  %1842 = vmatpush1.msra.mxu0 %v1827
  %1843 = vmatprep.subr.mxu0 0.0
  %1844 = vmatpush1.msra.mxu0 0.0
  %1845 = vmatprep.subr.mxu0 0.0
  %1846 = vmatpush1.msra.mxu0 0.0
  %1847 = vmatprep.subr.mxu0 0.0
  %1848 = vmatpush1.msra.mxu0 0.0
  %1849 = vmatprep.subr.mxu0 0.0
  %1850 = vmatpush1.msra.mxu0 0.0
  %1851 = vmatprep.subr.mxu0 0.0
  %1852 = vmatpush1.msra.mxu0 0.0
  %1853 = vmatprep.subr.mxu0 0.0
  %1854 = vmatpush1.msra.mxu0 0.0
  %1855 = vmatprep.subr.mxu0 0.0
  %1856 = vmatpush1.msra.mxu0 0.0
  %1857 = vmatprep.subr.mxu0 0.0
  %1858 = vmatpush1.msra.mxu0 0.0
  %1859 = vmatprep.subr.mxu0 0.0
  %1860 = vmatpush1.msra.mxu0 0.0
  %1861 = vmatprep.subr.mxu0 0.0
  %1862 = vmatpush1.msra.mxu0 0.0
  %1863 = vmatprep.subr.mxu0 0.0
  %1864 = vmatpush1.msra.mxu0 0.0
  %1865 = vmatprep.subr.mxu0 0.0
  %1866 = vmatpush1.msra.mxu0 0.0
  %1867 = vmatprep.subr.mxu0 0.0
  %1868 = vmatpush1.msra.mxu0 0.0
  %1869 = vmatprep.subr.mxu0 0.0
  %1870 = vmatpush1.msra.mxu0 0.0
  %1871 = vmatprep.subr.mxu0 0.0
  %1872 = vmatpush1.msra.mxu0 0.0
  %1873 = vmatprep.subr.mxu0 0.0
  %1874 = vmatpush1.msra.mxu0 0.0
  %1875 = vmatprep.subr.mxu0 0.0
  %1876 = vmatpush1.msra.mxu0 0.0
  %1877 = vmatprep.subr.mxu0 0.0
  %1878 = vmatpush1.msra.mxu0 0.0
  %1879 = vmatprep.subr.mxu0 0.0
  %1880 = vmatpush1.msra.mxu0 0.0
  %1881 = vmatprep.subr.mxu0 0.0
  %1882 = vmatpush1.msra.mxu0 0.0
  %1883 = vmatprep.subr.mxu0 0.0
  %1884 = vmatpush1.msra.mxu0 0.0
  %1885 = vmatprep.subr.mxu0 0.0
  %1886 = vmatpush1.msra.mxu0 0.0
  %1887 = vmatprep.subr.mxu0 0.0
  %1888 = vmatpush1.msra.mxu0 0.0
  %1889 = vmatprep.subr.mxu0 0.0
  %1890 = vmatpush1.msra.mxu0 0.0
  %1891 = vmatprep.subr.mxu0 0.0
  %1892 = vmatpush1.msra.mxu0 0.0
  %1893 = vmatprep.subr.mxu0 0.0
  %1894 = vmatpush1.msra.mxu0 0.0
  %1895 = vmatprep.subr.mxu0 0.0
  %1896 = vmatpush1.msra.mxu0 0.0
  %1897 = vmatprep.subr.mxu0 0.0
  %1898 = vmatpush1.msra.mxu0 0.0
  %1899 = vmatprep.mubr.f32.mxu0 0.0
  %1900 = vmatmul.mubr.f32.gmra.mrb[0].mxu0 %v1833
  %v1901 = vpop.f32.mrb[0].mxu0
  %v1902 = vadd.f32 0.0, %v1901
  %v1903 = vpop.f32.mrb[0].mxu0
  %1904 = vdwg.mxu0
  %v1906 = vrot.slane %v1902, 3
  %v1907 = vrot.slane %v1902, 4
  %v1910 = vadd.f32 %v1064, %v1906
  %v1911 = vadd.f32 %v1069, %v1907
  %v1912 = vxor.u32 %v1910, 2147483648
  %v1913 = vxor.u32 %v1911, 2147483648
  %v1914 = vmul.f32 %v1912, 1.442695
  %v1915 = vpow.pop %v1914
  %v1916 = vmul.f32 %v1913, 1.442695
  %v1917 = vpow.pop %v1916
  %v1918 = vadd.f32 %v1915, 1.0
  %v1919 = vadd.f32 %v1917, 1.0
  %v1920 = vrcp.pop %v1918
  %v1921 = vmul.f32 1.0, %v1920
  %v1922 = vrcp.pop %v1919
  %v1923 = vmul.f32 1.0, %v1922
  %v1924 = vtanh.pop %v1910
  %v1925 = vtanh.pop %v1911
  %v1928 = vrot.slane %v1799, 7
  %v1929 = vrot.slane %v1800, 7
  %v1932 = vmul.f32 %v1921, %v1928
  %v1933 = vmul.f32 %v1923, %v1929
  %1936 = vrot.lane.b32.xlu0 %v1924, 64
  %v1937 = vpop.permute.xlu0 %1936
  %1938 = vrot.lane.b32.xlu0 %v1925, 64
  %v1939 = vpop.permute.xlu0 %1938
  %v1942 = vmul.f32 %v1921, %v1937
  %v1943 = vmul.f32 %v1923, %v1939
  %1946 = vrot.lane.b32.xlu0 %v1942, 32
  %v1947 = vpop.permute.xlu0 %1946
  %1948 = vrot.lane.b32.xlu0 %v1943, 32
  %v1949 = vpop.permute.xlu0 %1948
  %v1952 = vadd.f32 %v1932, %v1947
  %v1953 = vadd.f32 %v1933, %v1949
  %v1954 = vtanh.pop %v1952
  %v1955 = vtanh.pop %v1953
  %1958 = vrot.lane.b32.xlu0 %v1954, 64
  %v1959 = vpop.permute.xlu0 %1958
  %1960 = vrot.lane.b32.xlu0 %v1955, 64
  %v1961 = vpop.permute.xlu0 %1960
  %v1964 = vmul.f32 %v1921, %v1959
  %v1965 = vmul.f32 %v1923, %v1961
  %1968 = vrot.lane.b32.xlu0 %v1964, 32
  %v1969 = vpop.permute.xlu0 %1968
  %1970 = vrot.lane.b32.xlu0 %v1965, 32
  %v1971 = vpop.permute.xlu0 %1970
  %vm1974 = vcmask 259077
  %1975 = vst.msk [vmem:[#allocation2] sm:$0x20] %vm1974, %v1969
  %1976 = vst.msk [vmem:[#allocation2 + $0x8] sm:$0x20] %vm1974, %v1971
  %v1977 = vld [vmem:[%s10] sm:$0xff]
  %v1978 = vld [vmem:[%s10 + $0x8] sm:$0xff]
  %v1979 = vld [vmem:[%s10 + $0x10] sm:$0xff]
  %v1980 = vld [vmem:[%s10 + $0x18] sm:$0xff]
  %v1981 = vrot.slane %v1964, 5
  %v1982 = vrot.slane %v1965, 4
  %v1983 = vsel %vm1219, %v1982, %v1981
  %1984 = vrot.lane.b32.xlu0 %v1983, 32
  %v1985 = vpop.permute.xlu0 %1984
  %v1986 = vsel %vm66, %v1985, 0
  %1988 = vmatprep.subr.mxu0 0.0
  %1989 = vmatpush1.msra.mxu0 %v1977
  %1990 = vmatprep.subr.mxu0 0.0
  %1991 = vmatpush1.msra.mxu0 %v1978
  %1992 = vmatprep.subr.mxu0 0.0
  %1993 = vmatpush1.msra.mxu0 %v1979
  %1994 = vmatprep.subr.mxu0 0.0
  %1995 = vmatpush1.msra.mxu0 %v1980
  %1996 = vmatprep.subr.mxu0 0.0
  %1997 = vmatpush1.msra.mxu0 0.0
  %1998 = vmatprep.subr.mxu0 0.0
  %1999 = vmatpush1.msra.mxu0 0.0
  %2000 = vmatprep.subr.mxu0 0.0
  %2001 = vmatpush1.msra.mxu0 0.0
  %2002 = vmatprep.subr.mxu0 0.0
  %2003 = vmatpush1.msra.mxu0 0.0
  %2004 = vmatprep.subr.mxu0 0.0
  %2005 = vmatpush1.msra.mxu0 0.0
  %2006 = vmatprep.subr.mxu0 0.0
  %2007 = vmatpush1.msra.mxu0 0.0
  %2008 = vmatprep.subr.mxu0 0.0
  %2009 = vmatpush1.msra.mxu0 0.0
  %2010 = vmatprep.subr.mxu0 0.0
  %2011 = vmatpush1.msra.mxu0 0.0
  %2012 = vmatprep.subr.mxu0 0.0
  %2013 = vmatpush1.msra.mxu0 0.0
  %2014 = vmatprep.subr.mxu0 0.0
  %2015 = vmatpush1.msra.mxu0 0.0
  %2016 = vmatprep.subr.mxu0 0.0
  %2017 = vmatpush1.msra.mxu0 0.0
  %2018 = vmatprep.subr.mxu0 0.0
  %2019 = vmatpush1.msra.mxu0 0.0
  %2020 = vmatprep.subr.mxu0 0.0
  %2021 = vmatpush1.msra.mxu0 0.0
  %2022 = vmatprep.subr.mxu0 0.0
  %2023 = vmatpush1.msra.mxu0 0.0
  %2024 = vmatprep.subr.mxu0 0.0
  %2025 = vmatpush1.msra.mxu0 0.0
  %2026 = vmatprep.subr.mxu0 0.0
  %2027 = vmatpush1.msra.mxu0 0.0
  %2028 = vmatprep.subr.mxu0 0.0
  %2029 = vmatpush1.msra.mxu0 0.0
  %2030 = vmatprep.subr.mxu0 0.0
  %2031 = vmatpush1.msra.mxu0 0.0
  %2032 = vmatprep.subr.mxu0 0.0
  %2033 = vmatpush1.msra.mxu0 0.0
  %2034 = vmatprep.subr.mxu0 0.0
  %2035 = vmatpush1.msra.mxu0 0.0
  %2036 = vmatprep.subr.mxu0 0.0
  %2037 = vmatpush1.msra.mxu0 0.0
  %2038 = vmatprep.subr.mxu0 0.0
  %2039 = vmatpush1.msra.mxu0 0.0
  %2040 = vmatprep.subr.mxu0 0.0
  %2041 = vmatpush1.msra.mxu0 0.0
  %2042 = vmatprep.subr.mxu0 0.0
  %2043 = vmatpush1.msra.mxu0 0.0
  %2044 = vmatprep.subr.mxu0 0.0
  %2045 = vmatpush1.msra.mxu0 0.0
  %2046 = vmatprep.subr.mxu0 0.0
  %2047 = vmatpush1.msra.mxu0 0.0
  %2048 = vmatprep.subr.mxu0 0.0
  %2049 = vmatpush1.msra.mxu0 0.0
  %2050 = vmatprep.subr.mxu0 0.0
  %2051 = vmatpush1.msra.mxu0 0.0
  %2052 = vmatprep.mubr.f32.mxu0 0.0
  %2053 = vmatmul.mubr.f32.gmra.mrb[0].mxu0 %v1986
  %v2054 = vpop.f32.mrb[0].mxu0
  %v2055 = vadd.f32 0.0, %v2054
  %v2056 = vpop.f32.mrb[0].mxu0
  %2057 = vdwg.mxu0
  %v2059 = vrot.slane %v2055, 2
  %v2060 = vrot.slane %v2055, 3
  %v2063 = vadd.f32 %v1064, %v2059
  %v2064 = vadd.f32 %v1069, %v2060
  %v2065 = vxor.u32 %v2063, 2147483648
  %v2066 = vxor.u32 %v2064, 2147483648
  %v2067 = vmul.f32 %v2065, 1.442695
  %v2068 = vpow.pop %v2067
  %v2069 = vmul.f32 %v2066, 1.442695
  %v2070 = vpow.pop %v2069
  %v2071 = vadd.f32 %v2068, 1.0
  %v2072 = vadd.f32 %v2070, 1.0
  %v2073 = vrcp.pop %v2071
  %v2074 = vmul.f32 1.0, %v2073
  %v2075 = vrcp.pop %v2072
  %v2076 = vmul.f32 1.0, %v2075
  %v2077 = vtanh.pop %v2063
  %v2078 = vtanh.pop %v2064
  %v2081 = vrot.slane %v1952, 7
  %v2082 = vrot.slane %v1953, 7
  %v2085 = vmul.f32 %v2074, %v2081
  %v2086 = vmul.f32 %v2076, %v2082
  %2089 = vrot.lane.b32.xlu0 %v2077, 64
  %v2090 = vpop.permute.xlu0 %2089
  %2091 = vrot.lane.b32.xlu0 %v2078, 64
  %v2092 = vpop.permute.xlu0 %2091
  %v2095 = vmul.f32 %v2074, %v2090
  %v2096 = vmul.f32 %v2076, %v2092
  %2099 = vrot.lane.b32.xlu0 %v2095, 32
  %v2100 = vpop.permute.xlu0 %2099
  %2101 = vrot.lane.b32.xlu0 %v2096, 32
  %v2102 = vpop.permute.xlu0 %2101
  %v2105 = vadd.f32 %v2085, %v2100
  %v2106 = vadd.f32 %v2086, %v2102
  %v2107 = vtanh.pop %v2105
  %v2108 = vtanh.pop %v2106
  %2111 = vrot.lane.b32.xlu0 %v2107, 64
  %v2112 = vpop.permute.xlu0 %2111
  %2113 = vrot.lane.b32.xlu0 %v2108, 64
  %v2114 = vpop.permute.xlu0 %2113
  %v2117 = vmul.f32 %v2074, %v2112
  %v2118 = vmul.f32 %v2076, %v2114
  %2121 = vrot.lane.b32.xlu0 %v2117, 32
  %v2122 = vpop.permute.xlu0 %2121
  %2123 = vrot.lane.b32.xlu0 %v2118, 32
  %v2124 = vpop.permute.xlu0 %2123
  %vm2127 = vcmask 260102
  %2128 = vst.msk [vmem:[#allocation2] sm:$0x40] %vm2127, %v2122
  %2129 = vst.msk [vmem:[#allocation2 + $0x8] sm:$0x40] %vm2127, %v2124
  %v2130 = vld [vmem:[%s10] sm:$0xff]
  %v2131 = vld [vmem:[%s10 + $0x8] sm:$0xff]
  %v2132 = vld [vmem:[%s10 + $0x10] sm:$0xff]
  %v2133 = vld [vmem:[%s10 + $0x18] sm:$0xff]
  %v2134 = vrot.slane %v2117, 6
  %v2135 = vrot.slane %v2118, 5
  %v2136 = vsel %vm1219, %v2135, %v2134
  %2137 = vrot.lane.b32.xlu0 %v2136, 32
  %v2138 = vpop.permute.xlu0 %2137
  %v2139 = vsel %vm66, %v2138, 0
  %2141 = vmatprep.subr.mxu0 0.0
  %2142 = vmatpush1.msra.mxu0 %v2130
  %2143 = vmatprep.subr.mxu0 0.0
  %2144 = vmatpush1.msra.mxu0 %v2131
  %2145 = vmatprep.subr.mxu0 0.0
  %2146 = vmatpush1.msra.mxu0 %v2132
  %2147 = vmatprep.subr.mxu0 0.0
  %2148 = vmatpush1.msra.mxu0 %v2133
  %2149 = vmatprep.subr.mxu0 0.0
  %2150 = vmatpush1.msra.mxu0 0.0
  %2151 = vmatprep.subr.mxu0 0.0
  %2152 = vmatpush1.msra.mxu0 0.0
  %2153 = vmatprep.subr.mxu0 0.0
  %2154 = vmatpush1.msra.mxu0 0.0
  %2155 = vmatprep.subr.mxu0 0.0
  %2156 = vmatpush1.msra.mxu0 0.0
  %2157 = vmatprep.subr.mxu0 0.0
  %2158 = vmatpush1.msra.mxu0 0.0
  %2159 = vmatprep.subr.mxu0 0.0
  %2160 = vmatpush1.msra.mxu0 0.0
  %2161 = vmatprep.subr.mxu0 0.0
  %2162 = vmatpush1.msra.mxu0 0.0
  %2163 = vmatprep.subr.mxu0 0.0
  %2164 = vmatpush1.msra.mxu0 0.0
  %2165 = vmatprep.subr.mxu0 0.0
  %2166 = vmatpush1.msra.mxu0 0.0
  %2167 = vmatprep.subr.mxu0 0.0
  %2168 = vmatpush1.msra.mxu0 0.0
  %2169 = vmatprep.subr.mxu0 0.0
  %2170 = vmatpush1.msra.mxu0 0.0
  %2171 = vmatprep.subr.mxu0 0.0
  %2172 = vmatpush1.msra.mxu0 0.0
  %2173 = vmatprep.subr.mxu0 0.0
  %2174 = vmatpush1.msra.mxu0 0.0
  %2175 = vmatprep.subr.mxu0 0.0
  %2176 = vmatpush1.msra.mxu0 0.0
  %2177 = vmatprep.subr.mxu0 0.0
  %2178 = vmatpush1.msra.mxu0 0.0
  %2179 = vmatprep.subr.mxu0 0.0
  %2180 = vmatpush1.msra.mxu0 0.0
  %2181 = vmatprep.subr.mxu0 0.0
  %2182 = vmatpush1.msra.mxu0 0.0
  %2183 = vmatprep.subr.mxu0 0.0
  %2184 = vmatpush1.msra.mxu0 0.0
  %2185 = vmatprep.subr.mxu0 0.0
  %2186 = vmatpush1.msra.mxu0 0.0
  %2187 = vmatprep.subr.mxu0 0.0
  %2188 = vmatpush1.msra.mxu0 0.0
  %2189 = vmatprep.subr.mxu0 0.0
  %2190 = vmatpush1.msra.mxu0 0.0
  %2191 = vmatprep.subr.mxu0 0.0
  %2192 = vmatpush1.msra.mxu0 0.0
  %2193 = vmatprep.subr.mxu0 0.0
  %2194 = vmatpush1.msra.mxu0 0.0
  %2195 = vmatprep.subr.mxu0 0.0
  %2196 = vmatpush1.msra.mxu0 0.0
  %2197 = vmatprep.subr.mxu0 0.0
  %2198 = vmatpush1.msra.mxu0 0.0
  %2199 = vmatprep.subr.mxu0 0.0
  %2200 = vmatpush1.msra.mxu0 0.0
  %2201 = vmatprep.subr.mxu0 0.0
  %2202 = vmatpush1.msra.mxu0 0.0
  %2203 = vmatprep.subr.mxu0 0.0
  %2204 = vmatpush1.msra.mxu0 0.0
  %2205 = vmatprep.mubr.f32.mxu0 0.0
  %2206 = vmatmul.mubr.f32.gmra.mrb[0].mxu0 %v2139
  %v2207 = vpop.f32.mrb[0].mxu0
  %v2208 = vadd.f32 0.0, %v2207
  %v2209 = vpop.f32.mrb[0].mxu0
  %2210 = vdwg.mxu0
  %v2212 = vrot.slane %v2208, 1
  %v2213 = vrot.slane %v2208, 2
  %v2216 = vadd.f32 %v1064, %v2212
  %v2217 = vadd.f32 %v1069, %v2213
  %v2218 = vxor.u32 %v2216, 2147483648
  %v2219 = vxor.u32 %v2217, 2147483648
  %v2220 = vmul.f32 %v2218, 1.442695
  %v2221 = vpow.pop %v2220
  %v2222 = vmul.f32 %v2219, 1.442695
  %v2223 = vpow.pop %v2222
  %v2224 = vadd.f32 %v2221, 1.0
  %v2225 = vadd.f32 %v2223, 1.0
  %v2226 = vrcp.pop %v2224
  %v2227 = vmul.f32 1.0, %v2226
  %v2228 = vrcp.pop %v2225
  %v2229 = vmul.f32 1.0, %v2228
  %v2230 = vtanh.pop %v2216
  %v2231 = vtanh.pop %v2217
  %v2234 = vrot.slane %v2105, 7
  %v2235 = vrot.slane %v2106, 7
  %v2238 = vmul.f32 %v2227, %v2234
  %v2239 = vmul.f32 %v2229, %v2235
  %2242 = vrot.lane.b32.xlu0 %v2230, 64
  %v2243 = vpop.permute.xlu0 %2242
  %2244 = vrot.lane.b32.xlu0 %v2231, 64
  %v2245 = vpop.permute.xlu0 %2244
  %v2248 = vmul.f32 %v2227, %v2243
  %v2249 = vmul.f32 %v2229, %v2245
  %2252 = vrot.lane.b32.xlu0 %v2248, 32
  %v2253 = vpop.permute.xlu0 %2252
  %2254 = vrot.lane.b32.xlu0 %v2249, 32
  %v2255 = vpop.permute.xlu0 %2254
  %v2258 = vadd.f32 %v2238, %v2253
  %v2259 = vadd.f32 %v2239, %v2255
  %v2260 = vtanh.pop %v2258
  %v2261 = vtanh.pop %v2259
  %2264 = vrot.lane.b32.xlu0 %v2260, 64
  %v2265 = vpop.permute.xlu0 %2264
  %2266 = vrot.lane.b32.xlu0 %v2261, 64
  %v2267 = vpop.permute.xlu0 %2266
  %v2270 = vmul.f32 %v2227, %v2265
  %v2271 = vmul.f32 %v2229, %v2267
  %2274 = vrot.lane.b32.xlu0 %v2270, 32
  %v2275 = vpop.permute.xlu0 %2274
  %2276 = vrot.lane.b32.xlu0 %v2271, 32
  %v2277 = vpop.permute.xlu0 %2276
  %vm2280 = vcmask 261127
  %2281 = vst.msk [vmem:[#allocation2] sm:$0x80] %vm2280, %v2275
  %2282 = vst.msk [vmem:[#allocation2 + $0x8] sm:$0x80] %vm2280, %v2277
  %v2283 = vld [vmem:[#allocation2] sm:$0xff]
  %v2284 = vld [vmem:[#allocation2 + $0x8] sm:$0xff]
  %v2285 = vld [vmem:[%s12] sm:$0xff]
  %v2286 = vld [vmem:[%s12 + $0x8] sm:$0xff]
  %v2287 = vld [vmem:[%s12 + $0x10] sm:$0xff]
  %v2288 = vld [vmem:[%s12 + $0x18] sm:$0xff]
  %v2289 = vld [vmem:[%s13] sm:$0x1]
  %v2291 = vlaneseq
  %v2292 = vshrl.u32 %v2291, 7
  %v2293 = vsub.s32 0, %v2292
  %v2294 = vrot.slane %v2289, %v2293
  %v2297 = vsel %vm66, %v2283, 0
  %v2300 = vsel %vm66, %v2284, 0
  %2302 = vmatprep.subr.mxu0 0.0
  %2303 = vmatpush1.msra.mxu0 %v2285
  %2304 = vmatprep.subr.mxu0 0.0
  %2305 = vmatpush1.msra.mxu0 %v2286
  %2306 = vmatprep.subr.mxu0 0.0
  %2307 = vmatpush1.msra.mxu0 %v2287
  %2308 = vmatprep.subr.mxu0 0.0
  %2309 = vmatpush1.msra.mxu0 %v2288
  %2310 = vmatprep.subr.mxu0 0.0
  %2311 = vmatpush1.msra.mxu0 0.0
  %2312 = vmatprep.subr.mxu0 0.0
  %2313 = vmatpush1.msra.mxu0 0.0
  %2314 = vmatprep.subr.mxu0 0.0
  %2315 = vmatpush1.msra.mxu0 0.0
  %2316 = vmatprep.subr.mxu0 0.0
  %2317 = vmatpush1.msra.mxu0 0.0
  %2318 = vmatprep.subr.mxu0 0.0
  %2319 = vmatpush1.msra.mxu0 0.0
  %2320 = vmatprep.subr.mxu0 0.0
  %2321 = vmatpush1.msra.mxu0 0.0
  %2322 = vmatprep.subr.mxu0 0.0
  %2323 = vmatpush1.msra.mxu0 0.0
  %2324 = vmatprep.subr.mxu0 0.0
  %2325 = vmatpush1.msra.mxu0 0.0
  %2326 = vmatprep.subr.mxu0 0.0
  %2327 = vmatpush1.msra.mxu0 0.0
  %2328 = vmatprep.subr.mxu0 0.0
  %2329 = vmatpush1.msra.mxu0 0.0
  %2330 = vmatprep.subr.mxu0 0.0
  %2331 = vmatpush1.msra.mxu0 0.0
  %2332 = vmatprep.subr.mxu0 0.0
  %2333 = vmatpush1.msra.mxu0 0.0
  %2334 = vmatprep.subr.mxu0 0.0
  %2335 = vmatpush1.msra.mxu0 0.0
  %2336 = vmatprep.subr.mxu0 0.0
  %2337 = vmatpush1.msra.mxu0 0.0
  %2338 = vmatprep.subr.mxu0 0.0
  %2339 = vmatpush1.msra.mxu0 0.0
  %2340 = vmatprep.subr.mxu0 0.0
  %2341 = vmatpush1.msra.mxu0 0.0
  %2342 = vmatprep.subr.mxu0 0.0
  %2343 = vmatpush1.msra.mxu0 0.0
  %2344 = vmatprep.subr.mxu0 0.0
  %2345 = vmatpush1.msra.mxu0 0.0
  %2346 = vmatprep.subr.mxu0 0.0
  %2347 = vmatpush1.msra.mxu0 0.0
  %2348 = vmatprep.subr.mxu0 0.0
  %2349 = vmatpush1.msra.mxu0 0.0
  %2350 = vmatprep.subr.mxu0 0.0
  %2351 = vmatpush1.msra.mxu0 0.0
  %2352 = vmatprep.subr.mxu0 0.0
  %2353 = vmatpush1.msra.mxu0 0.0
  %2354 = vmatprep.subr.mxu0 0.0
  %2355 = vmatpush1.msra.mxu0 0.0
  %2356 = vmatprep.subr.mxu0 0.0
  %2357 = vmatpush1.msra.mxu0 0.0
  %2358 = vmatprep.subr.mxu0 0.0
  %2359 = vmatpush1.msra.mxu0 0.0
  %2360 = vmatprep.subr.mxu0 0.0
  %2361 = vmatpush1.msra.mxu0 0.0
  %2362 = vmatprep.subr.mxu0 0.0
  %2363 = vmatpush1.msra.mxu0 0.0
  %2364 = vmatprep.subr.mxu0 0.0
  %2365 = vmatpush1.msra.mxu0 0.0
  %2366 = vmatprep.mubr.f32.mxu0 0.0
  %2367 = vmatmul.mubr.f32.gmra.mrb[0].mxu0 %v2297
  %v2368 = vpop.f32.mrb[0].mxu0
  %v2369 = vadd.f32 %v2294, %v2368
  %v2370 = vpop.f32.mrb[0].mxu0
  %2371 = vmatprep.mubr.f32.mxu0 0.0
  %2372 = vmatmul.mubr.f32.gmra.mrb[0].mxu0 %v2300
  %v2373 = vpop.f32.mrb[0].mxu0
  %v2374 = vadd.f32 %v2294, %v2373
  %v2375 = vpop.f32.mrb[0].mxu0
  %2376 = vdwg.mxu0
  %v2377 = vsub.f32 1.0, %v61
  %v2378 = vmul.f32 %v2377, -10000.0
  %2380 = vrot.lane.b32.xlu0 %v2369, 96
  %v2381 = vpop.permute.xlu0 %2380
  %v2382 = vsel %vm148, %v2369, 0
  %v2384 = vsel %vm148, %v2381, 0
  %2386 = vmatprep.subr.mxu0 0.0
  %2387 = vmatpush1.xpose.msra.mxu0 %v2384
  %2388 = vmatprep.subr.mxu0 0.0
  %2389 = vmatpush1.xpose.msra.mxu0 0.0
  %2390 = vmatprep.subr.mxu0 0.0
  %2391 = vmatpush1.xpose.msra.mxu0 0.0
  %2392 = vmatprep.subr.mxu0 0.0
  %2393 = vmatpush1.xpose.msra.mxu0 0.0
  %2394 = vmatprep.subr.mxu0 0.0
  %2395 = vmatpush1.xpose.msra.mxu0 0.0
  %2396 = vmatprep.subr.mxu0 0.0
  %2397 = vmatpush1.xpose.msra.mxu0 0.0
  %2398 = vmatprep.subr.mxu0 0.0
  %2399 = vmatpush1.xpose.msra.mxu0 0.0
  %2400 = vmatprep.subr.mxu0 0.0
  %2401 = vmatpush1.xpose.msra.mxu0 0.0
  %2402 = vmatprep.subr.mxu0 0.0
  %2403 = vmatpush1.xpose.msra.mxu0 0.0
  %2404 = vmatprep.subr.mxu0 0.0
  %2405 = vmatpush1.xpose.msra.mxu0 0.0
  %2406 = vmatprep.subr.mxu0 0.0
  %2407 = vmatpush1.xpose.msra.mxu0 0.0
  %2408 = vmatprep.subr.mxu0 0.0
  %2409 = vmatpush1.xpose.msra.mxu0 0.0
  %2410 = vmatprep.subr.mxu0 0.0
  %2411 = vmatpush1.xpose.msra.mxu0 0.0
  %2412 = vmatprep.subr.mxu0 0.0
  %2413 = vmatpush1.xpose.msra.mxu0 0.0
  %2414 = vmatprep.subr.mxu0 0.0
  %2415 = vmatpush1.xpose.msra.mxu0 0.0
  %2416 = vmatprep.subr.mxu0 0.0
  %2417 = vmatpush1.xpose.msra.mxu0 0.0
  %2418 = vmatprep.subr.mxu0 0.0
  %2419 = vmatpush1.xpose.msra.mxu0 0.0
  %2420 = vmatprep.subr.mxu0 0.0
  %2421 = vmatpush1.xpose.msra.mxu0 0.0
  %2422 = vmatprep.subr.mxu0 0.0
  %2423 = vmatpush1.xpose.msra.mxu0 0.0
  %2424 = vmatprep.subr.mxu0 0.0
  %2425 = vmatpush1.xpose.msra.mxu0 0.0
  %2426 = vmatprep.subr.mxu0 0.0
  %2427 = vmatpush1.xpose.msra.mxu0 0.0
  %2428 = vmatprep.subr.mxu0 0.0
  %2429 = vmatpush1.xpose.msra.mxu0 0.0
  %2430 = vmatprep.subr.mxu0 0.0
  %2431 = vmatpush1.xpose.msra.mxu0 0.0
  %2432 = vmatprep.subr.mxu0 0.0
  %2433 = vmatpush1.xpose.msra.mxu0 0.0
  %2434 = vmatprep.subr.mxu0 0.0
  %2435 = vmatpush1.xpose.msra.mxu0 0.0
  %2436 = vmatprep.subr.mxu0 0.0
  %2437 = vmatpush1.xpose.msra.mxu0 0.0
  %2438 = vmatprep.subr.mxu0 0.0
  %2439 = vmatpush1.xpose.msra.mxu0 0.0
  %2440 = vmatprep.subr.mxu0 0.0
  %2441 = vmatpush1.xpose.msra.mxu0 0.0
  %2442 = vmatprep.subr.mxu0 0.0
  %2443 = vmatpush1.xpose.msra.mxu0 0.0
  %2444 = vmatprep.subr.mxu0 0.0
  %2445 = vmatpush1.xpose.msra.mxu0 0.0
  %2446 = vmatprep.subr.mxu0 0.0
  %2447 = vmatpush1.xpose.msra.mxu0 0.0
  %2448 = vmatprep.subr.mxu0 0.0
  %2449 = vmatpush1.xpose.msra.mxu0 0.0
  %2450 = vmatprep.mubr.f32.mxu0 0.0
  %2451 = vmatmul.mubr.f32.gmra.mrb[0].mxu0 %v2382
  %v2452 = vpop.f32.mrb[0].mxu0
  %v2453 = vadd.f32 0.0, %v2452
  %v2454 = vpop.f32.mrb[0].mxu0
  %2455 = vdwg.mxu0
  %v2456 = vmul.f32 %v2453, 0.35355338
  %v2457 = vlaneseq
  %v2458 = vshrl.u32 %v2457, 7
  %v2459 = vsub.s32 0, %v2458
  %v2460 = vrot.slane %v2378, %v2459
  %v2461 = vadd.f32 %v2456, %v2460
  %v2462 = vsel %vm148, %v2461, -inf
  %2463 = vmax.xlane.f32.xlu0 %v2462
  %v2464 = vpop.xlane.xlu0 %2463
  %v2465 = vsub.f32 %v2461, %v2464
  %v2466 = vmul.f32 %v2465, 1.442695
  %v2467 = vpow.pop %v2466
  %v2468 = vsel %vm148, %v2467, 0.0
  %2469 = vadd.xlane.f32.xlu0 %v2468
  %v2470 = vpop.xlane.xlu0 %2469
  %v2471 = vrcp.pop %v2470
  %v2472 = vmul.f32 %v2467, %v2471
  %2473 = vrot.lane.b32.xlu0 %v2369, 64
  %v2474 = vpop.permute.xlu0 %2473
  %v2477 = vsel %vm148, %v2472, 0
  %2479 = vmatprep.subr.mxu0 0.0
  %2480 = vmatpush1.msra.mxu0 %v2474
  %2481 = vmatprep.subr.mxu0 0.0
  %2482 = vmatpush1.msra.mxu0 0.0
  %2483 = vmatprep.subr.mxu0 0.0
  %2484 = vmatpush1.msra.mxu0 0.0
  %2485 = vmatprep.subr.mxu0 0.0
  %2486 = vmatpush1.msra.mxu0 0.0
  %2487 = vmatprep.subr.mxu0 0.0
  %2488 = vmatpush1.msra.mxu0 0.0
  %2489 = vmatprep.subr.mxu0 0.0
  %2490 = vmatpush1.msra.mxu0 0.0
  %2491 = vmatprep.subr.mxu0 0.0
  %2492 = vmatpush1.msra.mxu0 0.0
  %2493 = vmatprep.subr.mxu0 0.0
  %2494 = vmatpush1.msra.mxu0 0.0
  %2495 = vmatprep.subr.mxu0 0.0
  %2496 = vmatpush1.msra.mxu0 0.0
  %2497 = vmatprep.subr.mxu0 0.0
  %2498 = vmatpush1.msra.mxu0 0.0
  %2499 = vmatprep.subr.mxu0 0.0
  %2500 = vmatpush1.msra.mxu0 0.0
  %2501 = vmatprep.subr.mxu0 0.0
  %2502 = vmatpush1.msra.mxu0 0.0
  %2503 = vmatprep.subr.mxu0 0.0
  %2504 = vmatpush1.msra.mxu0 0.0
  %2505 = vmatprep.subr.mxu0 0.0
  %2506 = vmatpush1.msra.mxu0 0.0
  %2507 = vmatprep.subr.mxu0 0.0
  %2508 = vmatpush1.msra.mxu0 0.0
  %2509 = vmatprep.subr.mxu0 0.0
  %2510 = vmatpush1.msra.mxu0 0.0
  %2511 = vmatprep.subr.mxu0 0.0
  %2512 = vmatpush1.msra.mxu0 0.0
  %2513 = vmatprep.subr.mxu0 0.0
  %2514 = vmatpush1.msra.mxu0 0.0
  %2515 = vmatprep.subr.mxu0 0.0
  %2516 = vmatpush1.msra.mxu0 0.0
  %2517 = vmatprep.subr.mxu0 0.0
  %2518 = vmatpush1.msra.mxu0 0.0
  %2519 = vmatprep.subr.mxu0 0.0
  %2520 = vmatpush1.msra.mxu0 0.0
  %2521 = vmatprep.subr.mxu0 0.0
  %2522 = vmatpush1.msra.mxu0 0.0
  %2523 = vmatprep.subr.mxu0 0.0
  %2524 = vmatpush1.msra.mxu0 0.0
  %2525 = vmatprep.subr.mxu0 0.0
  %2526 = vmatpush1.msra.mxu0 0.0
  %2527 = vmatprep.subr.mxu0 0.0
  %2528 = vmatpush1.msra.mxu0 0.0
  %2529 = vmatprep.subr.mxu0 0.0
  %2530 = vmatpush1.msra.mxu0 0.0
  %2531 = vmatprep.subr.mxu0 0.0
  %2532 = vmatpush1.msra.mxu0 0.0
  %2533 = vmatprep.subr.mxu0 0.0
  %2534 = vmatpush1.msra.mxu0 0.0
  %2535 = vmatprep.subr.mxu0 0.0
  %2536 = vmatpush1.msra.mxu0 0.0
  %2537 = vmatprep.subr.mxu0 0.0
  %2538 = vmatpush1.msra.mxu0 0.0
  %2539 = vmatprep.subr.mxu0 0.0
  %2540 = vmatpush1.msra.mxu0 0.0
  %2541 = vmatprep.subr.mxu0 0.0
  %2542 = vmatpush1.msra.mxu0 0.0
  %2543 = vmatprep.mubr.f32.mxu0 0.0
  %2544 = vmatmul.mubr.f32.gmra.mrb[0].mxu0 %v2477
  %v2545 = vpop.f32.mrb[0].mxu0
  %v2546 = vadd.f32 0.0, %v2545
  %v2547 = vpop.f32.mrb[0].mxu0
  %2548 = vdwg.mxu0
  %2549 = vrot.lane.b32.xlu0 %v2369, 120
  %v2550 = vpop.permute.xlu0 %2549
  %2551 = vrot.lane.b32.xlu0 %v2369, 88
  %v2552 = vpop.permute.xlu0 %2551
  %v2553 = vsel %vm148, %v2550, 0
  %v2555 = vsel %vm148, %v2552, 0
  %2557 = vmatprep.subr.mxu0 0.0
  %2558 = vmatpush1.xpose.msra.mxu0 %v2555
  %2559 = vmatprep.subr.mxu0 0.0
  %2560 = vmatpush1.xpose.msra.mxu0 0.0
  %2561 = vmatprep.subr.mxu0 0.0
  %2562 = vmatpush1.xpose.msra.mxu0 0.0
  %2563 = vmatprep.subr.mxu0 0.0
  %2564 = vmatpush1.xpose.msra.mxu0 0.0
  %2565 = vmatprep.subr.mxu0 0.0
  %2566 = vmatpush1.xpose.msra.mxu0 0.0
  %2567 = vmatprep.subr.mxu0 0.0
  %2568 = vmatpush1.xpose.msra.mxu0 0.0
  %2569 = vmatprep.subr.mxu0 0.0
  %2570 = vmatpush1.xpose.msra.mxu0 0.0
  %2571 = vmatprep.subr.mxu0 0.0
  %2572 = vmatpush1.xpose.msra.mxu0 0.0
  %2573 = vmatprep.subr.mxu0 0.0
  %2574 = vmatpush1.xpose.msra.mxu0 0.0
  %2575 = vmatprep.subr.mxu0 0.0
  %2576 = vmatpush1.xpose.msra.mxu0 0.0
  %2577 = vmatprep.subr.mxu0 0.0
  %2578 = vmatpush1.xpose.msra.mxu0 0.0
  %2579 = vmatprep.subr.mxu0 0.0
  %2580 = vmatpush1.xpose.msra.mxu0 0.0
  %2581 = vmatprep.subr.mxu0 0.0
  %2582 = vmatpush1.xpose.msra.mxu0 0.0
  %2583 = vmatprep.subr.mxu0 0.0
  %2584 = vmatpush1.xpose.msra.mxu0 0.0
  %2585 = vmatprep.subr.mxu0 0.0
  %2586 = vmatpush1.xpose.msra.mxu0 0.0
  %2587 = vmatprep.subr.mxu0 0.0
  %2588 = vmatpush1.xpose.msra.mxu0 0.0
  %2589 = vmatprep.subr.mxu0 0.0
  %2590 = vmatpush1.xpose.msra.mxu0 0.0
  %2591 = vmatprep.subr.mxu0 0.0
  %2592 = vmatpush1.xpose.msra.mxu0 0.0
  %2593 = vmatprep.subr.mxu0 0.0
  %2594 = vmatpush1.xpose.msra.mxu0 0.0
  %2595 = vmatprep.subr.mxu0 0.0
  %2596 = vmatpush1.xpose.msra.mxu0 0.0
  %2597 = vmatprep.subr.mxu0 0.0
  %2598 = vmatpush1.xpose.msra.mxu0 0.0
  %2599 = vmatprep.subr.mxu0 0.0
  %2600 = vmatpush1.xpose.msra.mxu0 0.0
  %2601 = vmatprep.subr.mxu0 0.0
  %2602 = vmatpush1.xpose.msra.mxu0 0.0
  %2603 = vmatprep.subr.mxu0 0.0
  %2604 = vmatpush1.xpose.msra.mxu0 0.0
  %2605 = vmatprep.subr.mxu0 0.0
  %2606 = vmatpush1.xpose.msra.mxu0 0.0
  %2607 = vmatprep.subr.mxu0 0.0
  %2608 = vmatpush1.xpose.msra.mxu0 0.0
  %2609 = vmatprep.subr.mxu0 0.0
  %2610 = vmatpush1.xpose.msra.mxu0 0.0
  %2611 = vmatprep.subr.mxu0 0.0
  %2612 = vmatpush1.xpose.msra.mxu0 0.0
  %2613 = vmatprep.subr.mxu0 0.0
  %2614 = vmatpush1.xpose.msra.mxu0 0.0
  %2615 = vmatprep.subr.mxu0 0.0
  %2616 = vmatpush1.xpose.msra.mxu0 0.0
  %2617 = vmatprep.subr.mxu0 0.0
  %2618 = vmatpush1.xpose.msra.mxu0 0.0
  %2619 = vmatprep.subr.mxu0 0.0
  %2620 = vmatpush1.xpose.msra.mxu0 0.0
  %2621 = vmatprep.mubr.f32.mxu0 0.0
  %2622 = vmatmul.mubr.f32.gmra.mrb[0].mxu0 %v2553
  %v2623 = vpop.f32.mrb[0].mxu0
  %v2624 = vadd.f32 0.0, %v2623
  %v2625 = vpop.f32.mrb[0].mxu0
  %2626 = vdwg.mxu0
  %v2627 = vmul.f32 %v2624, 0.35355338
  %v2628 = vadd.f32 %v2627, %v2460
  %v2629 = vsel %vm148, %v2628, -inf
  %2630 = vmax.xlane.f32.xlu0 %v2629
  %v2631 = vpop.xlane.xlu0 %2630
  %v2632 = vsub.f32 %v2628, %v2631
  %v2633 = vmul.f32 %v2632, 1.442695
  %v2634 = vpow.pop %v2633
  %v2635 = vsel %vm148, %v2634, 0.0
  %2636 = vadd.xlane.f32.xlu0 %v2635
  %v2637 = vpop.xlane.xlu0 %2636
  %v2638 = vrcp.pop %v2637
  %v2639 = vmul.f32 %v2634, %v2638
  %2640 = vrot.lane.b32.xlu0 %v2369, 56
  %v2641 = vpop.permute.xlu0 %2640
  %v2644 = vsel %vm148, %v2639, 0
  %2646 = vmatprep.subr.mxu0 0.0
  %2647 = vmatpush1.msra.mxu0 %v2641
  %2648 = vmatprep.subr.mxu0 0.0
  %2649 = vmatpush1.msra.mxu0 0.0
  %2650 = vmatprep.subr.mxu0 0.0
  %2651 = vmatpush1.msra.mxu0 0.0
  %2652 = vmatprep.subr.mxu0 0.0
  %2653 = vmatpush1.msra.mxu0 0.0
  %2654 = vmatprep.subr.mxu0 0.0
  %2655 = vmatpush1.msra.mxu0 0.0
  %2656 = vmatprep.subr.mxu0 0.0
  %2657 = vmatpush1.msra.mxu0 0.0
  %2658 = vmatprep.subr.mxu0 0.0
  %2659 = vmatpush1.msra.mxu0 0.0
  %2660 = vmatprep.subr.mxu0 0.0
  %2661 = vmatpush1.msra.mxu0 0.0
  %2662 = vmatprep.subr.mxu0 0.0
  %2663 = vmatpush1.msra.mxu0 0.0
  %2664 = vmatprep.subr.mxu0 0.0
  %2665 = vmatpush1.msra.mxu0 0.0
  %2666 = vmatprep.subr.mxu0 0.0
  %2667 = vmatpush1.msra.mxu0 0.0
  %2668 = vmatprep.subr.mxu0 0.0
  %2669 = vmatpush1.msra.mxu0 0.0
  %2670 = vmatprep.subr.mxu0 0.0
  %2671 = vmatpush1.msra.mxu0 0.0
  %2672 = vmatprep.subr.mxu0 0.0
  %2673 = vmatpush1.msra.mxu0 0.0
  %2674 = vmatprep.subr.mxu0 0.0
  %2675 = vmatpush1.msra.mxu0 0.0
  %2676 = vmatprep.subr.mxu0 0.0
  %2677 = vmatpush1.msra.mxu0 0.0
  %2678 = vmatprep.subr.mxu0 0.0
  %2679 = vmatpush1.msra.mxu0 0.0
  %2680 = vmatprep.subr.mxu0 0.0
  %2681 = vmatpush1.msra.mxu0 0.0
  %2682 = vmatprep.subr.mxu0 0.0
  %2683 = vmatpush1.msra.mxu0 0.0
  %2684 = vmatprep.subr.mxu0 0.0
  %2685 = vmatpush1.msra.mxu0 0.0
  %2686 = vmatprep.subr.mxu0 0.0
  %2687 = vmatpush1.msra.mxu0 0.0
  %2688 = vmatprep.subr.mxu0 0.0
  %2689 = vmatpush1.msra.mxu0 0.0
  %2690 = vmatprep.subr.mxu0 0.0
  %2691 = vmatpush1.msra.mxu0 0.0
  %2692 = vmatprep.subr.mxu0 0.0
  %2693 = vmatpush1.msra.mxu0 0.0
  %2694 = vmatprep.subr.mxu0 0.0
  %2695 = vmatpush1.msra.mxu0 0.0
  %2696 = vmatprep.subr.mxu0 0.0
  %2697 = vmatpush1.msra.mxu0 0.0
  %2698 = vmatprep.subr.mxu0 0.0
  %2699 = vmatpush1.msra.mxu0 0.0
  %2700 = vmatprep.subr.mxu0 0.0
  %2701 = vmatpush1.msra.mxu0 0.0
  %2702 = vmatprep.subr.mxu0 0.0
  %2703 = vmatpush1.msra.mxu0 0.0
  %2704 = vmatprep.subr.mxu0 0.0
  %2705 = vmatpush1.msra.mxu0 0.0
  %2706 = vmatprep.subr.mxu0 0.0
  %2707 = vmatpush1.msra.mxu0 0.0
  %2708 = vmatprep.subr.mxu0 0.0
  %2709 = vmatpush1.msra.mxu0 0.0
  %2710 = vmatprep.mubr.f32.mxu0 0.0
  %2711 = vmatmul.mubr.f32.gmra.mrb[0].mxu0 %v2644
  %v2712 = vpop.f32.mrb[0].mxu0
  %v2713 = vadd.f32 0.0, %v2712
  %v2714 = vpop.f32.mrb[0].mxu0
  %2715 = vdwg.mxu0
  %2716 = vrot.lane.b32.xlu0 %v2369, 112
  %v2717 = vpop.permute.xlu0 %2716
  %2718 = vrot.lane.b32.xlu0 %v2369, 80
  %v2719 = vpop.permute.xlu0 %2718
  %v2720 = vsel %vm148, %v2717, 0
  %v2722 = vsel %vm148, %v2719, 0
  %2724 = vmatprep.subr.mxu0 0.0
  %2725 = vmatpush1.xpose.msra.mxu0 %v2722
  %2726 = vmatprep.subr.mxu0 0.0
  %2727 = vmatpush1.xpose.msra.mxu0 0.0
  %2728 = vmatprep.subr.mxu0 0.0
  %2729 = vmatpush1.xpose.msra.mxu0 0.0
  %2730 = vmatprep.subr.mxu0 0.0
  %2731 = vmatpush1.xpose.msra.mxu0 0.0
  %2732 = vmatprep.subr.mxu0 0.0
  %2733 = vmatpush1.xpose.msra.mxu0 0.0
  %2734 = vmatprep.subr.mxu0 0.0
  %2735 = vmatpush1.xpose.msra.mxu0 0.0
  %2736 = vmatprep.subr.mxu0 0.0
  %2737 = vmatpush1.xpose.msra.mxu0 0.0
  %2738 = vmatprep.subr.mxu0 0.0
  %2739 = vmatpush1.xpose.msra.mxu0 0.0
  %2740 = vmatprep.subr.mxu0 0.0
  %2741 = vmatpush1.xpose.msra.mxu0 0.0
  %2742 = vmatprep.subr.mxu0 0.0
  %2743 = vmatpush1.xpose.msra.mxu0 0.0
  %2744 = vmatprep.subr.mxu0 0.0
  %2745 = vmatpush1.xpose.msra.mxu0 0.0
  %2746 = vmatprep.subr.mxu0 0.0
  %2747 = vmatpush1.xpose.msra.mxu0 0.0
  %2748 = vmatprep.subr.mxu0 0.0
  %2749 = vmatpush1.xpose.msra.mxu0 0.0
  %2750 = vmatprep.subr.mxu0 0.0
  %2751 = vmatpush1.xpose.msra.mxu0 0.0
  %2752 = vmatprep.subr.mxu0 0.0
  %2753 = vmatpush1.xpose.msra.mxu0 0.0
  %2754 = vmatprep.subr.mxu0 0.0
  %2755 = vmatpush1.xpose.msra.mxu0 0.0
  %2756 = vmatprep.subr.mxu0 0.0
  %2757 = vmatpush1.xpose.msra.mxu0 0.0
  %2758 = vmatprep.subr.mxu0 0.0
  %2759 = vmatpush1.xpose.msra.mxu0 0.0
  %2760 = vmatprep.subr.mxu0 0.0
  %2761 = vmatpush1.xpose.msra.mxu0 0.0
  %2762 = vmatprep.subr.mxu0 0.0
  %2763 = vmatpush1.xpose.msra.mxu0 0.0
  %2764 = vmatprep.subr.mxu0 0.0
  %2765 = vmatpush1.xpose.msra.mxu0 0.0
  %2766 = vmatprep.subr.mxu0 0.0
  %2767 = vmatpush1.xpose.msra.mxu0 0.0
  %2768 = vmatprep.subr.mxu0 0.0
  %2769 = vmatpush1.xpose.msra.mxu0 0.0
  %2770 = vmatprep.subr.mxu0 0.0
  %2771 = vmatpush1.xpose.msra.mxu0 0.0
  %2772 = vmatprep.subr.mxu0 0.0
  %2773 = vmatpush1.xpose.msra.mxu0 0.0
  %2774 = vmatprep.subr.mxu0 0.0
  %2775 = vmatpush1.xpose.msra.mxu0 0.0
  %2776 = vmatprep.subr.mxu0 0.0
  %2777 = vmatpush1.xpose.msra.mxu0 0.0
  %2778 = vmatprep.subr.mxu0 0.0
  %2779 = vmatpush1.xpose.msra.mxu0 0.0
  %2780 = vmatprep.subr.mxu0 0.0
  %2781 = vmatpush1.xpose.msra.mxu0 0.0
  %2782 = vmatprep.subr.mxu0 0.0
  %2783 = vmatpush1.xpose.msra.mxu0 0.0
  %2784 = vmatprep.subr.mxu0 0.0
  %2785 = vmatpush1.xpose.msra.mxu0 0.0
  %2786 = vmatprep.subr.mxu0 0.0
  %2787 = vmatpush1.xpose.msra.mxu0 0.0
  %2788 = vmatprep.mubr.f32.mxu0 0.0
  %2789 = vmatmul.mubr.f32.gmra.mrb[0].mxu0 %v2720
  %v2790 = vpop.f32.mrb[0].mxu0
  %v2791 = vadd.f32 0.0, %v2790
  %v2792 = vpop.f32.mrb[0].mxu0
  %2793 = vdwg.mxu0
  %v2794 = vmul.f32 %v2791, 0.35355338
  %v2795 = vadd.f32 %v2794, %v2460
  %v2796 = vsel %vm148, %v2795, -inf
  %2797 = vmax.xlane.f32.xlu0 %v2796
  %v2798 = vpop.xlane.xlu0 %2797
  %v2799 = vsub.f32 %v2795, %v2798
  %v2800 = vmul.f32 %v2799, 1.442695
  %v2801 = vpow.pop %v2800
  %v2802 = vsel %vm148, %v2801, 0.0
  %2803 = vadd.xlane.f32.xlu0 %v2802
  %v2804 = vpop.xlane.xlu0 %2803
  %v2805 = vrcp.pop %v2804
  %v2806 = vmul.f32 %v2801, %v2805
  %2807 = vrot.lane.b32.xlu0 %v2369, 48
  %v2808 = vpop.permute.xlu0 %2807
  %v2811 = vsel %vm148, %v2806, 0
  %2813 = vmatprep.subr.mxu0 0.0
  %2814 = vmatpush1.msra.mxu0 %v2808
  %2815 = vmatprep.subr.mxu0 0.0
  %2816 = vmatpush1.msra.mxu0 0.0
  %2817 = vmatprep.subr.mxu0 0.0
  %2818 = vmatpush1.msra.mxu0 0.0
  %2819 = vmatprep.subr.mxu0 0.0
  %2820 = vmatpush1.msra.mxu0 0.0
  %2821 = vmatprep.subr.mxu0 0.0
  %2822 = vmatpush1.msra.mxu0 0.0
  %2823 = vmatprep.subr.mxu0 0.0
  %2824 = vmatpush1.msra.mxu0 0.0
  %2825 = vmatprep.subr.mxu0 0.0
  %2826 = vmatpush1.msra.mxu0 0.0
  %2827 = vmatprep.subr.mxu0 0.0
  %2828 = vmatpush1.msra.mxu0 0.0
  %2829 = vmatprep.subr.mxu0 0.0
  %2830 = vmatpush1.msra.mxu0 0.0
  %2831 = vmatprep.subr.mxu0 0.0
  %2832 = vmatpush1.msra.mxu0 0.0
  %2833 = vmatprep.subr.mxu0 0.0
  %2834 = vmatpush1.msra.mxu0 0.0
  %2835 = vmatprep.subr.mxu0 0.0
  %2836 = vmatpush1.msra.mxu0 0.0
  %2837 = vmatprep.subr.mxu0 0.0
  %2838 = vmatpush1.msra.mxu0 0.0
  %2839 = vmatprep.subr.mxu0 0.0
  %2840 = vmatpush1.msra.mxu0 0.0
  %2841 = vmatprep.subr.mxu0 0.0
  %2842 = vmatpush1.msra.mxu0 0.0
  %2843 = vmatprep.subr.mxu0 0.0
  %2844 = vmatpush1.msra.mxu0 0.0
  %2845 = vmatprep.subr.mxu0 0.0
  %2846 = vmatpush1.msra.mxu0 0.0
  %2847 = vmatprep.subr.mxu0 0.0
  %2848 = vmatpush1.msra.mxu0 0.0
  %2849 = vmatprep.subr.mxu0 0.0
  %2850 = vmatpush1.msra.mxu0 0.0
  %2851 = vmatprep.subr.mxu0 0.0
  %2852 = vmatpush1.msra.mxu0 0.0
  %2853 = vmatprep.subr.mxu0 0.0
  %2854 = vmatpush1.msra.mxu0 0.0
  %2855 = vmatprep.subr.mxu0 0.0
  %2856 = vmatpush1.msra.mxu0 0.0
  %2857 = vmatprep.subr.mxu0 0.0
  %2858 = vmatpush1.msra.mxu0 0.0
  %2859 = vmatprep.subr.mxu0 0.0
  %2860 = vmatpush1.msra.mxu0 0.0
  %2861 = vmatprep.subr.mxu0 0.0
  %2862 = vmatpush1.msra.mxu0 0.0
  %2863 = vmatprep.subr.mxu0 0.0
  %2864 = vmatpush1.msra.mxu0 0.0
  %2865 = vmatprep.subr.mxu0 0.0
  %2866 = vmatpush1.msra.mxu0 0.0
  %2867 = vmatprep.subr.mxu0 0.0
  %2868 = vmatpush1.msra.mxu0 0.0
  %2869 = vmatprep.subr.mxu0 0.0
  %2870 = vmatpush1.msra.mxu0 0.0
  %2871 = vmatprep.subr.mxu0 0.0
  %2872 = vmatpush1.msra.mxu0 0.0
  %2873 = vmatprep.subr.mxu0 0.0
  %2874 = vmatpush1.msra.mxu0 0.0
  %2875 = vmatprep.subr.mxu0 0.0
  %2876 = vmatpush1.msra.mxu0 0.0
  %2877 = vmatprep.mubr.f32.mxu0 0.0
  %2878 = vmatmul.mubr.f32.gmra.mrb[0].mxu0 %v2811
  %v2879 = vpop.f32.mrb[0].mxu0
  %v2880 = vadd.f32 0.0, %v2879
  %v2881 = vpop.f32.mrb[0].mxu0
  %2882 = vdwg.mxu0
  %2883 = vrot.lane.b32.xlu0 %v2369, 104
  %v2884 = vpop.permute.xlu0 %2883
  %2885 = vrot.lane.b32.xlu0 %v2369, 72
  %v2886 = vpop.permute.xlu0 %2885
  %v2887 = vsel %vm148, %v2884, 0
  %v2889 = vsel %vm148, %v2886, 0
  %2891 = vmatprep.subr.mxu0 0.0
  %2892 = vmatpush1.xpose.msra.mxu0 %v2889
  %2893 = vmatprep.subr.mxu0 0.0
  %2894 = vmatpush1.xpose.msra.mxu0 0.0
  %2895 = vmatprep.subr.mxu0 0.0
  %2896 = vmatpush1.xpose.msra.mxu0 0.0
  %2897 = vmatprep.subr.mxu0 0.0
  %2898 = vmatpush1.xpose.msra.mxu0 0.0
  %2899 = vmatprep.subr.mxu0 0.0
  %2900 = vmatpush1.xpose.msra.mxu0 0.0
  %2901 = vmatprep.subr.mxu0 0.0
  %2902 = vmatpush1.xpose.msra.mxu0 0.0
  %2903 = vmatprep.subr.mxu0 0.0
  %2904 = vmatpush1.xpose.msra.mxu0 0.0
  %2905 = vmatprep.subr.mxu0 0.0
  %2906 = vmatpush1.xpose.msra.mxu0 0.0
  %2907 = vmatprep.subr.mxu0 0.0
  %2908 = vmatpush1.xpose.msra.mxu0 0.0
  %2909 = vmatprep.subr.mxu0 0.0
  %2910 = vmatpush1.xpose.msra.mxu0 0.0
  %2911 = vmatprep.subr.mxu0 0.0
  %2912 = vmatpush1.xpose.msra.mxu0 0.0
  %2913 = vmatprep.subr.mxu0 0.0
  %2914 = vmatpush1.xpose.msra.mxu0 0.0
  %2915 = vmatprep.subr.mxu0 0.0
  %2916 = vmatpush1.xpose.msra.mxu0 0.0
  %2917 = vmatprep.subr.mxu0 0.0
  %2918 = vmatpush1.xpose.msra.mxu0 0.0
  %2919 = vmatprep.subr.mxu0 0.0
  %2920 = vmatpush1.xpose.msra.mxu0 0.0
  %2921 = vmatprep.subr.mxu0 0.0
  %2922 = vmatpush1.xpose.msra.mxu0 0.0
  %2923 = vmatprep.subr.mxu0 0.0
  %2924 = vmatpush1.xpose.msra.mxu0 0.0
  %2925 = vmatprep.subr.mxu0 0.0
  %2926 = vmatpush1.xpose.msra.mxu0 0.0
  %2927 = vmatprep.subr.mxu0 0.0
  %2928 = vmatpush1.xpose.msra.mxu0 0.0
  %2929 = vmatprep.subr.mxu0 0.0
  %2930 = vmatpush1.xpose.msra.mxu0 0.0
  %2931 = vmatprep.subr.mxu0 0.0
  %2932 = vmatpush1.xpose.msra.mxu0 0.0
  %2933 = vmatprep.subr.mxu0 0.0
  %2934 = vmatpush1.xpose.msra.mxu0 0.0
  %2935 = vmatprep.subr.mxu0 0.0
  %2936 = vmatpush1.xpose.msra.mxu0 0.0
  %2937 = vmatprep.subr.mxu0 0.0
  %2938 = vmatpush1.xpose.msra.mxu0 0.0
  %2939 = vmatprep.subr.mxu0 0.0
  %2940 = vmatpush1.xpose.msra.mxu0 0.0
  %2941 = vmatprep.subr.mxu0 0.0
  %2942 = vmatpush1.xpose.msra.mxu0 0.0
  %2943 = vmatprep.subr.mxu0 0.0
  %2944 = vmatpush1.xpose.msra.mxu0 0.0
  %2945 = vmatprep.subr.mxu0 0.0
  %2946 = vmatpush1.xpose.msra.mxu0 0.0
  %2947 = vmatprep.subr.mxu0 0.0
  %2948 = vmatpush1.xpose.msra.mxu0 0.0
  %2949 = vmatprep.subr.mxu0 0.0
  %2950 = vmatpush1.xpose.msra.mxu0 0.0
  %2951 = vmatprep.subr.mxu0 0.0
  %2952 = vmatpush1.xpose.msra.mxu0 0.0
  %2953 = vmatprep.subr.mxu0 0.0
  %2954 = vmatpush1.xpose.msra.mxu0 0.0
  %2955 = vmatprep.mubr.f32.mxu0 0.0
  %2956 = vmatmul.mubr.f32.gmra.mrb[0].mxu0 %v2887
  %v2957 = vpop.f32.mrb[0].mxu0
  %v2958 = vadd.f32 0.0, %v2957
  %v2959 = vpop.f32.mrb[0].mxu0
  %2960 = vdwg.mxu0
  %v2961 = vmul.f32 %v2958, 0.35355338
  %v2962 = vadd.f32 %v2961, %v2460
  %v2963 = vsel %vm148, %v2962, -inf
  %2964 = vmax.xlane.f32.xlu0 %v2963
  %v2965 = vpop.xlane.xlu0 %2964
  %v2966 = vsub.f32 %v2962, %v2965
  %v2967 = vmul.f32 %v2966, 1.442695
  %v2968 = vpow.pop %v2967
  %v2969 = vsel %vm148, %v2968, 0.0
  %2970 = vadd.xlane.f32.xlu0 %v2969
  %v2971 = vpop.xlane.xlu0 %2970
  %v2972 = vrcp.pop %v2971
  %v2973 = vmul.f32 %v2968, %v2972
  %2974 = vrot.lane.b32.xlu0 %v2369, 40
  %v2975 = vpop.permute.xlu0 %2974
  %v2978 = vsel %vm148, %v2973, 0
  %2980 = vmatprep.subr.mxu0 0.0
  %2981 = vmatpush1.msra.mxu0 %v2975
  %2982 = vmatprep.subr.mxu0 0.0
  %2983 = vmatpush1.msra.mxu0 0.0
  %2984 = vmatprep.subr.mxu0 0.0
  %2985 = vmatpush1.msra.mxu0 0.0
  %2986 = vmatprep.subr.mxu0 0.0
  %2987 = vmatpush1.msra.mxu0 0.0
  %2988 = vmatprep.subr.mxu0 0.0
  %2989 = vmatpush1.msra.mxu0 0.0
  %2990 = vmatprep.subr.mxu0 0.0
  %2991 = vmatpush1.msra.mxu0 0.0
  %2992 = vmatprep.subr.mxu0 0.0
  %2993 = vmatpush1.msra.mxu0 0.0
  %2994 = vmatprep.subr.mxu0 0.0
  %2995 = vmatpush1.msra.mxu0 0.0
  %2996 = vmatprep.subr.mxu0 0.0
  %2997 = vmatpush1.msra.mxu0 0.0
  %2998 = vmatprep.subr.mxu0 0.0
  %2999 = vmatpush1.msra.mxu0 0.0
  %3000 = vmatprep.subr.mxu0 0.0
  %3001 = vmatpush1.msra.mxu0 0.0
  %3002 = vmatprep.subr.mxu0 0.0
  %3003 = vmatpush1.msra.mxu0 0.0
  %3004 = vmatprep.subr.mxu0 0.0
  %3005 = vmatpush1.msra.mxu0 0.0
  %3006 = vmatprep.subr.mxu0 0.0
  %3007 = vmatpush1.msra.mxu0 0.0
  %3008 = vmatprep.subr.mxu0 0.0
  %3009 = vmatpush1.msra.mxu0 0.0
  %3010 = vmatprep.subr.mxu0 0.0
  %3011 = vmatpush1.msra.mxu0 0.0
  %3012 = vmatprep.subr.mxu0 0.0
  %3013 = vmatpush1.msra.mxu0 0.0
  %3014 = vmatprep.subr.mxu0 0.0
  %3015 = vmatpush1.msra.mxu0 0.0
  %3016 = vmatprep.subr.mxu0 0.0
  %3017 = vmatpush1.msra.mxu0 0.0
  %3018 = vmatprep.subr.mxu0 0.0
  %3019 = vmatpush1.msra.mxu0 0.0
  %3020 = vmatprep.subr.mxu0 0.0
  %3021 = vmatpush1.msra.mxu0 0.0
  %3022 = vmatprep.subr.mxu0 0.0
  %3023 = vmatpush1.msra.mxu0 0.0
  %3024 = vmatprep.subr.mxu0 0.0
  %3025 = vmatpush1.msra.mxu0 0.0
  %3026 = vmatprep.subr.mxu0 0.0
  %3027 = vmatpush1.msra.mxu0 0.0
  %3028 = vmatprep.subr.mxu0 0.0
  %3029 = vmatpush1.msra.mxu0 0.0
  %3030 = vmatprep.subr.mxu0 0.0
  %3031 = vmatpush1.msra.mxu0 0.0
  %3032 = vmatprep.subr.mxu0 0.0
  %3033 = vmatpush1.msra.mxu0 0.0
  %3034 = vmatprep.subr.mxu0 0.0
  %3035 = vmatpush1.msra.mxu0 0.0
  %3036 = vmatprep.subr.mxu0 0.0
  %3037 = vmatpush1.msra.mxu0 0.0
  %3038 = vmatprep.subr.mxu0 0.0
  %3039 = vmatpush1.msra.mxu0 0.0
  %3040 = vmatprep.subr.mxu0 0.0
  %3041 = vmatpush1.msra.mxu0 0.0
  %3042 = vmatprep.subr.mxu0 0.0
  %3043 = vmatpush1.msra.mxu0 0.0
  %3044 = vmatprep.mubr.f32.mxu0 0.0
  %3045 = vmatmul.mubr.f32.gmra.mrb[0].mxu0 %v2978
  %v3046 = vpop.f32.mrb[0].mxu0
  %v3047 = vadd.f32 0.0, %v3046
  %v3048 = vpop.f32.mrb[0].mxu0
  %3049 = vdwg.mxu0
  %3051 = vrot.lane.b32.xlu0 %v2713, 8
  %v3052 = vpop.permute.xlu0 %3051
  %3055 = vrot.lane.b32.xlu0 %v2880, 16
  %v3056 = vpop.permute.xlu0 %3055
  %3059 = vrot.lane.b32.xlu0 %v3047, 24
  %v3060 = vpop.permute.xlu0 %3059
  %v3062 = vsel %vm148, %v2546, %v3052
  %vm3063 = vcmask 130048
  %v3064 = vsel %vm3063, %v3062, %v3056
  %vm3065 = vcmask 195584
  %v3066 = vsel %vm3065, %v3064, %v3060
  %v3067 = vsel %vm66, %v3066, 0.0
  %v3068 = vrot.slane %v3067, 4
  %v3069 = vadd.f32 %v3067, %v3068
  %v3070 = vrot.slane %v3069, 2
  %v3071 = vadd.f32 %v3069, %v3070
  %v3072 = vrot.slane %v3071, 1
  %v3073 = vadd.f32 %v3071, %v3072
  %3075 = vrot.lane.b32.xlu0 %v2374, 96
  %v3076 = vpop.permute.xlu0 %3075
  %v3077 = vsel %vm148, %v2374, 0
  %v3079 = vsel %vm148, %v3076, 0
  %3081 = vmatprep.subr.mxu0 0.0
  %3082 = vmatpush1.xpose.msra.mxu0 %v3079
  %3083 = vmatprep.subr.mxu0 0.0
  %3084 = vmatpush1.xpose.msra.mxu0 0.0
  %3085 = vmatprep.subr.mxu0 0.0
  %3086 = vmatpush1.xpose.msra.mxu0 0.0
  %3087 = vmatprep.subr.mxu0 0.0
  %3088 = vmatpush1.xpose.msra.mxu0 0.0
  %3089 = vmatprep.subr.mxu0 0.0
  %3090 = vmatpush1.xpose.msra.mxu0 0.0
  %3091 = vmatprep.subr.mxu0 0.0
  %3092 = vmatpush1.xpose.msra.mxu0 0.0
  %3093 = vmatprep.subr.mxu0 0.0
  %3094 = vmatpush1.xpose.msra.mxu0 0.0
  %3095 = vmatprep.subr.mxu0 0.0
  %3096 = vmatpush1.xpose.msra.mxu0 0.0
  %3097 = vmatprep.subr.mxu0 0.0
  %3098 = vmatpush1.xpose.msra.mxu0 0.0
  %3099 = vmatprep.subr.mxu0 0.0
  %3100 = vmatpush1.xpose.msra.mxu0 0.0
  %3101 = vmatprep.subr.mxu0 0.0
  %3102 = vmatpush1.xpose.msra.mxu0 0.0
  %3103 = vmatprep.subr.mxu0 0.0
  %3104 = vmatpush1.xpose.msra.mxu0 0.0
  %3105 = vmatprep.subr.mxu0 0.0
  %3106 = vmatpush1.xpose.msra.mxu0 0.0
  %3107 = vmatprep.subr.mxu0 0.0
  %3108 = vmatpush1.xpose.msra.mxu0 0.0
  %3109 = vmatprep.subr.mxu0 0.0
  %3110 = vmatpush1.xpose.msra.mxu0 0.0
  %3111 = vmatprep.subr.mxu0 0.0
  %3112 = vmatpush1.xpose.msra.mxu0 0.0
  %3113 = vmatprep.subr.mxu0 0.0
  %3114 = vmatpush1.xpose.msra.mxu0 0.0
  %3115 = vmatprep.subr.mxu0 0.0
  %3116 = vmatpush1.xpose.msra.mxu0 0.0
  %3117 = vmatprep.subr.mxu0 0.0
  %3118 = vmatpush1.xpose.msra.mxu0 0.0
  %3119 = vmatprep.subr.mxu0 0.0
  %3120 = vmatpush1.xpose.msra.mxu0 0.0
  %3121 = vmatprep.subr.mxu0 0.0
  %3122 = vmatpush1.xpose.msra.mxu0 0.0
  %3123 = vmatprep.subr.mxu0 0.0
  %3124 = vmatpush1.xpose.msra.mxu0 0.0
  %3125 = vmatprep.subr.mxu0 0.0
  %3126 = vmatpush1.xpose.msra.mxu0 0.0
  %3127 = vmatprep.subr.mxu0 0.0
  %3128 = vmatpush1.xpose.msra.mxu0 0.0
  %3129 = vmatprep.subr.mxu0 0.0
  %3130 = vmatpush1.xpose.msra.mxu0 0.0
  %3131 = vmatprep.subr.mxu0 0.0
  %3132 = vmatpush1.xpose.msra.mxu0 0.0
  %3133 = vmatprep.subr.mxu0 0.0
  %3134 = vmatpush1.xpose.msra.mxu0 0.0
  %3135 = vmatprep.subr.mxu0 0.0
  %3136 = vmatpush1.xpose.msra.mxu0 0.0
  %3137 = vmatprep.subr.mxu0 0.0
  %3138 = vmatpush1.xpose.msra.mxu0 0.0
  %3139 = vmatprep.subr.mxu0 0.0
  %3140 = vmatpush1.xpose.msra.mxu0 0.0
  %3141 = vmatprep.subr.mxu0 0.0
  %3142 = vmatpush1.xpose.msra.mxu0 0.0
  %3143 = vmatprep.subr.mxu0 0.0
  %3144 = vmatpush1.xpose.msra.mxu0 0.0
  %3145 = vmatprep.mubr.f32.mxu0 0.0
  %3146 = vmatmul.mubr.f32.gmra.mrb[0].mxu0 %v3077
  %v3147 = vpop.f32.mrb[0].mxu0
  %v3148 = vadd.f32 0.0, %v3147
  %v3149 = vpop.f32.mrb[0].mxu0
  %3150 = vdwg.mxu0
  %v3151 = vmul.f32 %v3148, 0.35355338
  %v3152 = vlaneseq
  %v3153 = vshrl.u32 %v3152, 7
  %v3154 = vsub.s32 1, %v3153
  %v3155 = vrot.slane %v2378, %v3154
  %v3156 = vadd.f32 %v3151, %v3155
  %v3157 = vsel %vm148, %v3156, -inf
  %3158 = vmax.xlane.f32.xlu0 %v3157
  %v3159 = vpop.xlane.xlu0 %3158
  %v3160 = vsub.f32 %v3156, %v3159
  %v3161 = vmul.f32 %v3160, 1.442695
  %v3162 = vpow.pop %v3161
  %v3163 = vsel %vm148, %v3162, 0.0
  %3164 = vadd.xlane.f32.xlu0 %v3163
  %v3165 = vpop.xlane.xlu0 %3164
  %v3166 = vrcp.pop %v3165
  %v3167 = vmul.f32 %v3162, %v3166
  %3168 = vrot.lane.b32.xlu0 %v2374, 64
  %v3169 = vpop.permute.xlu0 %3168
  %v3172 = vsel %vm148, %v3167, 0
  %3174 = vmatprep.subr.mxu0 0.0
  %3175 = vmatpush1.msra.mxu0 %v3169
  %3176 = vmatprep.subr.mxu0 0.0
  %3177 = vmatpush1.msra.mxu0 0.0
  %3178 = vmatprep.subr.mxu0 0.0
  %3179 = vmatpush1.msra.mxu0 0.0
  %3180 = vmatprep.subr.mxu0 0.0
  %3181 = vmatpush1.msra.mxu0 0.0
  %3182 = vmatprep.subr.mxu0 0.0
  %3183 = vmatpush1.msra.mxu0 0.0
  %3184 = vmatprep.subr.mxu0 0.0
  %3185 = vmatpush1.msra.mxu0 0.0
  %3186 = vmatprep.subr.mxu0 0.0
  %3187 = vmatpush1.msra.mxu0 0.0
  %3188 = vmatprep.subr.mxu0 0.0
  %3189 = vmatpush1.msra.mxu0 0.0
  %3190 = vmatprep.subr.mxu0 0.0
  %3191 = vmatpush1.msra.mxu0 0.0
  %3192 = vmatprep.subr.mxu0 0.0
  %3193 = vmatpush1.msra.mxu0 0.0
  %3194 = vmatprep.subr.mxu0 0.0
  %3195 = vmatpush1.msra.mxu0 0.0
  %3196 = vmatprep.subr.mxu0 0.0
  %3197 = vmatpush1.msra.mxu0 0.0
  %3198 = vmatprep.subr.mxu0 0.0
  %3199 = vmatpush1.msra.mxu0 0.0
  %3200 = vmatprep.subr.mxu0 0.0
  %3201 = vmatpush1.msra.mxu0 0.0
  %3202 = vmatprep.subr.mxu0 0.0
  %3203 = vmatpush1.msra.mxu0 0.0
  %3204 = vmatprep.subr.mxu0 0.0
  %3205 = vmatpush1.msra.mxu0 0.0
  %3206 = vmatprep.subr.mxu0 0.0
  %3207 = vmatpush1.msra.mxu0 0.0
  %3208 = vmatprep.subr.mxu0 0.0
  %3209 = vmatpush1.msra.mxu0 0.0
  %3210 = vmatprep.subr.mxu0 0.0
  %3211 = vmatpush1.msra.mxu0 0.0
  %3212 = vmatprep.subr.mxu0 0.0
  %3213 = vmatpush1.msra.mxu0 0.0
  %3214 = vmatprep.subr.mxu0 0.0
  %3215 = vmatpush1.msra.mxu0 0.0
  %3216 = vmatprep.subr.mxu0 0.0
  %3217 = vmatpush1.msra.mxu0 0.0
  %3218 = vmatprep.subr.mxu0 0.0
  %3219 = vmatpush1.msra.mxu0 0.0
  %3220 = vmatprep.subr.mxu0 0.0
  %3221 = vmatpush1.msra.mxu0 0.0
  %3222 = vmatprep.subr.mxu0 0.0
  %3223 = vmatpush1.msra.mxu0 0.0
  %3224 = vmatprep.subr.mxu0 0.0
  %3225 = vmatpush1.msra.mxu0 0.0
  %3226 = vmatprep.subr.mxu0 0.0
  %3227 = vmatpush1.msra.mxu0 0.0
  %3228 = vmatprep.subr.mxu0 0.0
  %3229 = vmatpush1.msra.mxu0 0.0
  %3230 = vmatprep.subr.mxu0 0.0
  %3231 = vmatpush1.msra.mxu0 0.0
  %3232 = vmatprep.subr.mxu0 0.0
  %3233 = vmatpush1.msra.mxu0 0.0
  %3234 = vmatprep.subr.mxu0 0.0
  %3235 = vmatpush1.msra.mxu0 0.0
  %3236 = vmatprep.subr.mxu0 0.0
  %3237 = vmatpush1.msra.mxu0 0.0
  %3238 = vmatprep.mubr.f32.mxu0 0.0
  %3239 = vmatmul.mubr.f32.gmra.mrb[0].mxu0 %v3172
  %v3240 = vpop.f32.mrb[0].mxu0
  %v3241 = vadd.f32 0.0, %v3240
  %v3242 = vpop.f32.mrb[0].mxu0
  %3243 = vdwg.mxu0
  %3244 = vrot.lane.b32.xlu0 %v2374, 120
  %v3245 = vpop.permute.xlu0 %3244
  %3246 = vrot.lane.b32.xlu0 %v2374, 88
  %v3247 = vpop.permute.xlu0 %3246
  %v3248 = vsel %vm148, %v3245, 0
  %v3250 = vsel %vm148, %v3247, 0
  %3252 = vmatprep.subr.mxu0 0.0
  %3253 = vmatpush1.xpose.msra.mxu0 %v3250
  %3254 = vmatprep.subr.mxu0 0.0
  %3255 = vmatpush1.xpose.msra.mxu0 0.0
  %3256 = vmatprep.subr.mxu0 0.0
  %3257 = vmatpush1.xpose.msra.mxu0 0.0
  %3258 = vmatprep.subr.mxu0 0.0
  %3259 = vmatpush1.xpose.msra.mxu0 0.0
  %3260 = vmatprep.subr.mxu0 0.0
  %3261 = vmatpush1.xpose.msra.mxu0 0.0
  %3262 = vmatprep.subr.mxu0 0.0
  %3263 = vmatpush1.xpose.msra.mxu0 0.0
  %3264 = vmatprep.subr.mxu0 0.0
  %3265 = vmatpush1.xpose.msra.mxu0 0.0
  %3266 = vmatprep.subr.mxu0 0.0
  %3267 = vmatpush1.xpose.msra.mxu0 0.0
  %3268 = vmatprep.subr.mxu0 0.0
  %3269 = vmatpush1.xpose.msra.mxu0 0.0
  %3270 = vmatprep.subr.mxu0 0.0
  %3271 = vmatpush1.xpose.msra.mxu0 0.0
  %3272 = vmatprep.subr.mxu0 0.0
  %3273 = vmatpush1.xpose.msra.mxu0 0.0
  %3274 = vmatprep.subr.mxu0 0.0
  %3275 = vmatpush1.xpose.msra.mxu0 0.0
  %3276 = vmatprep.subr.mxu0 0.0
  %3277 = vmatpush1.xpose.msra.mxu0 0.0
  %3278 = vmatprep.subr.mxu0 0.0
  %3279 = vmatpush1.xpose.msra.mxu0 0.0
  %3280 = vmatprep.subr.mxu0 0.0
  %3281 = vmatpush1.xpose.msra.mxu0 0.0
  %3282 = vmatprep.subr.mxu0 0.0
  %3283 = vmatpush1.xpose.msra.mxu0 0.0
  %3284 = vmatprep.subr.mxu0 0.0
  %3285 = vmatpush1.xpose.msra.mxu0 0.0
  %3286 = vmatprep.subr.mxu0 0.0
  %3287 = vmatpush1.xpose.msra.mxu0 0.0
  %3288 = vmatprep.subr.mxu0 0.0
  %3289 = vmatpush1.xpose.msra.mxu0 0.0
  %3290 = vmatprep.subr.mxu0 0.0
  %3291 = vmatpush1.xpose.msra.mxu0 0.0
  %3292 = vmatprep.subr.mxu0 0.0
  %3293 = vmatpush1.xpose.msra.mxu0 0.0
  %3294 = vmatprep.subr.mxu0 0.0
  %3295 = vmatpush1.xpose.msra.mxu0 0.0
  %3296 = vmatprep.subr.mxu0 0.0
  %3297 = vmatpush1.xpose.msra.mxu0 0.0
  %3298 = vmatprep.subr.mxu0 0.0
  %3299 = vmatpush1.xpose.msra.mxu0 0.0
  %3300 = vmatprep.subr.mxu0 0.0
  %3301 = vmatpush1.xpose.msra.mxu0 0.0
  %3302 = vmatprep.subr.mxu0 0.0
  %3303 = vmatpush1.xpose.msra.mxu0 0.0
  %3304 = vmatprep.subr.mxu0 0.0
  %3305 = vmatpush1.xpose.msra.mxu0 0.0
  %3306 = vmatprep.subr.mxu0 0.0
  %3307 = vmatpush1.xpose.msra.mxu0 0.0
  %3308 = vmatprep.subr.mxu0 0.0
  %3309 = vmatpush1.xpose.msra.mxu0 0.0
  %3310 = vmatprep.subr.mxu0 0.0
  %3311 = vmatpush1.xpose.msra.mxu0 0.0
  %3312 = vmatprep.subr.mxu0 0.0
  %3313 = vmatpush1.xpose.msra.mxu0 0.0
  %3314 = vmatprep.subr.mxu0 0.0
  %3315 = vmatpush1.xpose.msra.mxu0 0.0
  %3316 = vmatprep.mubr.f32.mxu0 0.0
  %3317 = vmatmul.mubr.f32.gmra.mrb[0].mxu0 %v3248
  %v3318 = vpop.f32.mrb[0].mxu0
  %v3319 = vadd.f32 0.0, %v3318
  %v3320 = vpop.f32.mrb[0].mxu0
  %3321 = vdwg.mxu0
  %v3322 = vmul.f32 %v3319, 0.35355338
  %v3323 = vadd.f32 %v3322, %v3155
  %v3324 = vsel %vm148, %v3323, -inf
  %3325 = vmax.xlane.f32.xlu0 %v3324
  %v3326 = vpop.xlane.xlu0 %3325
  %v3327 = vsub.f32 %v3323, %v3326
  %v3328 = vmul.f32 %v3327, 1.442695
  %v3329 = vpow.pop %v3328
  %v3330 = vsel %vm148, %v3329, 0.0
  %3331 = vadd.xlane.f32.xlu0 %v3330
  %v3332 = vpop.xlane.xlu0 %3331
  %v3333 = vrcp.pop %v3332
  %v3334 = vmul.f32 %v3329, %v3333
  %3335 = vrot.lane.b32.xlu0 %v2374, 56
  %v3336 = vpop.permute.xlu0 %3335
  %v3339 = vsel %vm148, %v3334, 0
  %3341 = vmatprep.subr.mxu0 0.0
  %3342 = vmatpush1.msra.mxu0 %v3336
  %3343 = vmatprep.subr.mxu0 0.0
  %3344 = vmatpush1.msra.mxu0 0.0
  %3345 = vmatprep.subr.mxu0 0.0
  %3346 = vmatpush1.msra.mxu0 0.0
  %3347 = vmatprep.subr.mxu0 0.0
  %3348 = vmatpush1.msra.mxu0 0.0
  %3349 = vmatprep.subr.mxu0 0.0
  %3350 = vmatpush1.msra.mxu0 0.0
  %3351 = vmatprep.subr.mxu0 0.0
  %3352 = vmatpush1.msra.mxu0 0.0
  %3353 = vmatprep.subr.mxu0 0.0
  %3354 = vmatpush1.msra.mxu0 0.0
  %3355 = vmatprep.subr.mxu0 0.0
  %3356 = vmatpush1.msra.mxu0 0.0
  %3357 = vmatprep.subr.mxu0 0.0
  %3358 = vmatpush1.msra.mxu0 0.0
  %3359 = vmatprep.subr.mxu0 0.0
  %3360 = vmatpush1.msra.mxu0 0.0
  %3361 = vmatprep.subr.mxu0 0.0
  %3362 = vmatpush1.msra.mxu0 0.0
  %3363 = vmatprep.subr.mxu0 0.0
  %3364 = vmatpush1.msra.mxu0 0.0
  %3365 = vmatprep.subr.mxu0 0.0
  %3366 = vmatpush1.msra.mxu0 0.0
  %3367 = vmatprep.subr.mxu0 0.0
  %3368 = vmatpush1.msra.mxu0 0.0
  %3369 = vmatprep.subr.mxu0 0.0
  %3370 = vmatpush1.msra.mxu0 0.0
  %3371 = vmatprep.subr.mxu0 0.0
  %3372 = vmatpush1.msra.mxu0 0.0
  %3373 = vmatprep.subr.mxu0 0.0
  %3374 = vmatpush1.msra.mxu0 0.0
  %3375 = vmatprep.subr.mxu0 0.0
  %3376 = vmatpush1.msra.mxu0 0.0
  %3377 = vmatprep.subr.mxu0 0.0
  %3378 = vmatpush1.msra.mxu0 0.0
  %3379 = vmatprep.subr.mxu0 0.0
  %3380 = vmatpush1.msra.mxu0 0.0
  %3381 = vmatprep.subr.mxu0 0.0
  %3382 = vmatpush1.msra.mxu0 0.0
  %3383 = vmatprep.subr.mxu0 0.0
  %3384 = vmatpush1.msra.mxu0 0.0
  %3385 = vmatprep.subr.mxu0 0.0
  %3386 = vmatpush1.msra.mxu0 0.0
  %3387 = vmatprep.subr.mxu0 0.0
  %3388 = vmatpush1.msra.mxu0 0.0
  %3389 = vmatprep.subr.mxu0 0.0
  %3390 = vmatpush1.msra.mxu0 0.0
  %3391 = vmatprep.subr.mxu0 0.0
  %3392 = vmatpush1.msra.mxu0 0.0
  %3393 = vmatprep.subr.mxu0 0.0
  %3394 = vmatpush1.msra.mxu0 0.0
  %3395 = vmatprep.subr.mxu0 0.0
  %3396 = vmatpush1.msra.mxu0 0.0
  %3397 = vmatprep.subr.mxu0 0.0
  %3398 = vmatpush1.msra.mxu0 0.0
  %3399 = vmatprep.subr.mxu0 0.0
  %3400 = vmatpush1.msra.mxu0 0.0
  %3401 = vmatprep.subr.mxu0 0.0
  %3402 = vmatpush1.msra.mxu0 0.0
  %3403 = vmatprep.subr.mxu0 0.0
  %3404 = vmatpush1.msra.mxu0 0.0
  %3405 = vmatprep.mubr.f32.mxu0 0.0
  %3406 = vmatmul.mubr.f32.gmra.mrb[0].mxu0 %v3339
  %v3407 = vpop.f32.mrb[0].mxu0
  %v3408 = vadd.f32 0.0, %v3407
  %v3409 = vpop.f32.mrb[0].mxu0
  %3410 = vdwg.mxu0
  %3411 = vrot.lane.b32.xlu0 %v2374, 112
  %v3412 = vpop.permute.xlu0 %3411
  %3413 = vrot.lane.b32.xlu0 %v2374, 80
  %v3414 = vpop.permute.xlu0 %3413
  %v3415 = vsel %vm148, %v3412, 0
  %v3417 = vsel %vm148, %v3414, 0
  %3419 = vmatprep.subr.mxu0 0.0
  %3420 = vmatpush1.xpose.msra.mxu0 %v3417
  %3421 = vmatprep.subr.mxu0 0.0
  %3422 = vmatpush1.xpose.msra.mxu0 0.0
  %3423 = vmatprep.subr.mxu0 0.0
  %3424 = vmatpush1.xpose.msra.mxu0 0.0
  %3425 = vmatprep.subr.mxu0 0.0
  %3426 = vmatpush1.xpose.msra.mxu0 0.0
  %3427 = vmatprep.subr.mxu0 0.0
  %3428 = vmatpush1.xpose.msra.mxu0 0.0
  %3429 = vmatprep.subr.mxu0 0.0
  %3430 = vmatpush1.xpose.msra.mxu0 0.0
  %3431 = vmatprep.subr.mxu0 0.0
  %3432 = vmatpush1.xpose.msra.mxu0 0.0
  %3433 = vmatprep.subr.mxu0 0.0
  %3434 = vmatpush1.xpose.msra.mxu0 0.0
  %3435 = vmatprep.subr.mxu0 0.0
  %3436 = vmatpush1.xpose.msra.mxu0 0.0
  %3437 = vmatprep.subr.mxu0 0.0
  %3438 = vmatpush1.xpose.msra.mxu0 0.0
  %3439 = vmatprep.subr.mxu0 0.0
  %3440 = vmatpush1.xpose.msra.mxu0 0.0
  %3441 = vmatprep.subr.mxu0 0.0
  %3442 = vmatpush1.xpose.msra.mxu0 0.0
  %3443 = vmatprep.subr.mxu0 0.0
  %3444 = vmatpush1.xpose.msra.mxu0 0.0
  %3445 = vmatprep.subr.mxu0 0.0
  %3446 = vmatpush1.xpose.msra.mxu0 0.0
  %3447 = vmatprep.subr.mxu0 0.0
  %3448 = vmatpush1.xpose.msra.mxu0 0.0
  %3449 = vmatprep.subr.mxu0 0.0
  %3450 = vmatpush1.xpose.msra.mxu0 0.0
  %3451 = vmatprep.subr.mxu0 0.0
  %3452 = vmatpush1.xpose.msra.mxu0 0.0
  %3453 = vmatprep.subr.mxu0 0.0
  %3454 = vmatpush1.xpose.msra.mxu0 0.0
  %3455 = vmatprep.subr.mxu0 0.0
  %3456 = vmatpush1.xpose.msra.mxu0 0.0
  %3457 = vmatprep.subr.mxu0 0.0
  %3458 = vmatpush1.xpose.msra.mxu0 0.0
  %3459 = vmatprep.subr.mxu0 0.0
  %3460 = vmatpush1.xpose.msra.mxu0 0.0
  %3461 = vmatprep.subr.mxu0 0.0
  %3462 = vmatpush1.xpose.msra.mxu0 0.0
  %3463 = vmatprep.subr.mxu0 0.0
  %3464 = vmatpush1.xpose.msra.mxu0 0.0
  %3465 = vmatprep.subr.mxu0 0.0
  %3466 = vmatpush1.xpose.msra.mxu0 0.0
  %3467 = vmatprep.subr.mxu0 0.0
  %3468 = vmatpush1.xpose.msra.mxu0 0.0
  %3469 = vmatprep.subr.mxu0 0.0
  %3470 = vmatpush1.xpose.msra.mxu0 0.0
  %3471 = vmatprep.subr.mxu0 0.0
  %3472 = vmatpush1.xpose.msra.mxu0 0.0
  %3473 = vmatprep.subr.mxu0 0.0
  %3474 = vmatpush1.xpose.msra.mxu0 0.0
  %3475 = vmatprep.subr.mxu0 0.0
  %3476 = vmatpush1.xpose.msra.mxu0 0.0
  %3477 = vmatprep.subr.mxu0 0.0
  %3478 = vmatpush1.xpose.msra.mxu0 0.0
  %3479 = vmatprep.subr.mxu0 0.0
  %3480 = vmatpush1.xpose.msra.mxu0 0.0
  %3481 = vmatprep.subr.mxu0 0.0
  %3482 = vmatpush1.xpose.msra.mxu0 0.0
  %3483 = vmatprep.mubr.f32.mxu0 0.0
  %3484 = vmatmul.mubr.f32.gmra.mrb[0].mxu0 %v3415
  %v3485 = vpop.f32.mrb[0].mxu0
  %v3486 = vadd.f32 0.0, %v3485
  %v3487 = vpop.f32.mrb[0].mxu0
  %3488 = vdwg.mxu0
  %v3489 = vmul.f32 %v3486, 0.35355338
  %v3490 = vadd.f32 %v3489, %v3155
  %v3491 = vsel %vm148, %v3490, -inf
  %3492 = vmax.xlane.f32.xlu0 %v3491
  %v3493 = vpop.xlane.xlu0 %3492
  %v3494 = vsub.f32 %v3490, %v3493
  %v3495 = vmul.f32 %v3494, 1.442695
  %v3496 = vpow.pop %v3495
  %v3497 = vsel %vm148, %v3496, 0.0
  %3498 = vadd.xlane.f32.xlu0 %v3497
  %v3499 = vpop.xlane.xlu0 %3498
  %v3500 = vrcp.pop %v3499
  %v3501 = vmul.f32 %v3496, %v3500
  %3502 = vrot.lane.b32.xlu0 %v2374, 48
  %v3503 = vpop.permute.xlu0 %3502
  %v3506 = vsel %vm148, %v3501, 0
  %3508 = vmatprep.subr.mxu0 0.0
  %3509 = vmatpush1.msra.mxu0 %v3503
  %3510 = vmatprep.subr.mxu0 0.0
  %3511 = vmatpush1.msra.mxu0 0.0
  %3512 = vmatprep.subr.mxu0 0.0
  %3513 = vmatpush1.msra.mxu0 0.0
  %3514 = vmatprep.subr.mxu0 0.0
  %3515 = vmatpush1.msra.mxu0 0.0
  %3516 = vmatprep.subr.mxu0 0.0
  %3517 = vmatpush1.msra.mxu0 0.0
  %3518 = vmatprep.subr.mxu0 0.0
  %3519 = vmatpush1.msra.mxu0 0.0
  %3520 = vmatprep.subr.mxu0 0.0
  %3521 = vmatpush1.msra.mxu0 0.0
  %3522 = vmatprep.subr.mxu0 0.0
  %3523 = vmatpush1.msra.mxu0 0.0
  %3524 = vmatprep.subr.mxu0 0.0
  %3525 = vmatpush1.msra.mxu0 0.0
  %3526 = vmatprep.subr.mxu0 0.0
  %3527 = vmatpush1.msra.mxu0 0.0
  %3528 = vmatprep.subr.mxu0 0.0
  %3529 = vmatpush1.msra.mxu0 0.0
  %3530 = vmatprep.subr.mxu0 0.0
  %3531 = vmatpush1.msra.mxu0 0.0
  %3532 = vmatprep.subr.mxu0 0.0
  %3533 = vmatpush1.msra.mxu0 0.0
  %3534 = vmatprep.subr.mxu0 0.0
  %3535 = vmatpush1.msra.mxu0 0.0
  %3536 = vmatprep.subr.mxu0 0.0
  %3537 = vmatpush1.msra.mxu0 0.0
  %3538 = vmatprep.subr.mxu0 0.0
  %3539 = vmatpush1.msra.mxu0 0.0
  %3540 = vmatprep.subr.mxu0 0.0
  %3541 = vmatpush1.msra.mxu0 0.0
  %3542 = vmatprep.subr.mxu0 0.0
  %3543 = vmatpush1.msra.mxu0 0.0
  %3544 = vmatprep.subr.mxu0 0.0
  %3545 = vmatpush1.msra.mxu0 0.0
  %3546 = vmatprep.subr.mxu0 0.0
  %3547 = vmatpush1.msra.mxu0 0.0
  %3548 = vmatprep.subr.mxu0 0.0
  %3549 = vmatpush1.msra.mxu0 0.0
  %3550 = vmatprep.subr.mxu0 0.0
  %3551 = vmatpush1.msra.mxu0 0.0
  %3552 = vmatprep.subr.mxu0 0.0
  %3553 = vmatpush1.msra.mxu0 0.0
  %3554 = vmatprep.subr.mxu0 0.0
  %3555 = vmatpush1.msra.mxu0 0.0
  %3556 = vmatprep.subr.mxu0 0.0
  %3557 = vmatpush1.msra.mxu0 0.0
  %3558 = vmatprep.subr.mxu0 0.0
  %3559 = vmatpush1.msra.mxu0 0.0
  %3560 = vmatprep.subr.mxu0 0.0
  %3561 = vmatpush1.msra.mxu0 0.0
  %3562 = vmatprep.subr.mxu0 0.0
  %3563 = vmatpush1.msra.mxu0 0.0
  %3564 = vmatprep.subr.mxu0 0.0
  %3565 = vmatpush1.msra.mxu0 0.0
  %3566 = vmatprep.subr.mxu0 0.0
  %3567 = vmatpush1.msra.mxu0 0.0
  %3568 = vmatprep.subr.mxu0 0.0
  %3569 = vmatpush1.msra.mxu0 0.0
  %3570 = vmatprep.subr.mxu0 0.0
  %3571 = vmatpush1.msra.mxu0 0.0
  %3572 = vmatprep.mubr.f32.mxu0 0.0
  %3573 = vmatmul.mubr.f32.gmra.mrb[0].mxu0 %v3506
  %v3574 = vpop.f32.mrb[0].mxu0
  %v3575 = vadd.f32 0.0, %v3574
  %v3576 = vpop.f32.mrb[0].mxu0
  %3577 = vdwg.mxu0
  %3578 = vrot.lane.b32.xlu0 %v2374, 104
  %v3579 = vpop.permute.xlu0 %3578
  %3580 = vrot.lane.b32.xlu0 %v2374, 72
  %v3581 = vpop.permute.xlu0 %3580
  %v3582 = vsel %vm148, %v3579, 0
  %v3584 = vsel %vm148, %v3581, 0
  %3586 = vmatprep.subr.mxu0 0.0
  %3587 = vmatpush1.xpose.msra.mxu0 %v3584
  %3588 = vmatprep.subr.mxu0 0.0
  %3589 = vmatpush1.xpose.msra.mxu0 0.0
  %3590 = vmatprep.subr.mxu0 0.0
  %3591 = vmatpush1.xpose.msra.mxu0 0.0
  %3592 = vmatprep.subr.mxu0 0.0
  %3593 = vmatpush1.xpose.msra.mxu0 0.0
  %3594 = vmatprep.subr.mxu0 0.0
  %3595 = vmatpush1.xpose.msra.mxu0 0.0
  %3596 = vmatprep.subr.mxu0 0.0
  %3597 = vmatpush1.xpose.msra.mxu0 0.0
  %3598 = vmatprep.subr.mxu0 0.0
  %3599 = vmatpush1.xpose.msra.mxu0 0.0
  %3600 = vmatprep.subr.mxu0 0.0
  %3601 = vmatpush1.xpose.msra.mxu0 0.0
  %3602 = vmatprep.subr.mxu0 0.0
  %3603 = vmatpush1.xpose.msra.mxu0 0.0
  %3604 = vmatprep.subr.mxu0 0.0
  %3605 = vmatpush1.xpose.msra.mxu0 0.0
  %3606 = vmatprep.subr.mxu0 0.0
  %3607 = vmatpush1.xpose.msra.mxu0 0.0
  %3608 = vmatprep.subr.mxu0 0.0
  %3609 = vmatpush1.xpose.msra.mxu0 0.0
  %3610 = vmatprep.subr.mxu0 0.0
  %3611 = vmatpush1.xpose.msra.mxu0 0.0
  %3612 = vmatprep.subr.mxu0 0.0
  %3613 = vmatpush1.xpose.msra.mxu0 0.0
  %3614 = vmatprep.subr.mxu0 0.0
  %3615 = vmatpush1.xpose.msra.mxu0 0.0
  %3616 = vmatprep.subr.mxu0 0.0
  %3617 = vmatpush1.xpose.msra.mxu0 0.0
  %3618 = vmatprep.subr.mxu0 0.0
  %3619 = vmatpush1.xpose.msra.mxu0 0.0
  %3620 = vmatprep.subr.mxu0 0.0
  %3621 = vmatpush1.xpose.msra.mxu0 0.0
  %3622 = vmatprep.subr.mxu0 0.0
  %3623 = vmatpush1.xpose.msra.mxu0 0.0
  %3624 = vmatprep.subr.mxu0 0.0
  %3625 = vmatpush1.xpose.msra.mxu0 0.0
  %3626 = vmatprep.subr.mxu0 0.0
  %3627 = vmatpush1.xpose.msra.mxu0 0.0
  %3628 = vmatprep.subr.mxu0 0.0
  %3629 = vmatpush1.xpose.msra.mxu0 0.0
  %3630 = vmatprep.subr.mxu0 0.0
  %3631 = vmatpush1.xpose.msra.mxu0 0.0
  %3632 = vmatprep.subr.mxu0 0.0
  %3633 = vmatpush1.xpose.msra.mxu0 0.0
  %3634 = vmatprep.subr.mxu0 0.0
  %3635 = vmatpush1.xpose.msra.mxu0 0.0
  %3636 = vmatprep.subr.mxu0 0.0
  %3637 = vmatpush1.xpose.msra.mxu0 0.0
  %3638 = vmatprep.subr.mxu0 0.0
  %3639 = vmatpush1.xpose.msra.mxu0 0.0
  %3640 = vmatprep.subr.mxu0 0.0
  %3641 = vmatpush1.xpose.msra.mxu0 0.0
  %3642 = vmatprep.subr.mxu0 0.0
  %3643 = vmatpush1.xpose.msra.mxu0 0.0
  %3644 = vmatprep.subr.mxu0 0.0
  %3645 = vmatpush1.xpose.msra.mxu0 0.0
  %3646 = vmatprep.subr.mxu0 0.0
  %3647 = vmatpush1.xpose.msra.mxu0 0.0
  %3648 = vmatprep.subr.mxu0 0.0
  %3649 = vmatpush1.xpose.msra.mxu0 0.0
  %3650 = vmatprep.mubr.f32.mxu0 0.0
  %3651 = vmatmul.mubr.f32.gmra.mrb[0].mxu0 %v3582
  %v3652 = vpop.f32.mrb[0].mxu0
  %v3653 = vadd.f32 0.0, %v3652
  %v3654 = vpop.f32.mrb[0].mxu0
  %3655 = vdwg.mxu0
  %v3656 = vmul.f32 %v3653, 0.35355338
  %v3657 = vadd.f32 %v3656, %v3155
  %v3658 = vsel %vm148, %v3657, -inf
  %3659 = vmax.xlane.f32.xlu0 %v3658
  %v3660 = vpop.xlane.xlu0 %3659
  %v3661 = vsub.f32 %v3657, %v3660
  %v3662 = vmul.f32 %v3661, 1.442695
  %v3663 = vpow.pop %v3662
  %v3664 = vsel %vm148, %v3663, 0.0
  %3665 = vadd.xlane.f32.xlu0 %v3664
  %v3666 = vpop.xlane.xlu0 %3665
  %v3667 = vrcp.pop %v3666
  %v3668 = vmul.f32 %v3663, %v3667
  %3669 = vrot.lane.b32.xlu0 %v2374, 40
  %v3670 = vpop.permute.xlu0 %3669
  %v3673 = vsel %vm148, %v3668, 0
  %3675 = vmatprep.subr.mxu0 0.0
  %3676 = vmatpush1.msra.mxu0 %v3670
  %3677 = vmatprep.subr.mxu0 0.0
  %3678 = vmatpush1.msra.mxu0 0.0
  %3679 = vmatprep.subr.mxu0 0.0
  %3680 = vmatpush1.msra.mxu0 0.0
  %3681 = vmatprep.subr.mxu0 0.0
  %3682 = vmatpush1.msra.mxu0 0.0
  %3683 = vmatprep.subr.mxu0 0.0
  %3684 = vmatpush1.msra.mxu0 0.0
  %3685 = vmatprep.subr.mxu0 0.0
  %3686 = vmatpush1.msra.mxu0 0.0
  %3687 = vmatprep.subr.mxu0 0.0
  %3688 = vmatpush1.msra.mxu0 0.0
  %3689 = vmatprep.subr.mxu0 0.0
  %3690 = vmatpush1.msra.mxu0 0.0
  %3691 = vmatprep.subr.mxu0 0.0
  %3692 = vmatpush1.msra.mxu0 0.0
  %3693 = vmatprep.subr.mxu0 0.0
  %3694 = vmatpush1.msra.mxu0 0.0
  %3695 = vmatprep.subr.mxu0 0.0
  %3696 = vmatpush1.msra.mxu0 0.0
  %3697 = vmatprep.subr.mxu0 0.0
  %3698 = vmatpush1.msra.mxu0 0.0
  %3699 = vmatprep.subr.mxu0 0.0
  %3700 = vmatpush1.msra.mxu0 0.0
  %3701 = vmatprep.subr.mxu0 0.0
  %3702 = vmatpush1.msra.mxu0 0.0
  %3703 = vmatprep.subr.mxu0 0.0
  %3704 = vmatpush1.msra.mxu0 0.0
  %3705 = vmatprep.subr.mxu0 0.0
  %3706 = vmatpush1.msra.mxu0 0.0
  %3707 = vmatprep.subr.mxu0 0.0
  %3708 = vmatpush1.msra.mxu0 0.0
  %3709 = vmatprep.subr.mxu0 0.0
  %3710 = vmatpush1.msra.mxu0 0.0
  %3711 = vmatprep.subr.mxu0 0.0
  %3712 = vmatpush1.msra.mxu0 0.0
  %3713 = vmatprep.subr.mxu0 0.0
  %3714 = vmatpush1.msra.mxu0 0.0
  %3715 = vmatprep.subr.mxu0 0.0
  %3716 = vmatpush1.msra.mxu0 0.0
  %3717 = vmatprep.subr.mxu0 0.0
  %3718 = vmatpush1.msra.mxu0 0.0
  %3719 = vmatprep.subr.mxu0 0.0
  %3720 = vmatpush1.msra.mxu0 0.0
  %3721 = vmatprep.subr.mxu0 0.0
  %3722 = vmatpush1.msra.mxu0 0.0
  %3723 = vmatprep.subr.mxu0 0.0
  %3724 = vmatpush1.msra.mxu0 0.0
  %3725 = vmatprep.subr.mxu0 0.0
  %3726 = vmatpush1.msra.mxu0 0.0
  %3727 = vmatprep.subr.mxu0 0.0
  %3728 = vmatpush1.msra.mxu0 0.0
  %3729 = vmatprep.subr.mxu0 0.0
  %3730 = vmatpush1.msra.mxu0 0.0
  %3731 = vmatprep.subr.mxu0 0.0
  %3732 = vmatpush1.msra.mxu0 0.0
  %3733 = vmatprep.subr.mxu0 0.0
  %3734 = vmatpush1.msra.mxu0 0.0
  %3735 = vmatprep.subr.mxu0 0.0
  %3736 = vmatpush1.msra.mxu0 0.0
  %3737 = vmatprep.subr.mxu0 0.0
  %3738 = vmatpush1.msra.mxu0 0.0
  %3739 = vmatprep.mubr.f32.mxu0 0.0
  %3740 = vmatmul.mubr.f32.gmra.mrb[0].mxu0 %v3673
  %v3741 = vpop.f32.mrb[0].mxu0
  %v3742 = vadd.f32 0.0, %v3741
  %v3743 = vpop.f32.mrb[0].mxu0
  %3744 = vdwg.mxu0
  %3746 = vrot.lane.b32.xlu0 %v3408, 8
  %v3747 = vpop.permute.xlu0 %3746
  %3750 = vrot.lane.b32.xlu0 %v3575, 16
  %v3751 = vpop.permute.xlu0 %3750
  %3754 = vrot.lane.b32.xlu0 %v3742, 24
  %v3755 = vpop.permute.xlu0 %3754
  %v3757 = vsel %vm148, %v3241, %v3747
  %v3758 = vsel %vm3063, %v3757, %v3751
  %v3759 = vsel %vm3065, %v3758, %v3755
  %v3760 = vsel %vm66, %v3759, 0.0
  %v3761 = vrot.slane %v3760, 4
  %v3762 = vadd.f32 %v3760, %v3761
  %v3763 = vrot.slane %v3762, 2
  %v3764 = vadd.f32 %v3762, %v3763
  %v3765 = vrot.slane %v3764, 1
  %v3766 = vadd.f32 %v3764, %v3765
  %vm3767 = vcmask 1040384
  %v3768 = vsel %vm3767, %v3073, %v3766
  %v3769 = vld [vmem:[%s14] sm:$0xff]
  %v3770 = vld [vmem:[%s14 + $0x8] sm:$0xff]
  %v3771 = vld [vmem:[%s14 + $0x10] sm:$0xff]
  %v3772 = vld [vmem:[%s14 + $0x18] sm:$0xff]
  %v3773 = vld [vmem:[#allocation3] sm:$0x1]
  %v3775 = vlaneseq
  %v3776 = vshrl.u32 %v3775, 7
  %v3777 = vsub.s32 0, %v3776
  %v3778 = vrot.slane %v3773, %v3777
  %v3781 = vsel %vm66, %v3768, 0
  %3783 = vmatprep.subr.mxu0 0.0
  %3784 = vmatpush1.msra.mxu0 %v3769
  %3785 = vmatprep.subr.mxu0 0.0
  %3786 = vmatpush1.msra.mxu0 %v3770
  %3787 = vmatprep.subr.mxu0 0.0
  %3788 = vmatpush1.msra.mxu0 %v3771
  %3789 = vmatprep.subr.mxu0 0.0
  %3790 = vmatpush1.msra.mxu0 %v3772
  %3791 = vmatprep.subr.mxu0 0.0
  %3792 = vmatpush1.msra.mxu0 0.0
  %3793 = vmatprep.subr.mxu0 0.0
  %3794 = vmatpush1.msra.mxu0 0.0
  %3795 = vmatprep.subr.mxu0 0.0
  %3796 = vmatpush1.msra.mxu0 0.0
  %3797 = vmatprep.subr.mxu0 0.0
  %3798 = vmatpush1.msra.mxu0 0.0
  %3799 = vmatprep.subr.mxu0 0.0
  %3800 = vmatpush1.msra.mxu0 0.0
  %3801 = vmatprep.subr.mxu0 0.0
  %3802 = vmatpush1.msra.mxu0 0.0
  %3803 = vmatprep.subr.mxu0 0.0
  %3804 = vmatpush1.msra.mxu0 0.0
  %3805 = vmatprep.subr.mxu0 0.0
  %3806 = vmatpush1.msra.mxu0 0.0
  %3807 = vmatprep.subr.mxu0 0.0
  %3808 = vmatpush1.msra.mxu0 0.0
  %3809 = vmatprep.subr.mxu0 0.0
  %3810 = vmatpush1.msra.mxu0 0.0
  %3811 = vmatprep.subr.mxu0 0.0
  %3812 = vmatpush1.msra.mxu0 0.0
  %3813 = vmatprep.subr.mxu0 0.0
  %3814 = vmatpush1.msra.mxu0 0.0
  %3815 = vmatprep.subr.mxu0 0.0
  %3816 = vmatpush1.msra.mxu0 0.0
  %3817 = vmatprep.subr.mxu0 0.0
  %3818 = vmatpush1.msra.mxu0 0.0
  %3819 = vmatprep.subr.mxu0 0.0
  %3820 = vmatpush1.msra.mxu0 0.0
  %3821 = vmatprep.subr.mxu0 0.0
  %3822 = vmatpush1.msra.mxu0 0.0
  %3823 = vmatprep.subr.mxu0 0.0
  %3824 = vmatpush1.msra.mxu0 0.0
  %3825 = vmatprep.subr.mxu0 0.0
  %3826 = vmatpush1.msra.mxu0 0.0
  %3827 = vmatprep.subr.mxu0 0.0
  %3828 = vmatpush1.msra.mxu0 0.0
  %3829 = vmatprep.subr.mxu0 0.0
  %3830 = vmatpush1.msra.mxu0 0.0
  %3831 = vmatprep.subr.mxu0 0.0
  %3832 = vmatpush1.msra.mxu0 0.0
  %3833 = vmatprep.subr.mxu0 0.0
  %3834 = vmatpush1.msra.mxu0 0.0
  %3835 = vmatprep.subr.mxu0 0.0
  %3836 = vmatpush1.msra.mxu0 0.0
  %3837 = vmatprep.subr.mxu0 0.0
  %3838 = vmatpush1.msra.mxu0 0.0
  %3839 = vmatprep.subr.mxu0 0.0
  %3840 = vmatpush1.msra.mxu0 0.0
  %3841 = vmatprep.subr.mxu0 0.0
  %3842 = vmatpush1.msra.mxu0 0.0
  %3843 = vmatprep.subr.mxu0 0.0
  %3844 = vmatpush1.msra.mxu0 0.0
  %3845 = vmatprep.subr.mxu0 0.0
  %3846 = vmatpush1.msra.mxu0 0.0
  %3847 = vmatprep.mubr.f32.mxu0 0.0
  %3848 = vmatmul.mubr.f32.gmra.mrb[0].mxu0 %v3781
  %v3849 = vpop.f32.mrb[0].mxu0
  %v3850 = vadd.f32 %v3778, %v3849
  %v3851 = vpop.f32.mrb[0].mxu0
  %3852 = vdwg.mxu0
  %v3853 = vxor.u32 %v3850, 2147483648
  %v3854 = vmul.f32 %v3853, 1.442695
  %v3855 = vpow.pop %v3854
  %v3856 = vadd.f32 %v3855, 1.0
  %v3857 = vrcp.pop %v3856
  %v3858 = vmul.f32 1.0, %v3857
  %vm3859 = vcmask 1024
  %3860 = vst.msk [vmem:[%s16] sm:$0x3] %vm3859, %v3858
  // Predicated region
  $region66: #{sent_sel_two_gcn_cat_forward.1} parent=0 // pred_check
    _
  $region67: #{sent_sel_two_gcn_cat_forward.1} parent=0 // pred_check_branch
    %3862 = sbr.rel (0) target = $region69
  $region68: #{sent_sel_two_gcn_cat_forward.1} parent=0 // pred_region
    _
  $region69: #{sent_sel_two_gcn_cat_forward.1} parent=0 // pred_fallthru
    _
  // Predicated region
  $region70: #{sent_sel_two_gcn_cat_forward.1} parent=0 // pred_check
    _
  $region71: #{sent_sel_two_gcn_cat_forward.1} parent=0 // pred_check_branch
    %3864 = sbr.rel (0) target = $region73
  $region72: #{sent_sel_two_gcn_cat_forward.1} parent=0 // pred_region
    _
  $region73: #{sent_sel_two_gcn_cat_forward.1} parent=0 // pred_fallthru
    _

</llo_original>
